<compile_context>
chip_gen: v6e
topology: v6e:2x2x1
jax: 0.10.0
libtpu: 0.0.40
codegen_flags: <defaults>
</compile_context>

<pallas_src>
import jax
import jax.numpy as jnp
from jax.experimental import pallas as pl
from jax.experimental.pallas import tpu as pltpu

# Fixed architecture of ConvDecoder3: (Cin, Cout, KH, KW) per ConvTranspose2d.
_LAYERS = ((64, 64, 3, 4), (64, 64, 4, 4), (64, 3, 4, 4))
_LANE = 128


# ------------------------------ fused kernel --------------------------------

def _make_decoder_kernel(m1, p1, p2):
    """Build the fused 3-layer decoder kernel.

    m1: padded number of layer-1 input rows (= N*H*W rounded up to 8)
    p1: KH1*KW1 kernel positions of layer 1
    p2: KH2*KW2 kernel positions of layer 2
    Row bookkeeping: z2 rows are ordered (p1, m1); output rows are ordered
    (p2, p1, m1); output columns are (kh3, kw3, c3), padded 48 -> 128.
    """
    m2 = p1 * m1

    def kernel(x_ref, w1_ref, b1_ref, w2_ref, b2_ref, w3_ref, b3_ref,
               o_ref, z2_ref):
        # ---- layer 1: (m1, 64) -> z2 (p1*m1, 128), blocked over kernel pos ----
        x = x_ref[...]                                      # (m1, 64) bf16
        for i in range(p1):
            w = w1_ref[:, i * _LANE:(i + 1) * _LANE]        # (64, 128) bf16
            b = b1_ref[:, i * _LANE:(i + 1) * _LANE]        # (1, 128)  f32
            acc = jnp.dot(x, w, preferred_element_type=jnp.float32)
            z2_ref[i * m1:(i + 1) * m1, :] = jnp.maximum(acc + b, 0.0)

        # ---- layers 2 + 3 fused, blocked over layer-2 kernel positions ----
        a2 = z2_ref[...].astype(jnp.bfloat16)               # (m2, 128)
        w3 = w3_ref[...]                                    # (128, 128) bf16
        b3 = b3_ref[...]                                    # (1, 128)   f32
        for i in range(p2):
            w = w2_ref[:, i * _LANE:(i + 1) * _LANE]        # (128, 128) bf16
            b = b2_ref[:, i * _LANE:(i + 1) * _LANE]        # (1, 128)   f32
            y2 = jnp.maximum(
                jnp.dot(a2, w, preferred_element_type=jnp.float32) + b, 0.0)
            y3 = jnp.dot(y2.astype(jnp.bfloat16), w3,
                         preferred_element_type=jnp.float32)
            o_ref[i * m2:(i + 1) * m2, :] = jnp.maximum(y3 + b3, 0.0)

    return kernel


# --------------------------- parameter repacking -----------------------------

def pack_params(params):
    """Repack PyTorch-layout ConvTranspose2d params for the fused kernel.

    Layers 1/2: weight (Cin, Cout, KH, KW) -> (Cin_pad, KH*KW*128) bf16 with
    column order (kh, kw, cout) and each (kh, kw) block zero-padded to 128
    lanes; bias tiled/padded to (1, KH*KW*128) f32.  Layer 3 is packed as a
    single (128, 128) bf16 tile holding all KH*KW*Cout = 48 real columns.
    """
    (w1, b1), (w2, b2), (w3, b3) = params

    def per_position(w, b, pad_cin):
        cin, cout, kh, kw = w.shape
        wt = jnp.transpose(w, (0, 2, 3, 1)).reshape(cin, kh * kw, cout)
        wt = jnp.pad(wt, ((0, pad_cin - cin), (0, 0), (0, _LANE - cout)))
        bt = jnp.pad(jnp.tile(b[None, :], (kh * kw, 1)),
                     ((0, 0), (0, _LANE - cout)))
        return (wt.reshape(pad_cin, kh * kw * _LANE).astype(jnp.bfloat16),
                bt.reshape(1, kh * kw * _LANE).astype(jnp.float32))

    w1p, b1p = per_position(w1, b1, _LAYERS[0][0])   # (64, 12*128), (1, 12*128)
    w2p, b2p = per_position(w2, b2, _LANE)           # (128, 16*128), (1, 16*128)

    cin3, cout3, kh3, kw3 = w3.shape
    n3 = kh3 * kw3 * cout3                            # 48 real output columns
    w3t = jnp.transpose(w3, (0, 2, 3, 1)).reshape(cin3, n3)
    w3p = jnp.pad(w3t, ((0, _LANE - cin3), (0, _LANE - n3))).astype(jnp.bfloat16)
    b3p = jnp.pad(jnp.tile(b3[None, :], (kh3 * kw3, 1)).reshape(1, n3),
                  ((0, 0), (0, _LANE - n3))).astype(jnp.float32)
    return (w1p, b1p, w2p, b2p, w3p, b3p)


# ------------------------------ forward pass ---------------------------------

@jax.jit
def conv_decoder3_forward(x, packed):
    """x: (N, 64, H, W) f32 NCHW -> (N, 3, H*48, W*64) f32 NCHW."""
    w1p, b1p, w2p, b2p, w3p, b3p = packed
    (c1i, _c1o, kh1, kw1), (_c2i, _c2o, kh2, kw2), (_c3i, c3o, kh3, kw3) = _LAYERS
    n, cin, h, w = x.shape
    assert cin == c1i, "ConvDecoder3 expects 64 input channels"

    p1, p2 = kh1 * kw1, kh2 * kw2
    m1 = n * h * w
    m1p = ((m1 + 7) // 8) * 8            # sublane-align layer-1 rows
    m2 = p1 * m1p
    m3 = p2 * m2

    # NCHW -> flattened channel-last rows (n, h, w), bf16 matmul operand.
    xf = jnp.transpose(x, (0, 2, 3, 1)).reshape(m1, cin)
    xf = jnp.pad(xf, ((0, m1p - m1), (0, 0))).astype(jnp.bfloat16)

    out = pl.pallas_call(
        _make_decoder_kernel(m1p, p1, p2),
        out_shape=jax.ShapeDtypeStruct((m3, _LANE), jnp.float32),
        grid=(1,),
        in_specs=[
            pl.BlockSpec((m1p, c1i), lambda i: (0, 0)),
            pl.BlockSpec((c1i, p1 * _LANE), lambda i: (0, 0)),
            pl.BlockSpec((1, p1 * _LANE), lambda i: (0, 0)),
            pl.BlockSpec((_LANE, p2 * _LANE), lambda i: (0, 0)),
            pl.BlockSpec((1, p2 * _LANE), lambda i: (0, 0)),
            pl.BlockSpec((_LANE, _LANE), lambda i: (0, 0)),
            pl.BlockSpec((1, _LANE), lambda i: (0, 0)),
        ],
        out_specs=pl.BlockSpec((m3, _LANE), lambda i: (0, 0)),
        scratch_shapes=[pltpu.VMEM((m2, _LANE), jnp.float32)],
        compiler_params=pltpu.CompilerParams(
            dimension_semantics=("arbitrary",),
            vmem_limit_bytes=32 * 1024 * 1024,
        ),
    )(xf, w1p, b1p, w2p, b2p, w3p, b3p)

    # Undo the fused row order (kh2, kw2, kh1, kw1, n, h, w) and column order
    # (kh3, kw3, c3) with small pixel-shuffle reshapes/transposes (rank <= 6).
    t = out[:, :kh3 * kw3 * c3o]                              # (m3, 48)
    t = t.reshape(p2 * p1 * m1p, kh3, kw3, c3o)
    t = jnp.transpose(t, (0, 3, 1, 2))                        # (R, C, KH3, KW3)
    t = t.reshape(kh2, kw2, p1 * m1p, c3o, kh3, kw3)
    t = jnp.transpose(t, (2, 3, 0, 4, 1, 5))                  # (P1*M1, C, KH2, KH3, KW2, KW3)
    t = t.reshape(p1 * m1p, c3o, kh2 * kh3, kw2 * kw3)
    t = t.reshape(kh1, kw1, m1p, c3o, kh2 * kh3, kw2 * kw3)
    t = jnp.transpose(t, (2, 3, 0, 4, 1, 5))                  # (M1, C, KH1, 16, KW1, 16)
    t = t.reshape(m1p, c3o, kh1 * kh2 * kh3, kw1 * kw2 * kw3)
    t = t[:m1]                                                # drop row padding
    t = t.reshape(n, h, w, c3o, kh1 * kh2 * kh3, kw1 * kw2 * kw3)
    t = jnp.transpose(t, (0, 3, 1, 4, 2, 5))                  # (N, C, H, 48, W, 64)
    return t.reshape(n, c3o, h * kh1 * kh2 * kh3, w * kw1 * kw2 * kw3)


# ------------------------- init + pure-jnp reference -------------------------

def init_params(key):
    """Synthetic init mimicking kaiming_normal_(nonlinearity='relu') + default bias."""
    params = []
    for i, (cin, cout, kh, kw) in enumerate(_LAYERS):
        wkey, bkey = jax.random.split(jax.random.fold_in(key, i))
        fan_in = cout * kh * kw   # torch fan_in for ConvTranspose2d weight layout
        std = (2.0 / fan_in) ** 0.5
        wgt = std * jax.random.normal(wkey, (cin, cout, kh, kw), jnp.float32)
        bound = 1.0 / (fan_in ** 0.5)
        bias = jax.random.uniform(bkey, (cout,), jnp.float32, -bound, bound)
        params.append((wgt, bias))
    return params


def conv_decoder3_reference(x, params, *, quantize_bf16=False):
    """Independent per-layer matmul decomposition (NCHW in/out), pure jnp."""
    def q(a):
        return a.astype(jnp.bfloat16).astype(jnp.float32) if quantize_bf16 else a
    y = x
    for (wgt, b) in params:
        n, cin, h, w = y.shape
        _, cout, kh, kw = wgt.shape
        x2 = jnp.transpose(y, (0, 2, 3, 1)).reshape(n * h * w, cin)
        w2 = wgt.reshape(cin, cout * kh * kw)
        y2 = jnp.maximum(q(x2) @ q(w2) + jnp.repeat(b, kh * kw)[None, :], 0.0)
        y2 = y2.reshape(n, h, w, cout, kh, kw)
        y = jnp.transpose(y2, (0, 3, 1, 4, 2, 5)).reshape(n, cout, h * kh, w * kw)
    return y


# ----------------------------------- main ------------------------------------

if __name__ == "__main__":
    key = jax.random.PRNGKey(0)
    xkey, pkey = jax.random.split(key)

    # Small NCHW input consistent with the module (64 input channels).
    x = jax.random.normal(xkey, (2, 64, 2, 2), jnp.float32)
    params = init_params(pkey)
    packed = pack_params(params)          # pack weights once (host-side layout prep)

    out = jax.block_until_ready(conv_decoder3_forward(x, packed))
    assert out.shape == (2, 3, 2 * 3 * 4 * 4, 2 * 4 * 4 * 4), out.shape  # (2,3,96,128)

    # Tight check: same bf16-operand / f32-accumulate arithmetic as the kernel.
    ref_q = conv_decoder3_reference(x, params, quantize_bf16=True)
    err_q = float(jnp.max(jnp.abs(out - ref_q)))
    assert err_q < 5e-3, ("bf16-matched reference mismatch", err_q)

    # Semantic check against the full-f32 reference of the PyTorch module.
    ref = conv_decoder3_reference(x, params, quantize_bf16=False)
    err = float(jnp.max(jnp.abs(out - ref)))
    assert jnp.allclose(out, ref, atol=5e-2, rtol=5e-2), ("f32 reference mismatch", err)

    print("KERNEL_OK")
</pallas_src>

<mosaic_0001>
module attributes {stable_mosaic.version = 11 : i64} {
  func.func @kernel(%arg0: i32, %arg1: memref<8x64xbf16, #tpu.memory_space<vmem>>, %arg2: memref<64x1536xbf16, #tpu.memory_space<vmem>>, %arg3: memref<1x1536xf32, #tpu.memory_space<vmem>>, %arg4: memref<128x2048xbf16, #tpu.memory_space<vmem>>, %arg5: memref<1x2048xf32, #tpu.memory_space<vmem>>, %arg6: memref<128x128xbf16, #tpu.memory_space<vmem>>, %arg7: memref<1x128xf32, #tpu.memory_space<vmem>>, %arg8: memref<1536x128xf32, #tpu.memory_space<vmem>>, %arg9: memref<96x128xf32, #tpu.memory_space<vmem>>) attributes {dimension_semantics = [#tpu.dimension_semantics<arbitrary>], iteration_bounds = array<i64: 1>, scalar_prefetch = 0 : i64, scratch_operands = 1 : i64, tpu.core_type = #tpu.core_type<tc>, window_params = [{pipeline_mode = #tpu.pipeline_mode<synchronous>, transform_indices = @transform_0, window_bounds = array<i64: 8, 64>}, {pipeline_mode = #tpu.pipeline_mode<synchronous>, transform_indices = @transform_1, window_bounds = array<i64: 64, 1536>}, {pipeline_mode = #tpu.pipeline_mode<synchronous>, transform_indices = @transform_2, window_bounds = array<i64: 1, 1536>}, {pipeline_mode = #tpu.pipeline_mode<synchronous>, transform_indices = @transform_3, window_bounds = array<i64: 128, 2048>}, {pipeline_mode = #tpu.pipeline_mode<synchronous>, transform_indices = @transform_4, window_bounds = array<i64: 1, 2048>}, {pipeline_mode = #tpu.pipeline_mode<synchronous>, transform_indices = @transform_5, window_bounds = array<i64: 128, 128>}, {pipeline_mode = #tpu.pipeline_mode<synchronous>, transform_indices = @transform_6, window_bounds = array<i64: 1, 128>}, {pipeline_mode = #tpu.pipeline_mode<synchronous>, transform_indices = @transform_7, window_bounds = array<i64: 1536, 128>}]} {
    %c0 = arith.constant 0 : index
    %c0_0 = arith.constant 0 : index
    %0 = vector.load %arg1[%c0, %c0_0] : memref<8x64xbf16, #tpu.memory_space<vmem>>, vector<8x64xbf16>
    %c0_1 = arith.constant 0 : index
    %c0_2 = arith.constant 0 : index
    %1 = vector.load %arg2[%c0_1, %c0_2] : memref<64x1536xbf16, #tpu.memory_space<vmem>>, vector<64x128xbf16>
    %c0_3 = arith.constant 0 : index
    %c0_4 = arith.constant 0 : index
    %2 = vector.load %arg3[%c0_3, %c0_4] : memref<1x1536xf32, #tpu.memory_space<vmem>>, vector<1x128xf32>
    %cst = arith.constant dense<0.000000e+00> : vector<8x128xf32>
    %3 = tpu.matmul %0, %1, %cst {dimension_numbers = #tpu.dot_dimension_numbers<[1], [0], [0], [1], [0, 0, 1, 1], [], []>} : vector<8x64xbf16>, vector<64x128xbf16>, vector<8x128xf32> -> vector<8x128xf32>
    %4 = vector.broadcast %2 : vector<1x128xf32> to vector<8x128xf32>
    %5 = arith.addf %3, %4 : vector<8x128xf32>
    %cst_5 = arith.constant 0.000000e+00 : f32
    %6 = vector.broadcast %cst_5 : f32 to vector<8x128xf32>
    %7 = arith.maximumf %5, %6 : vector<8x128xf32>
    %c0_6 = arith.constant 0 : index
    %c0_7 = arith.constant 0 : index
    %8 = vector.load %arg9[%c0_6, %c0_7] : memref<96x128xf32, #tpu.memory_space<vmem>>, vector<8x128xf32>
    tpu.vector_store %arg9[%c0_6, %c0_7], %7 {strides = array<i32>} : memref<96x128xf32, #tpu.memory_space<vmem>>, vector<8x128xf32>,
    %c0_8 = arith.constant 0 : index
    %c128 = arith.constant 128 : index
    %9 = vector.load %arg2[%c0_8, %c128] : memref<64x1536xbf16, #tpu.memory_space<vmem>>, vector<64x128xbf16>
    %c0_9 = arith.constant 0 : index
    %c128_10 = arith.constant 128 : index
    %10 = vector.load %arg3[%c0_9, %c128_10] : memref<1x1536xf32, #tpu.memory_space<vmem>>, vector<1x128xf32>
    %cst_11 = arith.constant dense<0.000000e+00> : vector<8x128xf32>
    %11 = tpu.matmul %0, %9, %cst_11 {dimension_numbers = #tpu.dot_dimension_numbers<[1], [0], [0], [1], [0, 0, 1, 1], [], []>} : vector<8x64xbf16>, vector<64x128xbf16>, vector<8x128xf32> -> vector<8x128xf32>
    %12 = vector.broadcast %10 : vector<1x128xf32> to vector<8x128xf32>
    %13 = arith.addf %11, %12 : vector<8x128xf32>
    %cst_12 = arith.constant 0.000000e+00 : f32
    %14 = vector.broadcast %cst_12 : f32 to vector<8x128xf32>
    %15 = arith.maximumf %13, %14 : vector<8x128xf32>
    %c8 = arith.constant 8 : index
    %c0_13 = arith.constant 0 : index
    %16 = vector.load %arg9[%c8, %c0_13] : memref<96x128xf32, #tpu.memory_space<vmem>>, vector<8x128xf32>
    tpu.vector_store %arg9[%c8, %c0_13], %15 {strides = array<i32>} : memref<96x128xf32, #tpu.memory_space<vmem>>, vector<8x128xf32>,
    %c0_14 = arith.constant 0 : index
    %c256 = arith.constant 256 : index
    %17 = vector.load %arg2[%c0_14, %c256] : memref<64x1536xbf16, #tpu.memory_space<vmem>>, vector<64x128xbf16>
    %c0_15 = arith.constant 0 : index
    %c256_16 = arith.constant 256 : index
    %18 = vector.load %arg3[%c0_15, %c256_16] : memref<1x1536xf32, #tpu.memory_space<vmem>>, vector<1x128xf32>
    %cst_17 = arith.constant dense<0.000000e+00> : vector<8x128xf32>
    %19 = tpu.matmul %0, %17, %cst_17 {dimension_numbers = #tpu.dot_dimension_numbers<[1], [0], [0], [1], [0, 0, 1, 1], [], []>} : vector<8x64xbf16>, vector<64x128xbf16>, vector<8x128xf32> -> vector<8x128xf32>
    %20 = vector.broadcast %18 : vector<1x128xf32> to vector<8x128xf32>
    %21 = arith.addf %19, %20 : vector<8x128xf32>
    %cst_18 = arith.constant 0.000000e+00 : f32
    %22 = vector.broadcast %cst_18 : f32 to vector<8x128xf32>
    %23 = arith.maximumf %21, %22 : vector<8x128xf32>
    %c16 = arith.constant 16 : index
    %c0_19 = arith.constant 0 : index
    %24 = vector.load %arg9[%c16, %c0_19] : memref<96x128xf32, #tpu.memory_space<vmem>>, vector<8x128xf32>
    tpu.vector_store %arg9[%c16, %c0_19], %23 {strides = array<i32>} : memref<96x128xf32, #tpu.memory_space<vmem>>, vector<8x128xf32>,
    %c0_20 = arith.constant 0 : index
    %c384 = arith.constant 384 : index
    %25 = vector.load %arg2[%c0_20, %c384] : memref<64x1536xbf16, #tpu.memory_space<vmem>>, vector<64x128xbf16>
    %c0_21 = arith.constant 0 : index
    %c384_22 = arith.constant 384 : index
    %26 = vector.load %arg3[%c0_21, %c384_22] : memref<1x1536xf32, #tpu.memory_space<vmem>>, vector<1x128xf32>
    %cst_23 = arith.constant dense<0.000000e+00> : vector<8x128xf32>
    %27 = tpu.matmul %0, %25, %cst_23 {dimension_numbers = #tpu.dot_dimension_numbers<[1], [0], [0], [1], [0, 0, 1, 1], [], []>} : vector<8x64xbf16>, vector<64x128xbf16>, vector<8x128xf32> -> vector<8x128xf32>
    %28 = vector.broadcast %26 : vector<1x128xf32> to vector<8x128xf32>
    %29 = arith.addf %27, %28 : vector<8x128xf32>
    %cst_24 = arith.constant 0.000000e+00 : f32
    %30 = vector.broadcast %cst_24 : f32 to vector<8x128xf32>
    %31 = arith.maximumf %29, %30 : vector<8x128xf32>
    %c24 = arith.constant 24 : index
    %c0_25 = arith.constant 0 : index
    %32 = vector.load %arg9[%c24, %c0_25] : memref<96x128xf32, #tpu.memory_space<vmem>>, vector<8x128xf32>
    tpu.vector_store %arg9[%c24, %c0_25], %31 {strides = array<i32>} : memref<96x128xf32, #tpu.memory_space<vmem>>, vector<8x128xf32>,
    %c0_26 = arith.constant 0 : index
    %c512 = arith.constant 512 : index
    %33 = vector.load %arg2[%c0_26, %c512] : memref<64x1536xbf16, #tpu.memory_space<vmem>>, vector<64x128xbf16>
    %c0_27 = arith.constant 0 : index
    %c512_28 = arith.constant 512 : index
    %34 = vector.load %arg3[%c0_27, %c512_28] : memref<1x1536xf32, #tpu.memory_space<vmem>>, vector<1x128xf32>
    %cst_29 = arith.constant dense<0.000000e+00> : vector<8x128xf32>
    %35 = tpu.matmul %0, %33, %cst_29 {dimension_numbers = #tpu.dot_dimension_numbers<[1], [0], [0], [1], [0, 0, 1, 1], [], []>} : vector<8x64xbf16>, vector<64x128xbf16>, vector<8x128xf32> -> vector<8x128xf32>
    %36 = vector.broadcast %34 : vector<1x128xf32> to vector<8x128xf32>
    %37 = arith.addf %35, %36 : vector<8x128xf32>
    %cst_30 = arith.constant 0.000000e+00 : f32
    %38 = vector.broadcast %cst_30 : f32 to vector<8x128xf32>
    %39 = arith.maximumf %37, %38 : vector<8x128xf32>
    %c32 = arith.constant 32 : index
    %c0_31 = arith.constant 0 : index
    %40 = vector.load %arg9[%c32, %c0_31] : memref<96x128xf32, #tpu.memory_space<vmem>>, vector<8x128xf32>
    tpu.vector_store %arg9[%c32, %c0_31], %39 {strides = array<i32>} : memref<96x128xf32, #tpu.memory_space<vmem>>, vector<8x128xf32>,
    %c0_32 = arith.constant 0 : index
    %c640 = arith.constant 640 : index
    %41 = vector.load %arg2[%c0_32, %c640] : memref<64x1536xbf16, #tpu.memory_space<vmem>>, vector<64x128xbf16>
    %c0_33 = arith.constant 0 : index
    %c640_34 = arith.constant 640 : index
    %42 = vector.load %arg3[%c0_33, %c640_34] : memref<1x1536xf32, #tpu.memory_space<vmem>>, vector<1x128xf32>
    %cst_35 = arith.constant dense<0.000000e+00> : vector<8x128xf32>
    %43 = tpu.matmul %0, %41, %cst_35 {dimension_numbers = #tpu.dot_dimension_numbers<[1], [0], [0], [1], [0, 0, 1, 1], [], []>} : vector<8x64xbf16>, vector<64x128xbf16>, vector<8x128xf32> -> vector<8x128xf32>
    %44 = vector.broadcast %42 : vector<1x128xf32> to vector<8x128xf32>
    %45 = arith.addf %43, %44 : vector<8x128xf32>
    %cst_36 = arith.constant 0.000000e+00 : f32
    %46 = vector.broadcast %cst_36 : f32 to vector<8x128xf32>
    %47 = arith.maximumf %45, %46 : vector<8x128xf32>
    %c40 = arith.constant 40 : index
    %c0_37 = arith.constant 0 : index
    %48 = vector.load %arg9[%c40, %c0_37] : memref<96x128xf32, #tpu.memory_space<vmem>>, vector<8x128xf32>
    tpu.vector_store %arg9[%c40, %c0_37], %47 {strides = array<i32>} : memref<96x128xf32, #tpu.memory_space<vmem>>, vector<8x128xf32>,
    %c0_38 = arith.constant 0 : index
    %c768 = arith.constant 768 : index
    %49 = vector.load %arg2[%c0_38, %c768] : memref<64x1536xbf16, #tpu.memory_space<vmem>>, vector<64x128xbf16>
    %c0_39 = arith.constant 0 : index
    %c768_40 = arith.constant 768 : index
    %50 = vector.load %arg3[%c0_39, %c768_40] : memref<1x1536xf32, #tpu.memory_space<vmem>>, vector<1x128xf32>
    %cst_41 = arith.constant dense<0.000000e+00> : vector<8x128xf32>
    %51 = tpu.matmul %0, %49, %cst_41 {dimension_numbers = #tpu.dot_dimension_numbers<[1], [0], [0], [1], [0, 0, 1, 1], [], []>} : vector<8x64xbf16>, vector<64x128xbf16>, vector<8x128xf32> -> vector<8x128xf32>
    %52 = vector.broadcast %50 : vector<1x128xf32> to vector<8x128xf32>
    %53 = arith.addf %51, %52 : vector<8x128xf32>
    %cst_42 = arith.constant 0.000000e+00 : f32
    %54 = vector.broadcast %cst_42 : f32 to vector<8x128xf32>
    %55 = arith.maximumf %53, %54 : vector<8x128xf32>
    %c48 = arith.constant 48 : index
    %c0_43 = arith.constant 0 : index
    %56 = vector.load %arg9[%c48, %c0_43] : memref<96x128xf32, #tpu.memory_space<vmem>>, vector<8x128xf32>
    tpu.vector_store %arg9[%c48, %c0_43], %55 {strides = array<i32>} : memref<96x128xf32, #tpu.memory_space<vmem>>, vector<8x128xf32>,
    %c0_44 = arith.constant 0 : index
    %c896 = arith.constant 896 : index
    %57 = vector.load %arg2[%c0_44, %c896] : memref<64x1536xbf16, #tpu.memory_space<vmem>>, vector<64x128xbf16>
    %c0_45 = arith.constant 0 : index
    %c896_46 = arith.constant 896 : index
    %58 = vector.load %arg3[%c0_45, %c896_46] : memref<1x1536xf32, #tpu.memory_space<vmem>>, vector<1x128xf32>
    %cst_47 = arith.constant dense<0.000000e+00> : vector<8x128xf32>
    %59 = tpu.matmul %0, %57, %cst_47 {dimension_numbers = #tpu.dot_dimension_numbers<[1], [0], [0], [1], [0, 0, 1, 1], [], []>} : vector<8x64xbf16>, vector<64x128xbf16>, vector<8x128xf32> -> vector<8x128xf32>
    %60 = vector.broadcast %58 : vector<1x128xf32> to vector<8x128xf32>
    %61 = arith.addf %59, %60 : vector<8x128xf32>
    %cst_48 = arith.constant 0.000000e+00 : f32
    %62 = vector.broadcast %cst_48 : f32 to vector<8x128xf32>
    %63 = arith.maximumf %61, %62 : vector<8x128xf32>
    %c56 = arith.constant 56 : index
    %c0_49 = arith.constant 0 : index
    %64 = vector.load %arg9[%c56, %c0_49] : memref<96x128xf32, #tpu.memory_space<vmem>>, vector<8x128xf32>
    tpu.vector_store %arg9[%c56, %c0_49], %63 {strides = array<i32>} : memref<96x128xf32, #tpu.memory_space<vmem>>, vector<8x128xf32>,
    %c0_50 = arith.constant 0 : index
    %c1024 = arith.constant 1024 : index
    %65 = vector.load %arg2[%c0_50, %c1024] : memref<64x1536xbf16, #tpu.memory_space<vmem>>, vector<64x128xbf16>
    %c0_51 = arith.constant 0 : index
    %c1024_52 = arith.constant 1024 : index
    %66 = vector.load %arg3[%c0_51, %c1024_52] : memref<1x1536xf32, #tpu.memory_space<vmem>>, vector<1x128xf32>
    %cst_53 = arith.constant dense<0.000000e+00> : vector<8x128xf32>
    %67 = tpu.matmul %0, %65, %cst_53 {dimension_numbers = #tpu.dot_dimension_numbers<[1], [0], [0], [1], [0, 0, 1, 1], [], []>} : vector<8x64xbf16>, vector<64x128xbf16>, vector<8x128xf32> -> vector<8x128xf32>
    %68 = vector.broadcast %66 : vector<1x128xf32> to vector<8x128xf32>
    %69 = arith.addf %67, %68 : vector<8x128xf32>
    %cst_54 = arith.constant 0.000000e+00 : f32
    %70 = vector.broadcast %cst_54 : f32 to vector<8x128xf32>
    %71 = arith.maximumf %69, %70 : vector<8x128xf32>
    %c64 = arith.constant 64 : index
    %c0_55 = arith.constant 0 : index
    %72 = vector.load %arg9[%c64, %c0_55] : memref<96x128xf32, #tpu.memory_space<vmem>>, vector<8x128xf32>
    tpu.vector_store %arg9[%c64, %c0_55], %71 {strides = array<i32>} : memref<96x128xf32, #tpu.memory_space<vmem>>, vector<8x128xf32>,
    %c0_56 = arith.constant 0 : index
    %c1152 = arith.constant 1152 : index
    %73 = vector.load %arg2[%c0_56, %c1152] : memref<64x1536xbf16, #tpu.memory_space<vmem>>, vector<64x128xbf16>
    %c0_57 = arith.constant 0 : index
    %c1152_58 = arith.constant 1152 : index
    %74 = vector.load %arg3[%c0_57, %c1152_58] : memref<1x1536xf32, #tpu.memory_space<vmem>>, vector<1x128xf32>
    %cst_59 = arith.constant dense<0.000000e+00> : vector<8x128xf32>
    %75 = tpu.matmul %0, %73, %cst_59 {dimension_numbers = #tpu.dot_dimension_numbers<[1], [0], [0], [1], [0, 0, 1, 1], [], []>} : vector<8x64xbf16>, vector<64x128xbf16>, vector<8x128xf32> -> vector<8x128xf32>
    %76 = vector.broadcast %74 : vector<1x128xf32> to vector<8x128xf32>
    %77 = arith.addf %75, %76 : vector<8x128xf32>
    %cst_60 = arith.constant 0.000000e+00 : f32
    %78 = vector.broadcast %cst_60 : f32 to vector<8x128xf32>
    %79 = arith.maximumf %77, %78 : vector<8x128xf32>
    %c72 = arith.constant 72 : index
    %c0_61 = arith.constant 0 : index
    %80 = vector.load %arg9[%c72, %c0_61] : memref<96x128xf32, #tpu.memory_space<vmem>>, vector<8x128xf32>
    tpu.vector_store %arg9[%c72, %c0_61], %79 {strides = array<i32>} : memref<96x128xf32, #tpu.memory_space<vmem>>, vector<8x128xf32>,
    %c0_62 = arith.constant 0 : index
    %c1280 = arith.constant 1280 : index
    %81 = vector.load %arg2[%c0_62, %c1280] : memref<64x1536xbf16, #tpu.memory_space<vmem>>, vector<64x128xbf16>
    %c0_63 = arith.constant 0 : index
    %c1280_64 = arith.constant 1280 : index
    %82 = vector.load %arg3[%c0_63, %c1280_64] : memref<1x1536xf32, #tpu.memory_space<vmem>>, vector<1x128xf32>
    %cst_65 = arith.constant dense<0.000000e+00> : vector<8x128xf32>
    %83 = tpu.matmul %0, %81, %cst_65 {dimension_numbers = #tpu.dot_dimension_numbers<[1], [0], [0], [1], [0, 0, 1, 1], [], []>} : vector<8x64xbf16>, vector<64x128xbf16>, vector<8x128xf32> -> vector<8x128xf32>
    %84 = vector.broadcast %82 : vector<1x128xf32> to vector<8x128xf32>
    %85 = arith.addf %83, %84 : vector<8x128xf32>
    %cst_66 = arith.constant 0.000000e+00 : f32
    %86 = vector.broadcast %cst_66 : f32 to vector<8x128xf32>
    %87 = arith.maximumf %85, %86 : vector<8x128xf32>
    %c80 = arith.constant 80 : index
    %c0_67 = arith.constant 0 : index
    %88 = vector.load %arg9[%c80, %c0_67] : memref<96x128xf32, #tpu.memory_space<vmem>>, vector<8x128xf32>
    tpu.vector_store %arg9[%c80, %c0_67], %87 {strides = array<i32>} : memref<96x128xf32, #tpu.memory_space<vmem>>, vector<8x128xf32>,
    %c0_68 = arith.constant 0 : index
    %c1408 = arith.constant 1408 : index
    %89 = vector.load %arg2[%c0_68, %c1408] : memref<64x1536xbf16, #tpu.memory_space<vmem>>, vector<64x128xbf16>
    %c0_69 = arith.constant 0 : index
    %c1408_70 = arith.constant 1408 : index
    %90 = vector.load %arg3[%c0_69, %c1408_70] : memref<1x1536xf32, #tpu.memory_space<vmem>>, vector<1x128xf32>
    %cst_71 = arith.constant dense<0.000000e+00> : vector<8x128xf32>
    %91 = tpu.matmul %0, %89, %cst_71 {dimension_numbers = #tpu.dot_dimension_numbers<[1], [0], [0], [1], [0, 0, 1, 1], [], []>} : vector<8x64xbf16>, vector<64x128xbf16>, vector<8x128xf32> -> vector<8x128xf32>
    %92 = vector.broadcast %90 : vector<1x128xf32> to vector<8x128xf32>
    %93 = arith.addf %91, %92 : vector<8x128xf32>
    %cst_72 = arith.constant 0.000000e+00 : f32
    %94 = vector.broadcast %cst_72 : f32 to vector<8x128xf32>
    %95 = arith.maximumf %93, %94 : vector<8x128xf32>
    %c88 = arith.constant 88 : index
    %c0_73 = arith.constant 0 : index
    %96 = vector.load %arg9[%c88, %c0_73] : memref<96x128xf32, #tpu.memory_space<vmem>>, vector<8x128xf32>
    tpu.vector_store %arg9[%c88, %c0_73], %95 {strides = array<i32>} : memref<96x128xf32, #tpu.memory_space<vmem>>, vector<8x128xf32>,
    %c0_74 = arith.constant 0 : index
    %c0_75 = arith.constant 0 : index
    %97 = vector.load %arg9[%c0_74, %c0_75] : memref<96x128xf32, #tpu.memory_space<vmem>>, vector<96x128xf32>
    %98 = arith.truncf %97 : vector<96x128xf32> to vector<96x128xbf16>
    %c0_76 = arith.constant 0 : index
    %c0_77 = arith.constant 0 : index
    %99 = vector.load %arg6[%c0_76, %c0_77] : memref<128x128xbf16, #tpu.memory_space<vmem>>, vector<128x128xbf16>
    %c0_78 = arith.constant 0 : index
    %c0_79 = arith.constant 0 : index
    %100 = vector.load %arg7[%c0_78, %c0_79] : memref<1x128xf32, #tpu.memory_space<vmem>>, vector<1x128xf32>
    %c0_80 = arith.constant 0 : index
    %c0_81 = arith.constant 0 : index
    %101 = vector.load %arg4[%c0_80, %c0_81] : memref<128x2048xbf16, #tpu.memory_space<vmem>>, vector<128x128xbf16>
    %c0_82 = arith.constant 0 : index
    %c0_83 = arith.constant 0 : index
    %102 = vector.load %arg5[%c0_82, %c0_83] : memref<1x2048xf32, #tpu.memory_space<vmem>>, vector<1x128xf32>
    %cst_84 = arith.constant dense<0.000000e+00> : vector<96x128xf32>
    %103 = tpu.matmul %98, %101, %cst_84 {dimension_numbers = #tpu.dot_dimension_numbers<[1], [0], [0], [1], [0, 0, 1, 1], [], []>} : vector<96x128xbf16>, vector<128x128xbf16>, vector<96x128xf32> -> vector<96x128xf32>
    %104 = vector.broadcast %102 : vector<1x128xf32> to vector<96x128xf32>
    %105 = arith.addf %103, %104 : vector<96x128xf32>
    %cst_85 = arith.constant 0.000000e+00 : f32
    %106 = vector.broadcast %cst_85 : f32 to vector<96x128xf32>
    %107 = arith.maximumf %105, %106 : vector<96x128xf32>
    %108 = arith.truncf %107 : vector<96x128xf32> to vector<96x128xbf16>
    %cst_86 = arith.constant dense<0.000000e+00> : vector<96x128xf32>
    %109 = tpu.matmul %108, %99, %cst_86 {dimension_numbers = #tpu.dot_dimension_numbers<[1], [0], [0], [1], [0, 0, 1, 1], [], []>} : vector<96x128xbf16>, vector<128x128xbf16>, vector<96x128xf32> -> vector<96x128xf32>
    %110 = vector.broadcast %100 : vector<1x128xf32> to vector<96x128xf32>
    %111 = arith.addf %109, %110 : vector<96x128xf32>
    %cst_87 = arith.constant 0.000000e+00 : f32
    %112 = vector.broadcast %cst_87 : f32 to vector<96x128xf32>
    %113 = arith.maximumf %111, %112 : vector<96x128xf32>
    %c0_88 = arith.constant 0 : index
    %c0_89 = arith.constant 0 : index
    %114 = vector.load %arg8[%c0_88, %c0_89] : memref<1536x128xf32, #tpu.memory_space<vmem>>, vector<96x128xf32>
    tpu.vector_store %arg8[%c0_88, %c0_89], %113 {strides = array<i32>} : memref<1536x128xf32, #tpu.memory_space<vmem>>, vector<96x128xf32>,
    %c0_90 = arith.constant 0 : index
    %c128_91 = arith.constant 128 : index
    %115 = vector.load %arg4[%c0_90, %c128_91] : memref<128x2048xbf16, #tpu.memory_space<vmem>>, vector<128x128xbf16>
    %c0_92 = arith.constant 0 : index
    %c128_93 = arith.constant 128 : index
    %116 = vector.load %arg5[%c0_92, %c128_93] : memref<1x2048xf32, #tpu.memory_space<vmem>>, vector<1x128xf32>
    %cst_94 = arith.constant dense<0.000000e+00> : vector<96x128xf32>
    %117 = tpu.matmul %98, %115, %cst_94 {dimension_numbers = #tpu.dot_dimension_numbers<[1], [0], [0], [1], [0, 0, 1, 1], [], []>} : vector<96x128xbf16>, vector<128x128xbf16>, vector<96x128xf32> -> vector<96x128xf32>
    %118 = vector.broadcast %116 : vector<1x128xf32> to vector<96x128xf32>
    %119 = arith.addf %117, %118 : vector<96x128xf32>
    %cst_95 = arith.constant 0.000000e+00 : f32
    %120 = vector.broadcast %cst_95 : f32 to vector<96x128xf32>
    %121 = arith.maximumf %119, %120 : vector<96x128xf32>
    %122 = arith.truncf %121 : vector<96x128xf32> to vector<96x128xbf16>
    %cst_96 = arith.constant dense<0.000000e+00> : vector<96x128xf32>
    %123 = tpu.matmul %122, %99, %cst_96 {dimension_numbers = #tpu.dot_dimension_numbers<[1], [0], [0], [1], [0, 0, 1, 1], [], []>} : vector<96x128xbf16>, vector<128x128xbf16>, vector<96x128xf32> -> vector<96x128xf32>
    %124 = vector.broadcast %100 : vector<1x128xf32> to vector<96x128xf32>
    %125 = arith.addf %123, %124 : vector<96x128xf32>
    %cst_97 = arith.constant 0.000000e+00 : f32
    %126 = vector.broadcast %cst_97 : f32 to vector<96x128xf32>
    %127 = arith.maximumf %125, %126 : vector<96x128xf32>
    %c96 = arith.constant 96 : index
    %c0_98 = arith.constant 0 : index
    %128 = vector.load %arg8[%c96, %c0_98] : memref<1536x128xf32, #tpu.memory_space<vmem>>, vector<96x128xf32>
    tpu.vector_store %arg8[%c96, %c0_98], %127 {strides = array<i32>} : memref<1536x128xf32, #tpu.memory_space<vmem>>, vector<96x128xf32>,
    %c0_99 = arith.constant 0 : index
    %c256_100 = arith.constant 256 : index
    %129 = vector.load %arg4[%c0_99, %c256_100] : memref<128x2048xbf16, #tpu.memory_space<vmem>>, vector<128x128xbf16>
    %c0_101 = arith.constant 0 : index
    %c256_102 = arith.constant 256 : index
    %130 = vector.load %arg5[%c0_101, %c256_102] : memref<1x2048xf32, #tpu.memory_space<vmem>>, vector<1x128xf32>
    %cst_103 = arith.constant dense<0.000000e+00> : vector<96x128xf32>
    %131 = tpu.matmul %98, %129, %cst_103 {dimension_numbers = #tpu.dot_dimension_numbers<[1], [0], [0], [1], [0, 0, 1, 1], [], []>} : vector<96x128xbf16>, vector<128x128xbf16>, vector<96x128xf32> -> vector<96x128xf32>
    %132 = vector.broadcast %130 : vector<1x128xf32> to vector<96x128xf32>
    %133 = arith.addf %131, %132 : vector<96x128xf32>
    %cst_104 = arith.constant 0.000000e+00 : f32
    %134 = vector.broadcast %cst_104 : f32 to vector<96x128xf32>
    %135 = arith.maximumf %133, %134 : vector<96x128xf32>
    %136 = arith.truncf %135 : vector<96x128xf32> to vector<96x128xbf16>
    %cst_105 = arith.constant dense<0.000000e+00> : vector<96x128xf32>
    %137 = tpu.matmul %136, %99, %cst_105 {dimension_numbers = #tpu.dot_dimension_numbers<[1], [0], [0], [1], [0, 0, 1, 1], [], []>} : vector<96x128xbf16>, vector<128x128xbf16>, vector<96x128xf32> -> vector<96x128xf32>
    %138 = vector.broadcast %100 : vector<1x128xf32> to vector<96x128xf32>
    %139 = arith.addf %137, %138 : vector<96x128xf32>
    %cst_106 = arith.constant 0.000000e+00 : f32
    %140 = vector.broadcast %cst_106 : f32 to vector<96x128xf32>
    %141 = arith.maximumf %139, %140 : vector<96x128xf32>
    %c192 = arith.constant 192 : index
    %c0_107 = arith.constant 0 : index
    %142 = vector.load %arg8[%c192, %c0_107] : memref<1536x128xf32, #tpu.memory_space<vmem>>, vector<96x128xf32>
    tpu.vector_store %arg8[%c192, %c0_107], %141 {strides = array<i32>} : memref<1536x128xf32, #tpu.memory_space<vmem>>, vector<96x128xf32>,
    %c0_108 = arith.constant 0 : index
    %c384_109 = arith.constant 384 : index
    %143 = vector.load %arg4[%c0_108, %c384_109] : memref<128x2048xbf16, #tpu.memory_space<vmem>>, vector<128x128xbf16>
    %c0_110 = arith.constant 0 : index
    %c384_111 = arith.constant 384 : index
    %144 = vector.load %arg5[%c0_110, %c384_111] : memref<1x2048xf32, #tpu.memory_space<vmem>>, vector<1x128xf32>
    %cst_112 = arith.constant dense<0.000000e+00> : vector<96x128xf32>
    %145 = tpu.matmul %98, %143, %cst_112 {dimension_numbers = #tpu.dot_dimension_numbers<[1], [0], [0], [1], [0, 0, 1, 1], [], []>} : vector<96x128xbf16>, vector<128x128xbf16>, vector<96x128xf32> -> vector<96x128xf32>
    %146 = vector.broadcast %144 : vector<1x128xf32> to vector<96x128xf32>
    %147 = arith.addf %145, %146 : vector<96x128xf32>
    %cst_113 = arith.constant 0.000000e+00 : f32
    %148 = vector.broadcast %cst_113 : f32 to vector<96x128xf32>
    %149 = arith.maximumf %147, %148 : vector<96x128xf32>
    %150 = arith.truncf %149 : vector<96x128xf32> to vector<96x128xbf16>
    %cst_114 = arith.constant dense<0.000000e+00> : vector<96x128xf32>
    %151 = tpu.matmul %150, %99, %cst_114 {dimension_numbers = #tpu.dot_dimension_numbers<[1], [0], [0], [1], [0, 0, 1, 1], [], []>} : vector<96x128xbf16>, vector<128x128xbf16>, vector<96x128xf32> -> vector<96x128xf32>
    %152 = vector.broadcast %100 : vector<1x128xf32> to vector<96x128xf32>
    %153 = arith.addf %151, %152 : vector<96x128xf32>
    %cst_115 = arith.constant 0.000000e+00 : f32
    %154 = vector.broadcast %cst_115 : f32 to vector<96x128xf32>
    %155 = arith.maximumf %153, %154 : vector<96x128xf32>
    %c288 = arith.constant 288 : index
    %c0_116 = arith.constant 0 : index
    %156 = vector.load %arg8[%c288, %c0_116] : memref<1536x128xf32, #tpu.memory_space<vmem>>, vector<96x128xf32>
    tpu.vector_store %arg8[%c288, %c0_116], %155 {strides = array<i32>} : memref<1536x128xf32, #tpu.memory_space<vmem>>, vector<96x128xf32>,
    %c0_117 = arith.constant 0 : index
    %c512_118 = arith.constant 512 : index
    %157 = vector.load %arg4[%c0_117, %c512_118] : memref<128x2048xbf16, #tpu.memory_space<vmem>>, vector<128x128xbf16>
    %c0_119 = arith.constant 0 : index
    %c512_120 = arith.constant 512 : index
    %158 = vector.load %arg5[%c0_119, %c512_120] : memref<1x2048xf32, #tpu.memory_space<vmem>>, vector<1x128xf32>
    %cst_121 = arith.constant dense<0.000000e+00> : vector<96x128xf32>
    %159 = tpu.matmul %98, %157, %cst_121 {dimension_numbers = #tpu.dot_dimension_numbers<[1], [0], [0], [1], [0, 0, 1, 1], [], []>} : vector<96x128xbf16>, vector<128x128xbf16>, vector<96x128xf32> -> vector<96x128xf32>
    %160 = vector.broadcast %158 : vector<1x128xf32> to vector<96x128xf32>
    %161 = arith.addf %159, %160 : vector<96x128xf32>
    %cst_122 = arith.constant 0.000000e+00 : f32
    %162 = vector.broadcast %cst_122 : f32 to vector<96x128xf32>
    %163 = arith.maximumf %161, %162 : vector<96x128xf32>
    %164 = arith.truncf %163 : vector<96x128xf32> to vector<96x128xbf16>
    %cst_123 = arith.constant dense<0.000000e+00> : vector<96x128xf32>
    %165 = tpu.matmul %164, %99, %cst_123 {dimension_numbers = #tpu.dot_dimension_numbers<[1], [0], [0], [1], [0, 0, 1, 1], [], []>} : vector<96x128xbf16>, vector<128x128xbf16>, vector<96x128xf32> -> vector<96x128xf32>
    %166 = vector.broadcast %100 : vector<1x128xf32> to vector<96x128xf32>
    %167 = arith.addf %165, %166 : vector<96x128xf32>
    %cst_124 = arith.constant 0.000000e+00 : f32
    %168 = vector.broadcast %cst_124 : f32 to vector<96x128xf32>
    %169 = arith.maximumf %167, %168 : vector<96x128xf32>
    %c384_125 = arith.constant 384 : index
    %c0_126 = arith.constant 0 : index
    %170 = vector.load %arg8[%c384_125, %c0_126] : memref<1536x128xf32, #tpu.memory_space<vmem>>, vector<96x128xf32>
    tpu.vector_store %arg8[%c384_125, %c0_126], %169 {strides = array<i32>} : memref<1536x128xf32, #tpu.memory_space<vmem>>, vector<96x128xf32>,
    %c0_127 = arith.constant 0 : index
    %c640_128 = arith.constant 640 : index
    %171 = vector.load %arg4[%c0_127, %c640_128] : memref<128x2048xbf16, #tpu.memory_space<vmem>>, vector<128x128xbf16>
    %c0_129 = arith.constant 0 : index
    %c640_130 = arith.constant 640 : index
    %172 = vector.load %arg5[%c0_129, %c640_130] : memref<1x2048xf32, #tpu.memory_space<vmem>>, vector<1x128xf32>
    %cst_131 = arith.constant dense<0.000000e+00> : vector<96x128xf32>
    %173 = tpu.matmul %98, %171, %cst_131 {dimension_numbers = #tpu.dot_dimension_numbers<[1], [0], [0], [1], [0, 0, 1, 1], [], []>} : vector<96x128xbf16>, vector<128x128xbf16>, vector<96x128xf32> -> vector<96x128xf32>
    %174 = vector.broadcast %172 : vector<1x128xf32> to vector<96x128xf32>
    %175 = arith.addf %173, %174 : vector<96x128xf32>
    %cst_132 = arith.constant 0.000000e+00 : f32
    %176 = vector.broadcast %cst_132 : f32 to vector<96x128xf32>
    %177 = arith.maximumf %175, %176 : vector<96x128xf32>
    %178 = arith.truncf %177 : vector<96x128xf32> to vector<96x128xbf16>
    %cst_133 = arith.constant dense<0.000000e+00> : vector<96x128xf32>
    %179 = tpu.matmul %178, %99, %cst_133 {dimension_numbers = #tpu.dot_dimension_numbers<[1], [0], [0], [1], [0, 0, 1, 1], [], []>} : vector<96x128xbf16>, vector<128x128xbf16>, vector<96x128xf32> -> vector<96x128xf32>
    %180 = vector.broadcast %100 : vector<1x128xf32> to vector<96x128xf32>
    %181 = arith.addf %179, %180 : vector<96x128xf32>
    %cst_134 = arith.constant 0.000000e+00 : f32
    %182 = vector.broadcast %cst_134 : f32 to vector<96x128xf32>
    %183 = arith.maximumf %181, %182 : vector<96x128xf32>
    %c480 = arith.constant 480 : index
    %c0_135 = arith.constant 0 : index
    %184 = vector.load %arg8[%c480, %c0_135] : memref<1536x128xf32, #tpu.memory_space<vmem>>, vector<96x128xf32>
    tpu.vector_store %arg8[%c480, %c0_135], %183 {strides = array<i32>} : memref<1536x128xf32, #tpu.memory_space<vmem>>, vector<96x128xf32>,
    %c0_136 = arith.constant 0 : index
    %c768_137 = arith.constant 768 : index
    %185 = vector.load %arg4[%c0_136, %c768_137] : memref<128x2048xbf16, #tpu.memory_space<vmem>>, vector<128x128xbf16>
    %c0_138 = arith.constant 0 : index
    %c768_139 = arith.constant 768 : index
    %186 = vector.load %arg5[%c0_138, %c768_139] : memref<1x2048xf32, #tpu.memory_space<vmem>>, vector<1x128xf32>
    %cst_140 = arith.constant dense<0.000000e+00> : vector<96x128xf32>
    %187 = tpu.matmul %98, %185, %cst_140 {dimension_numbers = #tpu.dot_dimension_numbers<[1], [0], [0], [1], [0, 0, 1, 1], [], []>} : vector<96x128xbf16>, vector<128x128xbf16>, vector<96x128xf32> -> vector<96x128xf32>
    %188 = vector.broadcast %186 : vector<1x128xf32> to vector<96x128xf32>
    %189 = arith.addf %187, %188 : vector<96x128xf32>
    %cst_141 = arith.constant 0.000000e+00 : f32
    %190 = vector.broadcast %cst_141 : f32 to vector<96x128xf32>
    %191 = arith.maximumf %189, %190 : vector<96x128xf32>
    %192 = arith.truncf %191 : vector<96x128xf32> to vector<96x128xbf16>
    %cst_142 = arith.constant dense<0.000000e+00> : vector<96x128xf32>
    %193 = tpu.matmul %192, %99, %cst_142 {dimension_numbers = #tpu.dot_dimension_numbers<[1], [0], [0], [1], [0, 0, 1, 1], [], []>} : vector<96x128xbf16>, vector<128x128xbf16>, vector<96x128xf32> -> vector<96x128xf32>
    %194 = vector.broadcast %100 : vector<1x128xf32> to vector<96x128xf32>
    %195 = arith.addf %193, %194 : vector<96x128xf32>
    %cst_143 = arith.constant 0.000000e+00 : f32
    %196 = vector.broadcast %cst_143 : f32 to vector<96x128xf32>
    %197 = arith.maximumf %195, %196 : vector<96x128xf32>
    %c576 = arith.constant 576 : index
    %c0_144 = arith.constant 0 : index
    %198 = vector.load %arg8[%c576, %c0_144] : memref<1536x128xf32, #tpu.memory_space<vmem>>, vector<96x128xf32>
    tpu.vector_store %arg8[%c576, %c0_144], %197 {strides = array<i32>} : memref<1536x128xf32, #tpu.memory_space<vmem>>, vector<96x128xf32>,
    %c0_145 = arith.constant 0 : index
    %c896_146 = arith.constant 896 : index
    %199 = vector.load %arg4[%c0_145, %c896_146] : memref<128x2048xbf16, #tpu.memory_space<vmem>>, vector<128x128xbf16>
    %c0_147 = arith.constant 0 : index
    %c896_148 = arith.constant 896 : index
    %200 = vector.load %arg5[%c0_147, %c896_148] : memref<1x2048xf32, #tpu.memory_space<vmem>>, vector<1x128xf32>
    %cst_149 = arith.constant dense<0.000000e+00> : vector<96x128xf32>
    %201 = tpu.matmul %98, %199, %cst_149 {dimension_numbers = #tpu.dot_dimension_numbers<[1], [0], [0], [1], [0, 0, 1, 1], [], []>} : vector<96x128xbf16>, vector<128x128xbf16>, vector<96x128xf32> -> vector<96x128xf32>
    %202 = vector.broadcast %200 : vector<1x128xf32> to vector<96x128xf32>
    %203 = arith.addf %201, %202 : vector<96x128xf32>
    %cst_150 = arith.constant 0.000000e+00 : f32
    %204 = vector.broadcast %cst_150 : f32 to vector<96x128xf32>
    %205 = arith.maximumf %203, %204 : vector<96x128xf32>
    %206 = arith.truncf %205 : vector<96x128xf32> to vector<96x128xbf16>
    %cst_151 = arith.constant dense<0.000000e+00> : vector<96x128xf32>
    %207 = tpu.matmul %206, %99, %cst_151 {dimension_numbers = #tpu.dot_dimension_numbers<[1], [0], [0], [1], [0, 0, 1, 1], [], []>} : vector<96x128xbf16>, vector<128x128xbf16>, vector<96x128xf32> -> vector<96x128xf32>
    %208 = vector.broadcast %100 : vector<1x128xf32> to vector<96x128xf32>
    %209 = arith.addf %207, %208 : vector<96x128xf32>
    %cst_152 = arith.constant 0.000000e+00 : f32
    %210 = vector.broadcast %cst_152 : f32 to vector<96x128xf32>
    %211 = arith.maximumf %209, %210 : vector<96x128xf32>
    %c672 = arith.constant 672 : index
    %c0_153 = arith.constant 0 : index
    %212 = vector.load %arg8[%c672, %c0_153] : memref<1536x128xf32, #tpu.memory_space<vmem>>, vector<96x128xf32>
    tpu.vector_store %arg8[%c672, %c0_153], %211 {strides = array<i32>} : memref<1536x128xf32, #tpu.memory_space<vmem>>, vector<96x128xf32>,
    %c0_154 = arith.constant 0 : index
    %c1024_155 = arith.constant 1024 : index
    %213 = vector.load %arg4[%c0_154, %c1024_155] : memref<128x2048xbf16, #tpu.memory_space<vmem>>, vector<128x128xbf16>
    %c0_156 = arith.constant 0 : index
    %c1024_157 = arith.constant 1024 : index
    %214 = vector.load %arg5[%c0_156, %c1024_157] : memref<1x2048xf32, #tpu.memory_space<vmem>>, vector<1x128xf32>
    %cst_158 = arith.constant dense<0.000000e+00> : vector<96x128xf32>
    %215 = tpu.matmul %98, %213, %cst_158 {dimension_numbers = #tpu.dot_dimension_numbers<[1], [0], [0], [1], [0, 0, 1, 1], [], []>} : vector<96x128xbf16>, vector<128x128xbf16>, vector<96x128xf32> -> vector<96x128xf32>
    %216 = vector.broadcast %214 : vector<1x128xf32> to vector<96x128xf32>
    %217 = arith.addf %215, %216 : vector<96x128xf32>
    %cst_159 = arith.constant 0.000000e+00 : f32
    %218 = vector.broadcast %cst_159 : f32 to vector<96x128xf32>
    %219 = arith.maximumf %217, %218 : vector<96x128xf32>
    %220 = arith.truncf %219 : vector<96x128xf32> to vector<96x128xbf16>
    %cst_160 = arith.constant dense<0.000000e+00> : vector<96x128xf32>
    %221 = tpu.matmul %220, %99, %cst_160 {dimension_numbers = #tpu.dot_dimension_numbers<[1], [0], [0], [1], [0, 0, 1, 1], [], []>} : vector<96x128xbf16>, vector<128x128xbf16>, vector<96x128xf32> -> vector<96x128xf32>
    %222 = vector.broadcast %100 : vector<1x128xf32> to vector<96x128xf32>
    %223 = arith.addf %221, %222 : vector<96x128xf32>
    %cst_161 = arith.constant 0.000000e+00 : f32
    %224 = vector.broadcast %cst_161 : f32 to vector<96x128xf32>
    %225 = arith.maximumf %223, %224 : vector<96x128xf32>
    %c768_162 = arith.constant 768 : index
    %c0_163 = arith.constant 0 : index
    %226 = vector.load %arg8[%c768_162, %c0_163] : memref<1536x128xf32, #tpu.memory_space<vmem>>, vector<96x128xf32>
    tpu.vector_store %arg8[%c768_162, %c0_163], %225 {strides = array<i32>} : memref<1536x128xf32, #tpu.memory_space<vmem>>, vector<96x128xf32>,
    %c0_164 = arith.constant 0 : index
    %c1152_165 = arith.constant 1152 : index
    %227 = vector.load %arg4[%c0_164, %c1152_165] : memref<128x2048xbf16, #tpu.memory_space<vmem>>, vector<128x128xbf16>
    %c0_166 = arith.constant 0 : index
    %c1152_167 = arith.constant 1152 : index
    %228 = vector.load %arg5[%c0_166, %c1152_167] : memref<1x2048xf32, #tpu.memory_space<vmem>>, vector<1x128xf32>
    %cst_168 = arith.constant dense<0.000000e+00> : vector<96x128xf32>
    %229 = tpu.matmul %98, %227, %cst_168 {dimension_numbers = #tpu.dot_dimension_numbers<[1], [0], [0], [1], [0, 0, 1, 1], [], []>} : vector<96x128xbf16>, vector<128x128xbf16>, vector<96x128xf32> -> vector<96x128xf32>
    %230 = vector.broadcast %228 : vector<1x128xf32> to vector<96x128xf32>
    %231 = arith.addf %229, %230 : vector<96x128xf32>
    %cst_169 = arith.constant 0.000000e+00 : f32
    %232 = vector.broadcast %cst_169 : f32 to vector<96x128xf32>
    %233 = arith.maximumf %231, %232 : vector<96x128xf32>
    %234 = arith.truncf %233 : vector<96x128xf32> to vector<96x128xbf16>
    %cst_170 = arith.constant dense<0.000000e+00> : vector<96x128xf32>
    %235 = tpu.matmul %234, %99, %cst_170 {dimension_numbers = #tpu.dot_dimension_numbers<[1], [0], [0], [1], [0, 0, 1, 1], [], []>} : vector<96x128xbf16>, vector<128x128xbf16>, vector<96x128xf32> -> vector<96x128xf32>
    %236 = vector.broadcast %100 : vector<1x128xf32> to vector<96x128xf32>
    %237 = arith.addf %235, %236 : vector<96x128xf32>
    %cst_171 = arith.constant 0.000000e+00 : f32
    %238 = vector.broadcast %cst_171 : f32 to vector<96x128xf32>
    %239 = arith.maximumf %237, %238 : vector<96x128xf32>
    %c864 = arith.constant 864 : index
    %c0_172 = arith.constant 0 : index
    %240 = vector.load %arg8[%c864, %c0_172] : memref<1536x128xf32, #tpu.memory_space<vmem>>, vector<96x128xf32>
    tpu.vector_store %arg8[%c864, %c0_172], %239 {strides = array<i32>} : memref<1536x128xf32, #tpu.memory_space<vmem>>, vector<96x128xf32>,
    %c0_173 = arith.constant 0 : index
    %c1280_174 = arith.constant 1280 : index
    %241 = vector.load %arg4[%c0_173, %c1280_174] : memref<128x2048xbf16, #tpu.memory_space<vmem>>, vector<128x128xbf16>
    %c0_175 = arith.constant 0 : index
    %c1280_176 = arith.constant 1280 : index
    %242 = vector.load %arg5[%c0_175, %c1280_176] : memref<1x2048xf32, #tpu.memory_space<vmem>>, vector<1x128xf32>
    %cst_177 = arith.constant dense<0.000000e+00> : vector<96x128xf32>
    %243 = tpu.matmul %98, %241, %cst_177 {dimension_numbers = #tpu.dot_dimension_numbers<[1], [0], [0], [1], [0, 0, 1, 1], [], []>} : vector<96x128xbf16>, vector<128x128xbf16>, vector<96x128xf32> -> vector<96x128xf32>
    %244 = vector.broadcast %242 : vector<1x128xf32> to vector<96x128xf32>
    %245 = arith.addf %243, %244 : vector<96x128xf32>
    %cst_178 = arith.constant 0.000000e+00 : f32
    %246 = vector.broadcast %cst_178 : f32 to vector<96x128xf32>
    %247 = arith.maximumf %245, %246 : vector<96x128xf32>
    %248 = arith.truncf %247 : vector<96x128xf32> to vector<96x128xbf16>
    %cst_179 = arith.constant dense<0.000000e+00> : vector<96x128xf32>
    %249 = tpu.matmul %248, %99, %cst_179 {dimension_numbers = #tpu.dot_dimension_numbers<[1], [0], [0], [1], [0, 0, 1, 1], [], []>} : vector<96x128xbf16>, vector<128x128xbf16>, vector<96x128xf32> -> vector<96x128xf32>
    %250 = vector.broadcast %100 : vector<1x128xf32> to vector<96x128xf32>
    %251 = arith.addf %249, %250 : vector<96x128xf32>
    %cst_180 = arith.constant 0.000000e+00 : f32
    %252 = vector.broadcast %cst_180 : f32 to vector<96x128xf32>
    %253 = arith.maximumf %251, %252 : vector<96x128xf32>
    %c960 = arith.constant 960 : index
    %c0_181 = arith.constant 0 : index
    %254 = vector.load %arg8[%c960, %c0_181] : memref<1536x128xf32, #tpu.memory_space<vmem>>, vector<96x128xf32>
    tpu.vector_store %arg8[%c960, %c0_181], %253 {strides = array<i32>} : memref<1536x128xf32, #tpu.memory_space<vmem>>, vector<96x128xf32>,
    %c0_182 = arith.constant 0 : index
    %c1408_183 = arith.constant 1408 : index
    %255 = vector.load %arg4[%c0_182, %c1408_183] : memref<128x2048xbf16, #tpu.memory_space<vmem>>, vector<128x128xbf16>
    %c0_184 = arith.constant 0 : index
    %c1408_185 = arith.constant 1408 : index
    %256 = vector.load %arg5[%c0_184, %c1408_185] : memref<1x2048xf32, #tpu.memory_space<vmem>>, vector<1x128xf32>
    %cst_186 = arith.constant dense<0.000000e+00> : vector<96x128xf32>
    %257 = tpu.matmul %98, %255, %cst_186 {dimension_numbers = #tpu.dot_dimension_numbers<[1], [0], [0], [1], [0, 0, 1, 1], [], []>} : vector<96x128xbf16>, vector<128x128xbf16>, vector<96x128xf32> -> vector<96x128xf32>
    %258 = vector.broadcast %256 : vector<1x128xf32> to vector<96x128xf32>
    %259 = arith.addf %257, %258 : vector<96x128xf32>
    %cst_187 = arith.constant 0.000000e+00 : f32
    %260 = vector.broadcast %cst_187 : f32 to vector<96x128xf32>
    %261 = arith.maximumf %259, %260 : vector<96x128xf32>
    %262 = arith.truncf %261 : vector<96x128xf32> to vector<96x128xbf16>
    %cst_188 = arith.constant dense<0.000000e+00> : vector<96x128xf32>
    %263 = tpu.matmul %262, %99, %cst_188 {dimension_numbers = #tpu.dot_dimension_numbers<[1], [0], [0], [1], [0, 0, 1, 1], [], []>} : vector<96x128xbf16>, vector<128x128xbf16>, vector<96x128xf32> -> vector<96x128xf32>
    %264 = vector.broadcast %100 : vector<1x128xf32> to vector<96x128xf32>
    %265 = arith.addf %263, %264 : vector<96x128xf32>
    %cst_189 = arith.constant 0.000000e+00 : f32
    %266 = vector.broadcast %cst_189 : f32 to vector<96x128xf32>
    %267 = arith.maximumf %265, %266 : vector<96x128xf32>
    %c1056 = arith.constant 1056 : index
    %c0_190 = arith.constant 0 : index
    %268 = vector.load %arg8[%c1056, %c0_190] : memref<1536x128xf32, #tpu.memory_space<vmem>>, vector<96x128xf32>
    tpu.vector_store %arg8[%c1056, %c0_190], %267 {strides = array<i32>} : memref<1536x128xf32, #tpu.memory_space<vmem>>, vector<96x128xf32>,
    %c0_191 = arith.constant 0 : index
    %c1536 = arith.constant 1536 : index
    %269 = vector.load %arg4[%c0_191, %c1536] : memref<128x2048xbf16, #tpu.memory_space<vmem>>, vector<128x128xbf16>
    %c0_192 = arith.constant 0 : index
    %c1536_193 = arith.constant 1536 : index
    %270 = vector.load %arg5[%c0_192, %c1536_193] : memref<1x2048xf32, #tpu.memory_space<vmem>>, vector<1x128xf32>
    %cst_194 = arith.constant dense<0.000000e+00> : vector<96x128xf32>
    %271 = tpu.matmul %98, %269, %cst_194 {dimension_numbers = #tpu.dot_dimension_numbers<[1], [0], [0], [1], [0, 0, 1, 1], [], []>} : vector<96x128xbf16>, vector<128x128xbf16>, vector<96x128xf32> -> vector<96x128xf32>
    %272 = vector.broadcast %270 : vector<1x128xf32> to vector<96x128xf32>
    %273 = arith.addf %271, %272 : vector<96x128xf32>
    %cst_195 = arith.constant 0.000000e+00 : f32
    %274 = vector.broadcast %cst_195 : f32 to vector<96x128xf32>
    %275 = arith.maximumf %273, %274 : vector<96x128xf32>
    %276 = arith.truncf %275 : vector<96x128xf32> to vector<96x128xbf16>
    %cst_196 = arith.constant dense<0.000000e+00> : vector<96x128xf32>
    %277 = tpu.matmul %276, %99, %cst_196 {dimension_numbers = #tpu.dot_dimension_numbers<[1], [0], [0], [1], [0, 0, 1, 1], [], []>} : vector<96x128xbf16>, vector<128x128xbf16>, vector<96x128xf32> -> vector<96x128xf32>
    %278 = vector.broadcast %100 : vector<1x128xf32> to vector<96x128xf32>
    %279 = arith.addf %277, %278 : vector<96x128xf32>
    %cst_197 = arith.constant 0.000000e+00 : f32
    %280 = vector.broadcast %cst_197 : f32 to vector<96x128xf32>
    %281 = arith.maximumf %279, %280 : vector<96x128xf32>
    %c1152_198 = arith.constant 1152 : index
    %c0_199 = arith.constant 0 : index
    %282 = vector.load %arg8[%c1152_198, %c0_199] : memref<1536x128xf32, #tpu.memory_space<vmem>>, vector<96x128xf32>
    tpu.vector_store %arg8[%c1152_198, %c0_199], %281 {strides = array<i32>} : memref<1536x128xf32, #tpu.memory_space<vmem>>, vector<96x128xf32>,
    %c0_200 = arith.constant 0 : index
    %c1664 = arith.constant 1664 : index
    %283 = vector.load %arg4[%c0_200, %c1664] : memref<128x2048xbf16, #tpu.memory_space<vmem>>, vector<128x128xbf16>
    %c0_201 = arith.constant 0 : index
    %c1664_202 = arith.constant 1664 : index
    %284 = vector.load %arg5[%c0_201, %c1664_202] : memref<1x2048xf32, #tpu.memory_space<vmem>>, vector<1x128xf32>
    %cst_203 = arith.constant dense<0.000000e+00> : vector<96x128xf32>
    %285 = tpu.matmul %98, %283, %cst_203 {dimension_numbers = #tpu.dot_dimension_numbers<[1], [0], [0], [1], [0, 0, 1, 1], [], []>} : vector<96x128xbf16>, vector<128x128xbf16>, vector<96x128xf32> -> vector<96x128xf32>
    %286 = vector.broadcast %284 : vector<1x128xf32> to vector<96x128xf32>
    %287 = arith.addf %285, %286 : vector<96x128xf32>
    %cst_204 = arith.constant 0.000000e+00 : f32
    %288 = vector.broadcast %cst_204 : f32 to vector<96x128xf32>
    %289 = arith.maximumf %287, %288 : vector<96x128xf32>
    %290 = arith.truncf %289 : vector<96x128xf32> to vector<96x128xbf16>
    %cst_205 = arith.constant dense<0.000000e+00> : vector<96x128xf32>
    %291 = tpu.matmul %290, %99, %cst_205 {dimension_numbers = #tpu.dot_dimension_numbers<[1], [0], [0], [1], [0, 0, 1, 1], [], []>} : vector<96x128xbf16>, vector<128x128xbf16>, vector<96x128xf32> -> vector<96x128xf32>
    %292 = vector.broadcast %100 : vector<1x128xf32> to vector<96x128xf32>
    %293 = arith.addf %291, %292 : vector<96x128xf32>
    %cst_206 = arith.constant 0.000000e+00 : f32
    %294 = vector.broadcast %cst_206 : f32 to vector<96x128xf32>
    %295 = arith.maximumf %293, %294 : vector<96x128xf32>
    %c1248 = arith.constant 1248 : index
    %c0_207 = arith.constant 0 : index
    %296 = vector.load %arg8[%c1248, %c0_207] : memref<1536x128xf32, #tpu.memory_space<vmem>>, vector<96x128xf32>
    tpu.vector_store %arg8[%c1248, %c0_207], %295 {strides = array<i32>} : memref<1536x128xf32, #tpu.memory_space<vmem>>, vector<96x128xf32>,
    %c0_208 = arith.constant 0 : index
    %c1792 = arith.constant 1792 : index
    %297 = vector.load %arg4[%c0_208, %c1792] : memref<128x2048xbf16, #tpu.memory_space<vmem>>, vector<128x128xbf16>
    %c0_209 = arith.constant 0 : index
    %c1792_210 = arith.constant 1792 : index
    %298 = vector.load %arg5[%c0_209, %c1792_210] : memref<1x2048xf32, #tpu.memory_space<vmem>>, vector<1x128xf32>
    %cst_211 = arith.constant dense<0.000000e+00> : vector<96x128xf32>
    %299 = tpu.matmul %98, %297, %cst_211 {dimension_numbers = #tpu.dot_dimension_numbers<[1], [0], [0], [1], [0, 0, 1, 1], [], []>} : vector<96x128xbf16>, vector<128x128xbf16>, vector<96x128xf32> -> vector<96x128xf32>
    %300 = vector.broadcast %298 : vector<1x128xf32> to vector<96x128xf32>
    %301 = arith.addf %299, %300 : vector<96x128xf32>
    %cst_212 = arith.constant 0.000000e+00 : f32
    %302 = vector.broadcast %cst_212 : f32 to vector<96x128xf32>
    %303 = arith.maximumf %301, %302 : vector<96x128xf32>
    %304 = arith.truncf %303 : vector<96x128xf32> to vector<96x128xbf16>
    %cst_213 = arith.constant dense<0.000000e+00> : vector<96x128xf32>
    %305 = tpu.matmul %304, %99, %cst_213 {dimension_numbers = #tpu.dot_dimension_numbers<[1], [0], [0], [1], [0, 0, 1, 1], [], []>} : vector<96x128xbf16>, vector<128x128xbf16>, vector<96x128xf32> -> vector<96x128xf32>
    %306 = vector.broadcast %100 : vector<1x128xf32> to vector<96x128xf32>
    %307 = arith.addf %305, %306 : vector<96x128xf32>
    %cst_214 = arith.constant 0.000000e+00 : f32
    %308 = vector.broadcast %cst_214 : f32 to vector<96x128xf32>
    %309 = arith.maximumf %307, %308 : vector<96x128xf32>
    %c1344 = arith.constant 1344 : index
    %c0_215 = arith.constant 0 : index
    %310 = vector.load %arg8[%c1344, %c0_215] : memref<1536x128xf32, #tpu.memory_space<vmem>>, vector<96x128xf32>
    tpu.vector_store %arg8[%c1344, %c0_215], %309 {strides = array<i32>} : memref<1536x128xf32, #tpu.memory_space<vmem>>, vector<96x128xf32>,
    %c0_216 = arith.constant 0 : index
    %c1920 = arith.constant 1920 : index
    %311 = vector.load %arg4[%c0_216, %c1920] : memref<128x2048xbf16, #tpu.memory_space<vmem>>, vector<128x128xbf16>
    %c0_217 = arith.constant 0 : index
    %c1920_218 = arith.constant 1920 : index
    %312 = vector.load %arg5[%c0_217, %c1920_218] : memref<1x2048xf32, #tpu.memory_space<vmem>>, vector<1x128xf32>
    %cst_219 = arith.constant dense<0.000000e+00> : vector<96x128xf32>
    %313 = tpu.matmul %98, %311, %cst_219 {dimension_numbers = #tpu.dot_dimension_numbers<[1], [0], [0], [1], [0, 0, 1, 1], [], []>} : vector<96x128xbf16>, vector<128x128xbf16>, vector<96x128xf32> -> vector<96x128xf32>
    %314 = vector.broadcast %312 : vector<1x128xf32> to vector<96x128xf32>
    %315 = arith.addf %313, %314 : vector<96x128xf32>
    %cst_220 = arith.constant 0.000000e+00 : f32
    %316 = vector.broadcast %cst_220 : f32 to vector<96x128xf32>
    %317 = arith.maximumf %315, %316 : vector<96x128xf32>
    %318 = arith.truncf %317 : vector<96x128xf32> to vector<96x128xbf16>
    %cst_221 = arith.constant dense<0.000000e+00> : vector<96x128xf32>
    %319 = tpu.matmul %318, %99, %cst_221 {dimension_numbers = #tpu.dot_dimension_numbers<[1], [0], [0], [1], [0, 0, 1, 1], [], []>} : vector<96x128xbf16>, vector<128x128xbf16>, vector<96x128xf32> -> vector<96x128xf32>
    %320 = vector.broadcast %100 : vector<1x128xf32> to vector<96x128xf32>
    %321 = arith.addf %319, %320 : vector<96x128xf32>
    %cst_222 = arith.constant 0.000000e+00 : f32
    %322 = vector.broadcast %cst_222 : f32 to vector<96x128xf32>
    %323 = arith.maximumf %321, %322 : vector<96x128xf32>
    %c1440 = arith.constant 1440 : index
    %c0_223 = arith.constant 0 : index
    %324 = vector.load %arg8[%c1440, %c0_223] : memref<1536x128xf32, #tpu.memory_space<vmem>>, vector<96x128xf32>
    tpu.vector_store %arg8[%c1440, %c0_223], %323 {strides = array<i32>} : memref<1536x128xf32, #tpu.memory_space<vmem>>, vector<96x128xf32>,
    return
  }
  func.func @transform_0(%arg0: i32) -> (i32, i32) {
    %c0_i32 = arith.constant 0 : i32
    %c0_i32_0 = arith.constant 0 : i32
    %c0_i32_1 = arith.constant 0 : i32
    return %c0_i32, %c0_i32_0 : i32, i32
  }
  func.func @transform_1(%arg0: i32) -> (i32, i32) {
    %c0_i32 = arith.constant 0 : i32
    %c0_i32_0 = arith.constant 0 : i32
    %c0_i32_1 = arith.constant 0 : i32
    return %c0_i32, %c0_i32_0 : i32, i32
  }
  func.func @transform_2(%arg0: i32) -> (i32, i32) {
    %c0_i32 = arith.constant 0 : i32
    %c0_i32_0 = arith.constant 0 : i32
    %c0_i32_1 = arith.constant 0 : i32
    return %c0_i32, %c0_i32_0 : i32, i32
  }
  func.func @transform_3(%arg0: i32) -> (i32, i32) {
    %c0_i32 = arith.constant 0 : i32
    %c0_i32_0 = arith.constant 0 : i32
    %c0_i32_1 = arith.constant 0 : i32
    return %c0_i32, %c0_i32_0 : i32, i32
  }
  func.func @transform_4(%arg0: i32) -> (i32, i32) {
    %c0_i32 = arith.constant 0 : i32
    %c0_i32_0 = arith.constant 0 : i32
    %c0_i32_1 = arith.constant 0 : i32
    return %c0_i32, %c0_i32_0 : i32, i32
  }
  func.func @transform_5(%arg0: i32) -> (i32, i32) {
    %c0_i32 = arith.constant 0 : i32
    %c0_i32_0 = arith.constant 0 : i32
    %c0_i32_1 = arith.constant 0 : i32
    return %c0_i32, %c0_i32_0 : i32, i32
  }
  func.func @transform_6(%arg0: i32) -> (i32, i32) {
    %c0_i32 = arith.constant 0 : i32
    %c0_i32_0 = arith.constant 0 : i32
    %c0_i32_1 = arith.constant 0 : i32
    return %c0_i32, %c0_i32_0 : i32, i32
  }
  func.func @transform_7(%arg0: i32) -> (i32, i32) {
    %c0_i32 = arith.constant 0 : i32
    %c0_i32_0 = arith.constant 0 : i32
    %c0_i32_1 = arith.constant 0 : i32
    return %c0_i32, %c0_i32_0 : i32, i32
  }
}

</mosaic_0001>

<llo_original>
// kernel: conv_decoder3_forward.1
$region0: #{conv_decoder3_forward.1}
  #allocation0 [shape = 'u32[]', space=smem, size = 0x4, offset = 0x4, fixed_abs, tag = 'smem constant byte address 0x4 - core index']
  #allocation1 [shape = 'u32[144,128]{1,0:T(1,128)}', space=vmem, size = 0x12000, scoped, tag = 'internal scratch']
  #allocation2 [shape = 'f32[96,128]{1,0:T(8,128)}', space=vmem, size = 0xc000, scoped, tag = 'scratch operand']
  %s0 = inlined_call_operand.vmem [shape: bf16[8,64], index: 0, kind: input, shape index: {}]
  %s1 = inlined_call_operand.hbm [shape: bf16[64,1536], index: 1, kind: input, shape index: {}]
  %s2 = inlined_call_operand.hbm [shape: f32[1,1536], index: 2, kind: input, shape index: {}]
  %s3 = inlined_call_operand.hbm [shape: bf16[128,2048], index: 3, kind: input, shape index: {}]
  %s4 = inlined_call_operand.hbm [shape: f32[1,2048], index: 4, kind: input, shape index: {}]
  %s5 = inlined_call_operand.hbm [shape: bf16[128,128], index: 5, kind: input, shape index: {}]
  %s6 = inlined_call_operand.hbm [shape: f32[1,128], index: 6, kind: input, shape index: {}]
  %s7 = inlined_call_operand.vmem [shape: f32[1536,128], index: 7, kind: output, shape index: {}]
  %s8 = sld [smem:[#allocation0]]
  $region62: #{conv_decoder3_forward.1} parent=0
    _
  %s10 = ssub.s32 1, %s8
  %s11 = scalar_select 0, %s10, %s8
  $region1: #{conv_decoder3_forward.1} parent=0
    #allocation3 [shape = 'u8[196608]{0}', space=vmem, size = 0x30000, scoped, tag = 'input window, operand 1, single buffered']
    #allocation4 [shape = 's32[1]{0}', space=sflag, size = 0x4, scoped, tag = 'scoped memory for conv_decoder3_forward.1']
    #allocation5 [shape = 'u8[6144]{0}', space=vmem, size = 0x1800, scoped, tag = 'input window, operand 2, single buffered']
    #allocation6 [shape = 's32[1]{0}', space=sflag, size = 0x4, scoped, tag = 'scoped memory for conv_decoder3_forward.1']
    #allocation7 [shape = 'u8[524288]{0}', space=vmem, size = 0x80000, scoped, tag = 'input window, operand 3, single buffered']
    #allocation8 [shape = 'u8[8192]{0}', space=vmem, size = 0x2000, scoped, tag = 'input window, operand 4, single buffered']
    #allocation9 [shape = 's32[1]{0}', space=sflag, size = 0x4, scoped, tag = 'scoped memory for conv_decoder3_forward.1']
    #allocation10 [shape = 'u8[32768]{0}', space=vmem, size = 0x8000, scoped, tag = 'input window, operand 5, single buffered']
    #allocation11 [shape = 'u8[512]{0}', space=vmem, size = 0x400, scoped, tag = 'input window, operand 6, single buffered']
    #allocation12 [shape = 's32[1]{0}', space=sflag, size = 0x4, scoped, tag = 'scoped memory for conv_decoder3_forward.1']
    %12 = vsyncpa [#allocation4], 0
    %13 = vsyncpa [#allocation6], 0
    %14 = vsyncpa [#allocation9], 0
    %15 = vsyncpa [#allocation12], 0
    // Predicated region
    $region2: #{conv_decoder3_forward.1} parent=1 // pred_check
      _
    $region3: #{conv_decoder3_forward.1} parent=1 // pred_check_branch
      %17 = sbr.rel (0) target = $region5
    $region4: #{conv_decoder3_forward.1} parent=1 // pred_region
      _
    $region5: #{conv_decoder3_forward.1} parent=1 // pred_fallthru
      _
    // Predicated region
    $region6: #{conv_decoder3_forward.1} parent=1 // pred_check
      _
    $region7: #{conv_decoder3_forward.1} parent=1 // pred_check_branch
      %19 = sbr.rel (0) target = $region9
    $region8: #{conv_decoder3_forward.1} parent=1 // pred_region
      %s21 = ssub.s32 6144, 6144
      %22 = vsyncadd [#allocation4], %s21
      %s23 = sshll.u32 [#allocation3], 4
      %s24 = int_to_ptr.vmem [resolvable:$true] %s23
      %29 = dma.hbm_to_vmem [thread:$0]  %s1, 6144, %s24, [#allocation4], 768, 768, 48
    $region9: #{conv_decoder3_forward.1} parent=1 // pred_fallthru
      _
    // Predicated region
    $region10: #{conv_decoder3_forward.1} parent=1 // pred_check
      _
    $region11: #{conv_decoder3_forward.1} parent=1 // pred_check_branch
      %31 = sbr.rel (0) target = $region13
    $region12: #{conv_decoder3_forward.1} parent=1 // pred_region
      %s33 = ssub.s32 192, 192
      %34 = vsyncadd [#allocation6], %s33
      %s36 = sshll.u32 [#allocation5], 4
      %s37 = int_to_ptr.vmem [resolvable:$true] %s36
      %39 = dma.hbm_to_vmem [thread:$0]  %s2, 192, %s37, [#allocation6]
    $region13: #{conv_decoder3_forward.1} parent=1 // pred_fallthru
      _
    // Predicated region
    $region14: #{conv_decoder3_forward.1} parent=1 // pred_check
      _
    $region15: #{conv_decoder3_forward.1} parent=1 // pred_check_branch
      %41 = sbr.rel (0) target = $region17
    $region16: #{conv_decoder3_forward.1} parent=1 // pred_region
      %s43 = ssub.s32 16384, 16384
      %44 = vsyncadd [#allocation6], %s43
      %s45 = sshll.u32 [#allocation7], 4
      %s46 = int_to_ptr.vmem [resolvable:$true] %s45
      %51 = dma.hbm_to_vmem [thread:$0]  %s3, 16384, %s46, [#allocation6], 1024, 1024, 64
    $region17: #{conv_decoder3_forward.1} parent=1 // pred_fallthru
      _
    // Predicated region
    $region18: #{conv_decoder3_forward.1} parent=1 // pred_check
      _
    $region19: #{conv_decoder3_forward.1} parent=1 // pred_check_branch
      %53 = sbr.rel (0) target = $region21
    $region20: #{conv_decoder3_forward.1} parent=1 // pred_region
      %s55 = ssub.s32 256, 256
      %56 = vsyncadd [#allocation9], %s55
      %s58 = sshll.u32 [#allocation8], 4
      %s59 = int_to_ptr.vmem [resolvable:$true] %s58
      %61 = dma.hbm_to_vmem [thread:$0]  %s4, 256, %s59, [#allocation9]
    $region21: #{conv_decoder3_forward.1} parent=1 // pred_fallthru
      _
    // Predicated region
    $region22: #{conv_decoder3_forward.1} parent=1 // pred_check
      _
    $region23: #{conv_decoder3_forward.1} parent=1 // pred_check_branch
      %63 = sbr.rel (0) target = $region25
    $region24: #{conv_decoder3_forward.1} parent=1 // pred_region
      %s65 = ssub.s32 1024, 1024
      %66 = vsyncadd [#allocation9], %s65
      %s67 = sshll.u32 [#allocation10], 4
      %s68 = int_to_ptr.vmem [resolvable:$true] %s67
      %73 = dma.hbm_to_vmem [thread:$0]  %s5, 1024, %s68, [#allocation9], 64, 64, 4
    $region25: #{conv_decoder3_forward.1} parent=1 // pred_fallthru
      _
    // Predicated region
    $region26: #{conv_decoder3_forward.1} parent=1 // pred_check
      _
    $region27: #{conv_decoder3_forward.1} parent=1 // pred_check_branch
      %75 = sbr.rel (0) target = $region29
    $region28: #{conv_decoder3_forward.1} parent=1 // pred_region
      %s77 = ssub.s32 16, 16
      %78 = vsyncadd [#allocation12], %s77
      %s80 = sshll.u32 [#allocation11], 4
      %s81 = int_to_ptr.vmem [resolvable:$true] %s80
      %83 = dma.hbm_to_vmem [thread:$0]  %s6, 16, %s81, [#allocation12]
    $region29: #{conv_decoder3_forward.1} parent=1 // pred_fallthru
      _
    // Predicated region
    $region30: #{conv_decoder3_forward.1} parent=1 // pred_check
      _
    $region31: #{conv_decoder3_forward.1} parent=1 // pred_check_branch
      %85 = sbr.rel (0) target = $region33
    $region32: #{conv_decoder3_forward.1} parent=1 // pred_region
      %86 = dma.done [#allocation4], 6144
    $region33: #{conv_decoder3_forward.1} parent=1 // pred_fallthru
      _
    // Predicated region
    $region34: #{conv_decoder3_forward.1} parent=1 // pred_check
      _
    $region35: #{conv_decoder3_forward.1} parent=1 // pred_check_branch
      %88 = sbr.rel (0) target = $region37
    $region36: #{conv_decoder3_forward.1} parent=1 // pred_region
      %89 = dma.done [#allocation6], 192
    $region37: #{conv_decoder3_forward.1} parent=1 // pred_fallthru
      _
    // Predicated region
    $region38: #{conv_decoder3_forward.1} parent=1 // pred_check
      _
    $region39: #{conv_decoder3_forward.1} parent=1 // pred_check_branch
      %91 = sbr.rel (0) target = $region41
    $region40: #{conv_decoder3_forward.1} parent=1 // pred_region
      %92 = dma.done [#allocation6], 16384
    $region41: #{conv_decoder3_forward.1} parent=1 // pred_fallthru
      _
    // Predicated region
    $region42: #{conv_decoder3_forward.1} parent=1 // pred_check
      _
    $region43: #{conv_decoder3_forward.1} parent=1 // pred_check_branch
      %94 = sbr.rel (0) target = $region45
    $region44: #{conv_decoder3_forward.1} parent=1 // pred_region
      %95 = dma.done [#allocation9], 256
    $region45: #{conv_decoder3_forward.1} parent=1 // pred_fallthru
      _
    // Predicated region
    $region46: #{conv_decoder3_forward.1} parent=1 // pred_check
      _
    $region47: #{conv_decoder3_forward.1} parent=1 // pred_check_branch
      %97 = sbr.rel (0) target = $region49
    $region48: #{conv_decoder3_forward.1} parent=1 // pred_region
      %98 = dma.done [#allocation9], 1024
    $region49: #{conv_decoder3_forward.1} parent=1 // pred_fallthru
      _
    // Predicated region
    $region50: #{conv_decoder3_forward.1} parent=1 // pred_check
      _
    $region51: #{conv_decoder3_forward.1} parent=1 // pred_check_branch
      %100 = sbr.rel (0) target = $region53
    $region52: #{conv_decoder3_forward.1} parent=1 // pred_region
      %101 = dma.done [#allocation12], 16
    $region53: #{conv_decoder3_forward.1} parent=1 // pred_fallthru
      _
    %v103 = vld [vmem:[%s0] sm:$0xf]
    %v104 = vld [vmem:[#allocation3] sm:$0xf]
    %v105 = vld [vmem:[#allocation3 + $0x30] sm:$0xf]
    %v106 = vld [vmem:[#allocation3 + $0x60] sm:$0xf]
    %v107 = vld [vmem:[#allocation3 + $0x90] sm:$0xf]
    %v108 = vld [vmem:[#allocation3 + $0xc0] sm:$0xf]
    %v109 = vld [vmem:[#allocation3 + $0xf0] sm:$0xf]
    %v110 = vld [vmem:[#allocation3 + $0x120] sm:$0xf]
    %v111 = vld [vmem:[#allocation3 + $0x150] sm:$0xf]
    %v112 = vld [vmem:[#allocation5] sm:$0x1]
    %v114 = vlaneseq
    %v115 = vshrl.u32 %v114, 7
    %v116 = vsub.s32 0, %v115
    %v117 = vrot.slane %v112, %v116
    %v127 = vunpack.c.l.b16 %v104
    %v128 = vunpack.c.l.b16 %v105
    %v129 = vunpack.c.l.b16 %v106
    %v130 = vunpack.c.l.b16 %v107
    %v131 = vunpack.c.l.b16 %v108
    %v132 = vunpack.c.l.b16 %v109
    %v133 = vunpack.c.l.b16 %v110
    %v134 = vunpack.c.l.b16 %v111
    %v135 = vpack.c.b16 %v128, %v127
    %v136 = vpack.c.b16 %v130, %v129
    %v137 = vpack.c.b16 %v132, %v131
    %v138 = vpack.c.b16 %v134, %v133
    %vm143 = vcmask 523264
    %v145 = vsel %vm143, %v103, 0
    %147 = vmatprep.subr.bf16.mxu0 0
    %148 = vmatpush1.bf16.msra.mxu0 0
    %149 = vmatprep.subr.bf16.mxu0 0
    %150 = vmatpush1.bf16.msra.mxu0 0
    %151 = vmatprep.subr.bf16.mxu0 0
    %152 = vmatpush1.bf16.msra.mxu0 0
    %153 = vmatprep.subr.bf16.mxu0 0
    %154 = vmatpush1.bf16.msra.mxu0 0
    %155 = vmatprep.subr.bf16.mxu0 0
    %156 = vmatpush1.bf16.msra.mxu0 %v138
    %157 = vmatprep.subr.bf16.mxu0 0
    %158 = vmatpush1.bf16.msra.mxu0 %v137
    %159 = vmatprep.subr.bf16.mxu0 0
    %160 = vmatpush1.bf16.msra.mxu0 %v136
    %161 = vmatprep.subr.bf16.mxu0 0
    %162 = vmatpush1.bf16.msra.mxu0 %v135
    %163 = vmatprep.subr.bf16.mxu0 0
    %164 = vmatpush2.bf16.msra.mxu0 0
    %165 = vmatprep.subr.bf16.mxu0 0
    %166 = vmatpush2.bf16.msra.mxu0 0
    %167 = vmatprep.subr.bf16.mxu0 0
    %168 = vmatpush2.bf16.msra.mxu0 0
    %169 = vmatprep.subr.bf16.mxu0 0
    %170 = vmatpush2.bf16.msra.mxu0 0
    %171 = vmatprep.subr.bf16.mxu0 0
    %172 = vmatpush2.bf16.msra.mxu0 0
    %173 = vmatprep.subr.bf16.mxu0 0
    %174 = vmatpush2.bf16.msra.mxu0 0
    %175 = vmatprep.subr.bf16.mxu0 0
    %176 = vmatpush2.bf16.msra.mxu0 0
    %177 = vmatprep.subr.bf16.mxu0 0
    %178 = vmatpush2.bf16.msra.mxu0 0
    %179 = vmatprep.mubr.bf16.mxu0 0
    %180 = vmatmul.mubr.bf16.gmra.mxu0 %v145
    %v181 = vpop.f32.mrf.mxu0
    %v182 = vadd.f32 %v117, %v181
    %v183 = vpop.f32.mrf.mxu0
    %v184 = vpop.f32.mrf.mxu0
    %v185 = vpop.f32.mrf.mxu0
    %186 = vdwg.mxu0
    %v187 = vmax.f32 %v182, 0.0
    %188 = vst [vmem:[#allocation2] sm:$0xff] %v187
    %v189 = vld [vmem:[#allocation3 + $0x4] sm:$0xf]
    %v190 = vld [vmem:[#allocation3 + $0x34] sm:$0xf]
    %v191 = vld [vmem:[#allocation3 + $0x64] sm:$0xf]
    %v192 = vld [vmem:[#allocation3 + $0x94] sm:$0xf]
    %v193 = vld [vmem:[#allocation3 + $0xc4] sm:$0xf]
    %v194 = vld [vmem:[#allocation3 + $0xf4] sm:$0xf]
    %v195 = vld [vmem:[#allocation3 + $0x124] sm:$0xf]
    %v196 = vld [vmem:[#allocation3 + $0x154] sm:$0xf]
    %v197 = vld [vmem:[#allocation5 + $0x1] sm:$0x1]
    %v199 = vlaneseq
    %v200 = vshrl.u32 %v199, 7
    %v201 = vsub.s32 0, %v200
    %v202 = vrot.slane %v197, %v201
    %v212 = vunpack.c.l.b16 %v189
    %v213 = vunpack.c.l.b16 %v190
    %v214 = vunpack.c.l.b16 %v191
    %v215 = vunpack.c.l.b16 %v192
    %v216 = vunpack.c.l.b16 %v193
    %v217 = vunpack.c.l.b16 %v194
    %v218 = vunpack.c.l.b16 %v195
    %v219 = vunpack.c.l.b16 %v196
    %v220 = vpack.c.b16 %v213, %v212
    %v221 = vpack.c.b16 %v215, %v214
    %v222 = vpack.c.b16 %v217, %v216
    %v223 = vpack.c.b16 %v219, %v218
    %228 = vmatprep.subr.bf16.mxu0 0
    %229 = vmatpush1.bf16.msra.mxu0 0
    %230 = vmatprep.subr.bf16.mxu0 0
    %231 = vmatpush1.bf16.msra.mxu0 0
    %232 = vmatprep.subr.bf16.mxu0 0
    %233 = vmatpush1.bf16.msra.mxu0 0
    %234 = vmatprep.subr.bf16.mxu0 0
    %235 = vmatpush1.bf16.msra.mxu0 0
    %236 = vmatprep.subr.bf16.mxu0 0
    %237 = vmatpush1.bf16.msra.mxu0 %v223
    %238 = vmatprep.subr.bf16.mxu0 0
    %239 = vmatpush1.bf16.msra.mxu0 %v222
    %240 = vmatprep.subr.bf16.mxu0 0
    %241 = vmatpush1.bf16.msra.mxu0 %v221
    %242 = vmatprep.subr.bf16.mxu0 0
    %243 = vmatpush1.bf16.msra.mxu0 %v220
    %244 = vmatprep.subr.bf16.mxu0 0
    %245 = vmatpush2.bf16.msra.mxu0 0
    %246 = vmatprep.subr.bf16.mxu0 0
    %247 = vmatpush2.bf16.msra.mxu0 0
    %248 = vmatprep.subr.bf16.mxu0 0
    %249 = vmatpush2.bf16.msra.mxu0 0
    %250 = vmatprep.subr.bf16.mxu0 0
    %251 = vmatpush2.bf16.msra.mxu0 0
    %252 = vmatprep.subr.bf16.mxu0 0
    %253 = vmatpush2.bf16.msra.mxu0 0
    %254 = vmatprep.subr.bf16.mxu0 0
    %255 = vmatpush2.bf16.msra.mxu0 0
    %256 = vmatprep.subr.bf16.mxu0 0
    %257 = vmatpush2.bf16.msra.mxu0 0
    %258 = vmatprep.subr.bf16.mxu0 0
    %259 = vmatpush2.bf16.msra.mxu0 0
    %260 = vmatprep.mubr.bf16.mxu0 0
    %261 = vmatmul.mubr.bf16.gmra.mxu0 %v145
    %v262 = vpop.f32.mrf.mxu0
    %v263 = vadd.f32 %v202, %v262
    %v264 = vpop.f32.mrf.mxu0
    %v265 = vpop.f32.mrf.mxu0
    %v266 = vpop.f32.mrf.mxu0
    %267 = vdwg.mxu0
    %v268 = vmax.f32 %v263, 0.0
    %269 = vst [vmem:[#allocation2 + $0x8] sm:$0xff] %v268
    %v270 = vld [vmem:[#allocation3 + $0x8] sm:$0xf]
    %v271 = vld [vmem:[#allocation3 + $0x38] sm:$0xf]
    %v272 = vld [vmem:[#allocation3 + $0x68] sm:$0xf]
    %v273 = vld [vmem:[#allocation3 + $0x98] sm:$0xf]
    %v274 = vld [vmem:[#allocation3 + $0xc8] sm:$0xf]
    %v275 = vld [vmem:[#allocation3 + $0xf8] sm:$0xf]
    %v276 = vld [vmem:[#allocation3 + $0x128] sm:$0xf]
    %v277 = vld [vmem:[#allocation3 + $0x158] sm:$0xf]
    %v278 = vld [vmem:[#allocation5 + $0x2] sm:$0x1]
    %v280 = vlaneseq
    %v281 = vshrl.u32 %v280, 7
    %v282 = vsub.s32 0, %v281
    %v283 = vrot.slane %v278, %v282
    %v293 = vunpack.c.l.b16 %v270
    %v294 = vunpack.c.l.b16 %v271
    %v295 = vunpack.c.l.b16 %v272
    %v296 = vunpack.c.l.b16 %v273
    %v297 = vunpack.c.l.b16 %v274
    %v298 = vunpack.c.l.b16 %v275
    %v299 = vunpack.c.l.b16 %v276
    %v300 = vunpack.c.l.b16 %v277
    %v301 = vpack.c.b16 %v294, %v293
    %v302 = vpack.c.b16 %v296, %v295
    %v303 = vpack.c.b16 %v298, %v297
    %v304 = vpack.c.b16 %v300, %v299
    %309 = vmatprep.subr.bf16.mxu0 0
    %310 = vmatpush1.bf16.msra.mxu0 0
    %311 = vmatprep.subr.bf16.mxu0 0
    %312 = vmatpush1.bf16.msra.mxu0 0
    %313 = vmatprep.subr.bf16.mxu0 0
    %314 = vmatpush1.bf16.msra.mxu0 0
    %315 = vmatprep.subr.bf16.mxu0 0
    %316 = vmatpush1.bf16.msra.mxu0 0
    %317 = vmatprep.subr.bf16.mxu0 0
    %318 = vmatpush1.bf16.msra.mxu0 %v304
    %319 = vmatprep.subr.bf16.mxu0 0
    %320 = vmatpush1.bf16.msra.mxu0 %v303
    %321 = vmatprep.subr.bf16.mxu0 0
    %322 = vmatpush1.bf16.msra.mxu0 %v302
    %323 = vmatprep.subr.bf16.mxu0 0
    %324 = vmatpush1.bf16.msra.mxu0 %v301
    %325 = vmatprep.subr.bf16.mxu0 0
    %326 = vmatpush2.bf16.msra.mxu0 0
    %327 = vmatprep.subr.bf16.mxu0 0
    %328 = vmatpush2.bf16.msra.mxu0 0
    %329 = vmatprep.subr.bf16.mxu0 0
    %330 = vmatpush2.bf16.msra.mxu0 0
    %331 = vmatprep.subr.bf16.mxu0 0
    %332 = vmatpush2.bf16.msra.mxu0 0
    %333 = vmatprep.subr.bf16.mxu0 0
    %334 = vmatpush2.bf16.msra.mxu0 0
    %335 = vmatprep.subr.bf16.mxu0 0
    %336 = vmatpush2.bf16.msra.mxu0 0
    %337 = vmatprep.subr.bf16.mxu0 0
    %338 = vmatpush2.bf16.msra.mxu0 0
    %339 = vmatprep.subr.bf16.mxu0 0
    %340 = vmatpush2.bf16.msra.mxu0 0
    %341 = vmatprep.mubr.bf16.mxu0 0
    %342 = vmatmul.mubr.bf16.gmra.mxu0 %v145
    %v343 = vpop.f32.mrf.mxu0
    %v344 = vadd.f32 %v283, %v343
    %v345 = vpop.f32.mrf.mxu0
    %v346 = vpop.f32.mrf.mxu0
    %v347 = vpop.f32.mrf.mxu0
    %348 = vdwg.mxu0
    %v349 = vmax.f32 %v344, 0.0
    %350 = vst [vmem:[#allocation2 + $0x10] sm:$0xff] %v349
    %v351 = vld [vmem:[#allocation3 + $0xc] sm:$0xf]
    %v352 = vld [vmem:[#allocation3 + $0x3c] sm:$0xf]
    %v353 = vld [vmem:[#allocation3 + $0x6c] sm:$0xf]
    %v354 = vld [vmem:[#allocation3 + $0x9c] sm:$0xf]
    %v355 = vld [vmem:[#allocation3 + $0xcc] sm:$0xf]
    %v356 = vld [vmem:[#allocation3 + $0xfc] sm:$0xf]
    %v357 = vld [vmem:[#allocation3 + $0x12c] sm:$0xf]
    %v358 = vld [vmem:[#allocation3 + $0x15c] sm:$0xf]
    %v359 = vld [vmem:[#allocation5 + $0x3] sm:$0x1]
    %v361 = vlaneseq
    %v362 = vshrl.u32 %v361, 7
    %v363 = vsub.s32 0, %v362
    %v364 = vrot.slane %v359, %v363
    %v374 = vunpack.c.l.b16 %v351
    %v375 = vunpack.c.l.b16 %v352
    %v376 = vunpack.c.l.b16 %v353
    %v377 = vunpack.c.l.b16 %v354
    %v378 = vunpack.c.l.b16 %v355
    %v379 = vunpack.c.l.b16 %v356
    %v380 = vunpack.c.l.b16 %v357
    %v381 = vunpack.c.l.b16 %v358
    %v382 = vpack.c.b16 %v375, %v374
    %v383 = vpack.c.b16 %v377, %v376
    %v384 = vpack.c.b16 %v379, %v378
    %v385 = vpack.c.b16 %v381, %v380
    %390 = vmatprep.subr.bf16.mxu0 0
    %391 = vmatpush1.bf16.msra.mxu0 0
    %392 = vmatprep.subr.bf16.mxu0 0
    %393 = vmatpush1.bf16.msra.mxu0 0
    %394 = vmatprep.subr.bf16.mxu0 0
    %395 = vmatpush1.bf16.msra.mxu0 0
    %396 = vmatprep.subr.bf16.mxu0 0
    %397 = vmatpush1.bf16.msra.mxu0 0
    %398 = vmatprep.subr.bf16.mxu0 0
    %399 = vmatpush1.bf16.msra.mxu0 %v385
    %400 = vmatprep.subr.bf16.mxu0 0
    %401 = vmatpush1.bf16.msra.mxu0 %v384
    %402 = vmatprep.subr.bf16.mxu0 0
    %403 = vmatpush1.bf16.msra.mxu0 %v383
    %404 = vmatprep.subr.bf16.mxu0 0
    %405 = vmatpush1.bf16.msra.mxu0 %v382
    %406 = vmatprep.subr.bf16.mxu0 0
    %407 = vmatpush2.bf16.msra.mxu0 0
    %408 = vmatprep.subr.bf16.mxu0 0
    %409 = vmatpush2.bf16.msra.mxu0 0
    %410 = vmatprep.subr.bf16.mxu0 0
    %411 = vmatpush2.bf16.msra.mxu0 0
    %412 = vmatprep.subr.bf16.mxu0 0
    %413 = vmatpush2.bf16.msra.mxu0 0
    %414 = vmatprep.subr.bf16.mxu0 0
    %415 = vmatpush2.bf16.msra.mxu0 0
    %416 = vmatprep.subr.bf16.mxu0 0
    %417 = vmatpush2.bf16.msra.mxu0 0
    %418 = vmatprep.subr.bf16.mxu0 0
    %419 = vmatpush2.bf16.msra.mxu0 0
    %420 = vmatprep.subr.bf16.mxu0 0
    %421 = vmatpush2.bf16.msra.mxu0 0
    %422 = vmatprep.mubr.bf16.mxu0 0
    %423 = vmatmul.mubr.bf16.gmra.mxu0 %v145
    %v424 = vpop.f32.mrf.mxu0
    %v425 = vadd.f32 %v364, %v424
    %v426 = vpop.f32.mrf.mxu0
    %v427 = vpop.f32.mrf.mxu0
    %v428 = vpop.f32.mrf.mxu0
    %429 = vdwg.mxu0
    %v430 = vmax.f32 %v425, 0.0
    %431 = vst [vmem:[#allocation2 + $0x18] sm:$0xff] %v430
    %v432 = vld [vmem:[#allocation3 + $0x10] sm:$0xf]
    %v433 = vld [vmem:[#allocation3 + $0x40] sm:$0xf]
    %v434 = vld [vmem:[#allocation3 + $0x70] sm:$0xf]
    %v435 = vld [vmem:[#allocation3 + $0xa0] sm:$0xf]
    %v436 = vld [vmem:[#allocation3 + $0xd0] sm:$0xf]
    %v437 = vld [vmem:[#allocation3 + $0x100] sm:$0xf]
    %v438 = vld [vmem:[#allocation3 + $0x130] sm:$0xf]
    %v439 = vld [vmem:[#allocation3 + $0x160] sm:$0xf]
    %v440 = vld [vmem:[#allocation5 + $0x4] sm:$0x1]
    %v442 = vlaneseq
    %v443 = vshrl.u32 %v442, 7
    %v444 = vsub.s32 0, %v443
    %v445 = vrot.slane %v440, %v444
    %v455 = vunpack.c.l.b16 %v432
    %v456 = vunpack.c.l.b16 %v433
    %v457 = vunpack.c.l.b16 %v434
    %v458 = vunpack.c.l.b16 %v435
    %v459 = vunpack.c.l.b16 %v436
    %v460 = vunpack.c.l.b16 %v437
    %v461 = vunpack.c.l.b16 %v438
    %v462 = vunpack.c.l.b16 %v439
    %v463 = vpack.c.b16 %v456, %v455
    %v464 = vpack.c.b16 %v458, %v457
    %v465 = vpack.c.b16 %v460, %v459
    %v466 = vpack.c.b16 %v462, %v461
    %471 = vmatprep.subr.bf16.mxu0 0
    %472 = vmatpush1.bf16.msra.mxu0 0
    %473 = vmatprep.subr.bf16.mxu0 0
    %474 = vmatpush1.bf16.msra.mxu0 0
    %475 = vmatprep.subr.bf16.mxu0 0
    %476 = vmatpush1.bf16.msra.mxu0 0
    %477 = vmatprep.subr.bf16.mxu0 0
    %478 = vmatpush1.bf16.msra.mxu0 0
    %479 = vmatprep.subr.bf16.mxu0 0
    %480 = vmatpush1.bf16.msra.mxu0 %v466
    %481 = vmatprep.subr.bf16.mxu0 0
    %482 = vmatpush1.bf16.msra.mxu0 %v465
    %483 = vmatprep.subr.bf16.mxu0 0
    %484 = vmatpush1.bf16.msra.mxu0 %v464
    %485 = vmatprep.subr.bf16.mxu0 0
    %486 = vmatpush1.bf16.msra.mxu0 %v463
    %487 = vmatprep.subr.bf16.mxu0 0
    %488 = vmatpush2.bf16.msra.mxu0 0
    %489 = vmatprep.subr.bf16.mxu0 0
    %490 = vmatpush2.bf16.msra.mxu0 0
    %491 = vmatprep.subr.bf16.mxu0 0
    %492 = vmatpush2.bf16.msra.mxu0 0
    %493 = vmatprep.subr.bf16.mxu0 0
    %494 = vmatpush2.bf16.msra.mxu0 0
    %495 = vmatprep.subr.bf16.mxu0 0
    %496 = vmatpush2.bf16.msra.mxu0 0
    %497 = vmatprep.subr.bf16.mxu0 0
    %498 = vmatpush2.bf16.msra.mxu0 0
    %499 = vmatprep.subr.bf16.mxu0 0
    %500 = vmatpush2.bf16.msra.mxu0 0
    %501 = vmatprep.subr.bf16.mxu0 0
    %502 = vmatpush2.bf16.msra.mxu0 0
    %503 = vmatprep.mubr.bf16.mxu0 0
    %504 = vmatmul.mubr.bf16.gmra.mxu0 %v145
    %v505 = vpop.f32.mrf.mxu0
    %v506 = vadd.f32 %v445, %v505
    %v507 = vpop.f32.mrf.mxu0
    %v508 = vpop.f32.mrf.mxu0
    %v509 = vpop.f32.mrf.mxu0
    %510 = vdwg.mxu0
    %v511 = vmax.f32 %v506, 0.0
    %512 = vst [vmem:[#allocation2 + $0x20] sm:$0xff] %v511
    %v513 = vld [vmem:[#allocation3 + $0x14] sm:$0xf]
    %v514 = vld [vmem:[#allocation3 + $0x44] sm:$0xf]
    %v515 = vld [vmem:[#allocation3 + $0x74] sm:$0xf]
    %v516 = vld [vmem:[#allocation3 + $0xa4] sm:$0xf]
    %v517 = vld [vmem:[#allocation3 + $0xd4] sm:$0xf]
    %v518 = vld [vmem:[#allocation3 + $0x104] sm:$0xf]
    %v519 = vld [vmem:[#allocation3 + $0x134] sm:$0xf]
    %v520 = vld [vmem:[#allocation3 + $0x164] sm:$0xf]
    %v521 = vld [vmem:[#allocation5 + $0x5] sm:$0x1]
    %v523 = vlaneseq
    %v524 = vshrl.u32 %v523, 7
    %v525 = vsub.s32 0, %v524
    %v526 = vrot.slane %v521, %v525
    %v536 = vunpack.c.l.b16 %v513
    %v537 = vunpack.c.l.b16 %v514
    %v538 = vunpack.c.l.b16 %v515
    %v539 = vunpack.c.l.b16 %v516
    %v540 = vunpack.c.l.b16 %v517
    %v541 = vunpack.c.l.b16 %v518
    %v542 = vunpack.c.l.b16 %v519
    %v543 = vunpack.c.l.b16 %v520
    %v544 = vpack.c.b16 %v537, %v536
    %v545 = vpack.c.b16 %v539, %v538
    %v546 = vpack.c.b16 %v541, %v540
    %v547 = vpack.c.b16 %v543, %v542
    %552 = vmatprep.subr.bf16.mxu0 0
    %553 = vmatpush1.bf16.msra.mxu0 0
    %554 = vmatprep.subr.bf16.mxu0 0
    %555 = vmatpush1.bf16.msra.mxu0 0
    %556 = vmatprep.subr.bf16.mxu0 0
    %557 = vmatpush1.bf16.msra.mxu0 0
    %558 = vmatprep.subr.bf16.mxu0 0
    %559 = vmatpush1.bf16.msra.mxu0 0
    %560 = vmatprep.subr.bf16.mxu0 0
    %561 = vmatpush1.bf16.msra.mxu0 %v547
    %562 = vmatprep.subr.bf16.mxu0 0
    %563 = vmatpush1.bf16.msra.mxu0 %v546
    %564 = vmatprep.subr.bf16.mxu0 0
    %565 = vmatpush1.bf16.msra.mxu0 %v545
    %566 = vmatprep.subr.bf16.mxu0 0
    %567 = vmatpush1.bf16.msra.mxu0 %v544
    %568 = vmatprep.subr.bf16.mxu0 0
    %569 = vmatpush2.bf16.msra.mxu0 0
    %570 = vmatprep.subr.bf16.mxu0 0
    %571 = vmatpush2.bf16.msra.mxu0 0
    %572 = vmatprep.subr.bf16.mxu0 0
    %573 = vmatpush2.bf16.msra.mxu0 0
    %574 = vmatprep.subr.bf16.mxu0 0
    %575 = vmatpush2.bf16.msra.mxu0 0
    %576 = vmatprep.subr.bf16.mxu0 0
    %577 = vmatpush2.bf16.msra.mxu0 0
    %578 = vmatprep.subr.bf16.mxu0 0
    %579 = vmatpush2.bf16.msra.mxu0 0
    %580 = vmatprep.subr.bf16.mxu0 0
    %581 = vmatpush2.bf16.msra.mxu0 0
    %582 = vmatprep.subr.bf16.mxu0 0
    %583 = vmatpush2.bf16.msra.mxu0 0
    %584 = vmatprep.mubr.bf16.mxu0 0
    %585 = vmatmul.mubr.bf16.gmra.mxu0 %v145
    %v586 = vpop.f32.mrf.mxu0
    %v587 = vadd.f32 %v526, %v586
    %v588 = vpop.f32.mrf.mxu0
    %v589 = vpop.f32.mrf.mxu0
    %v590 = vpop.f32.mrf.mxu0
    %591 = vdwg.mxu0
    %v592 = vmax.f32 %v587, 0.0
    %593 = vst [vmem:[#allocation2 + $0x28] sm:$0xff] %v592
    %v594 = vld [vmem:[#allocation3 + $0x18] sm:$0xf]
    %v595 = vld [vmem:[#allocation3 + $0x48] sm:$0xf]
    %v596 = vld [vmem:[#allocation3 + $0x78] sm:$0xf]
    %v597 = vld [vmem:[#allocation3 + $0xa8] sm:$0xf]
    %v598 = vld [vmem:[#allocation3 + $0xd8] sm:$0xf]
    %v599 = vld [vmem:[#allocation3 + $0x108] sm:$0xf]
    %v600 = vld [vmem:[#allocation3 + $0x138] sm:$0xf]
    %v601 = vld [vmem:[#allocation3 + $0x168] sm:$0xf]
    %v602 = vld [vmem:[#allocation5 + $0x6] sm:$0x1]
    %v604 = vlaneseq
    %v605 = vshrl.u32 %v604, 7
    %v606 = vsub.s32 0, %v605
    %v607 = vrot.slane %v602, %v606
    %v617 = vunpack.c.l.b16 %v594
    %v618 = vunpack.c.l.b16 %v595
    %v619 = vunpack.c.l.b16 %v596
    %v620 = vunpack.c.l.b16 %v597
    %v621 = vunpack.c.l.b16 %v598
    %v622 = vunpack.c.l.b16 %v599
    %v623 = vunpack.c.l.b16 %v600
    %v624 = vunpack.c.l.b16 %v601
    %v625 = vpack.c.b16 %v618, %v617
    %v626 = vpack.c.b16 %v620, %v619
    %v627 = vpack.c.b16 %v622, %v621
    %v628 = vpack.c.b16 %v624, %v623
    %633 = vmatprep.subr.bf16.mxu0 0
    %634 = vmatpush1.bf16.msra.mxu0 0
    %635 = vmatprep.subr.bf16.mxu0 0
    %636 = vmatpush1.bf16.msra.mxu0 0
    %637 = vmatprep.subr.bf16.mxu0 0
    %638 = vmatpush1.bf16.msra.mxu0 0
    %639 = vmatprep.subr.bf16.mxu0 0
    %640 = vmatpush1.bf16.msra.mxu0 0
    %641 = vmatprep.subr.bf16.mxu0 0
    %642 = vmatpush1.bf16.msra.mxu0 %v628
    %643 = vmatprep.subr.bf16.mxu0 0
    %644 = vmatpush1.bf16.msra.mxu0 %v627
    %645 = vmatprep.subr.bf16.mxu0 0
    %646 = vmatpush1.bf16.msra.mxu0 %v626
    %647 = vmatprep.subr.bf16.mxu0 0
    %648 = vmatpush1.bf16.msra.mxu0 %v625
    %649 = vmatprep.subr.bf16.mxu0 0
    %650 = vmatpush2.bf16.msra.mxu0 0
    %651 = vmatprep.subr.bf16.mxu0 0
    %652 = vmatpush2.bf16.msra.mxu0 0
    %653 = vmatprep.subr.bf16.mxu0 0
    %654 = vmatpush2.bf16.msra.mxu0 0
    %655 = vmatprep.subr.bf16.mxu0 0
    %656 = vmatpush2.bf16.msra.mxu0 0
    %657 = vmatprep.subr.bf16.mxu0 0
    %658 = vmatpush2.bf16.msra.mxu0 0
    %659 = vmatprep.subr.bf16.mxu0 0
    %660 = vmatpush2.bf16.msra.mxu0 0
    %661 = vmatprep.subr.bf16.mxu0 0
    %662 = vmatpush2.bf16.msra.mxu0 0
    %663 = vmatprep.subr.bf16.mxu0 0
    %664 = vmatpush2.bf16.msra.mxu0 0
    %665 = vmatprep.mubr.bf16.mxu0 0
    %666 = vmatmul.mubr.bf16.gmra.mxu0 %v145
    %v667 = vpop.f32.mrf.mxu0
    %v668 = vadd.f32 %v607, %v667
    %v669 = vpop.f32.mrf.mxu0
    %v670 = vpop.f32.mrf.mxu0
    %v671 = vpop.f32.mrf.mxu0
    %672 = vdwg.mxu0
    %v673 = vmax.f32 %v668, 0.0
    %674 = vst [vmem:[#allocation2 + $0x30] sm:$0xff] %v673
    %v675 = vld [vmem:[#allocation3 + $0x1c] sm:$0xf]
    %v676 = vld [vmem:[#allocation3 + $0x4c] sm:$0xf]
    %v677 = vld [vmem:[#allocation3 + $0x7c] sm:$0xf]
    %v678 = vld [vmem:[#allocation3 + $0xac] sm:$0xf]
    %v679 = vld [vmem:[#allocation3 + $0xdc] sm:$0xf]
    %v680 = vld [vmem:[#allocation3 + $0x10c] sm:$0xf]
    %v681 = vld [vmem:[#allocation3 + $0x13c] sm:$0xf]
    %v682 = vld [vmem:[#allocation3 + $0x16c] sm:$0xf]
    %v683 = vld [vmem:[#allocation5 + $0x7] sm:$0x1]
    %v685 = vlaneseq
    %v686 = vshrl.u32 %v685, 7
    %v687 = vsub.s32 0, %v686
    %v688 = vrot.slane %v683, %v687
    %v698 = vunpack.c.l.b16 %v675
    %v699 = vunpack.c.l.b16 %v676
    %v700 = vunpack.c.l.b16 %v677
    %v701 = vunpack.c.l.b16 %v678
    %v702 = vunpack.c.l.b16 %v679
    %v703 = vunpack.c.l.b16 %v680
    %v704 = vunpack.c.l.b16 %v681
    %v705 = vunpack.c.l.b16 %v682
    %v706 = vpack.c.b16 %v699, %v698
    %v707 = vpack.c.b16 %v701, %v700
    %v708 = vpack.c.b16 %v703, %v702
    %v709 = vpack.c.b16 %v705, %v704
    %714 = vmatprep.subr.bf16.mxu0 0
    %715 = vmatpush1.bf16.msra.mxu0 0
    %716 = vmatprep.subr.bf16.mxu0 0
    %717 = vmatpush1.bf16.msra.mxu0 0
    %718 = vmatprep.subr.bf16.mxu0 0
    %719 = vmatpush1.bf16.msra.mxu0 0
    %720 = vmatprep.subr.bf16.mxu0 0
    %721 = vmatpush1.bf16.msra.mxu0 0
    %722 = vmatprep.subr.bf16.mxu0 0
    %723 = vmatpush1.bf16.msra.mxu0 %v709
    %724 = vmatprep.subr.bf16.mxu0 0
    %725 = vmatpush1.bf16.msra.mxu0 %v708
    %726 = vmatprep.subr.bf16.mxu0 0
    %727 = vmatpush1.bf16.msra.mxu0 %v707
    %728 = vmatprep.subr.bf16.mxu0 0
    %729 = vmatpush1.bf16.msra.mxu0 %v706
    %730 = vmatprep.subr.bf16.mxu0 0
    %731 = vmatpush2.bf16.msra.mxu0 0
    %732 = vmatprep.subr.bf16.mxu0 0
    %733 = vmatpush2.bf16.msra.mxu0 0
    %734 = vmatprep.subr.bf16.mxu0 0
    %735 = vmatpush2.bf16.msra.mxu0 0
    %736 = vmatprep.subr.bf16.mxu0 0
    %737 = vmatpush2.bf16.msra.mxu0 0
    %738 = vmatprep.subr.bf16.mxu0 0
    %739 = vmatpush2.bf16.msra.mxu0 0
    %740 = vmatprep.subr.bf16.mxu0 0
    %741 = vmatpush2.bf16.msra.mxu0 0
    %742 = vmatprep.subr.bf16.mxu0 0
    %743 = vmatpush2.bf16.msra.mxu0 0
    %744 = vmatprep.subr.bf16.mxu0 0
    %745 = vmatpush2.bf16.msra.mxu0 0
    %746 = vmatprep.mubr.bf16.mxu0 0
    %747 = vmatmul.mubr.bf16.gmra.mxu0 %v145
    %v748 = vpop.f32.mrf.mxu0
    %v749 = vadd.f32 %v688, %v748
    %v750 = vpop.f32.mrf.mxu0
    %v751 = vpop.f32.mrf.mxu0
    %v752 = vpop.f32.mrf.mxu0
    %753 = vdwg.mxu0
    %v754 = vmax.f32 %v749, 0.0
    %755 = vst [vmem:[#allocation2 + $0x38] sm:$0xff] %v754
    %v756 = vld [vmem:[#allocation3 + $0x20] sm:$0xf]
    %v757 = vld [vmem:[#allocation3 + $0x50] sm:$0xf]
    %v758 = vld [vmem:[#allocation3 + $0x80] sm:$0xf]
    %v759 = vld [vmem:[#allocation3 + $0xb0] sm:$0xf]
    %v760 = vld [vmem:[#allocation3 + $0xe0] sm:$0xf]
    %v761 = vld [vmem:[#allocation3 + $0x110] sm:$0xf]
    %v762 = vld [vmem:[#allocation3 + $0x140] sm:$0xf]
    %v763 = vld [vmem:[#allocation3 + $0x170] sm:$0xf]
    %v764 = vld [vmem:[#allocation5 + $0x8] sm:$0x1]
    %v766 = vlaneseq
    %v767 = vshrl.u32 %v766, 7
    %v768 = vsub.s32 0, %v767
    %v769 = vrot.slane %v764, %v768
    %v779 = vunpack.c.l.b16 %v756
    %v780 = vunpack.c.l.b16 %v757
    %v781 = vunpack.c.l.b16 %v758
    %v782 = vunpack.c.l.b16 %v759
    %v783 = vunpack.c.l.b16 %v760
    %v784 = vunpack.c.l.b16 %v761
    %v785 = vunpack.c.l.b16 %v762
    %v786 = vunpack.c.l.b16 %v763
    %v787 = vpack.c.b16 %v780, %v779
    %v788 = vpack.c.b16 %v782, %v781
    %v789 = vpack.c.b16 %v784, %v783
    %v790 = vpack.c.b16 %v786, %v785
    %795 = vmatprep.subr.bf16.mxu0 0
    %796 = vmatpush1.bf16.msra.mxu0 0
    %797 = vmatprep.subr.bf16.mxu0 0
    %798 = vmatpush1.bf16.msra.mxu0 0
    %799 = vmatprep.subr.bf16.mxu0 0
    %800 = vmatpush1.bf16.msra.mxu0 0
    %801 = vmatprep.subr.bf16.mxu0 0
    %802 = vmatpush1.bf16.msra.mxu0 0
    %803 = vmatprep.subr.bf16.mxu0 0
    %804 = vmatpush1.bf16.msra.mxu0 %v790
    %805 = vmatprep.subr.bf16.mxu0 0
    %806 = vmatpush1.bf16.msra.mxu0 %v789
    %807 = vmatprep.subr.bf16.mxu0 0
    %808 = vmatpush1.bf16.msra.mxu0 %v788
    %809 = vmatprep.subr.bf16.mxu0 0
    %810 = vmatpush1.bf16.msra.mxu0 %v787
    %811 = vmatprep.subr.bf16.mxu0 0
    %812 = vmatpush2.bf16.msra.mxu0 0
    %813 = vmatprep.subr.bf16.mxu0 0
    %814 = vmatpush2.bf16.msra.mxu0 0
    %815 = vmatprep.subr.bf16.mxu0 0
    %816 = vmatpush2.bf16.msra.mxu0 0
    %817 = vmatprep.subr.bf16.mxu0 0
    %818 = vmatpush2.bf16.msra.mxu0 0
    %819 = vmatprep.subr.bf16.mxu0 0
    %820 = vmatpush2.bf16.msra.mxu0 0
    %821 = vmatprep.subr.bf16.mxu0 0
    %822 = vmatpush2.bf16.msra.mxu0 0
    %823 = vmatprep.subr.bf16.mxu0 0
    %824 = vmatpush2.bf16.msra.mxu0 0
    %825 = vmatprep.subr.bf16.mxu0 0
    %826 = vmatpush2.bf16.msra.mxu0 0
    %827 = vmatprep.mubr.bf16.mxu0 0
    %828 = vmatmul.mubr.bf16.gmra.mxu0 %v145
    %v829 = vpop.f32.mrf.mxu0
    %v830 = vadd.f32 %v769, %v829
    %v831 = vpop.f32.mrf.mxu0
    %v832 = vpop.f32.mrf.mxu0
    %v833 = vpop.f32.mrf.mxu0
    %834 = vdwg.mxu0
    %v835 = vmax.f32 %v830, 0.0
    %836 = vst [vmem:[#allocation2 + $0x40] sm:$0xff] %v835
    %v837 = vld [vmem:[#allocation3 + $0x24] sm:$0xf]
    %v838 = vld [vmem:[#allocation3 + $0x54] sm:$0xf]
    %v839 = vld [vmem:[#allocation3 + $0x84] sm:$0xf]
    %v840 = vld [vmem:[#allocation3 + $0xb4] sm:$0xf]
    %v841 = vld [vmem:[#allocation3 + $0xe4] sm:$0xf]
    %v842 = vld [vmem:[#allocation3 + $0x114] sm:$0xf]
    %v843 = vld [vmem:[#allocation3 + $0x144] sm:$0xf]
    %v844 = vld [vmem:[#allocation3 + $0x174] sm:$0xf]
    %v845 = vld [vmem:[#allocation5 + $0x9] sm:$0x1]
    %v847 = vlaneseq
    %v848 = vshrl.u32 %v847, 7
    %v849 = vsub.s32 0, %v848
    %v850 = vrot.slane %v845, %v849
    %v860 = vunpack.c.l.b16 %v837
    %v861 = vunpack.c.l.b16 %v838
    %v862 = vunpack.c.l.b16 %v839
    %v863 = vunpack.c.l.b16 %v840
    %v864 = vunpack.c.l.b16 %v841
    %v865 = vunpack.c.l.b16 %v842
    %v866 = vunpack.c.l.b16 %v843
    %v867 = vunpack.c.l.b16 %v844
    %v868 = vpack.c.b16 %v861, %v860
    %v869 = vpack.c.b16 %v863, %v862
    %v870 = vpack.c.b16 %v865, %v864
    %v871 = vpack.c.b16 %v867, %v866
    %876 = vmatprep.subr.bf16.mxu0 0
    %877 = vmatpush1.bf16.msra.mxu0 0
    %878 = vmatprep.subr.bf16.mxu0 0
    %879 = vmatpush1.bf16.msra.mxu0 0
    %880 = vmatprep.subr.bf16.mxu0 0
    %881 = vmatpush1.bf16.msra.mxu0 0
    %882 = vmatprep.subr.bf16.mxu0 0
    %883 = vmatpush1.bf16.msra.mxu0 0
    %884 = vmatprep.subr.bf16.mxu0 0
    %885 = vmatpush1.bf16.msra.mxu0 %v871
    %886 = vmatprep.subr.bf16.mxu0 0
    %887 = vmatpush1.bf16.msra.mxu0 %v870
    %888 = vmatprep.subr.bf16.mxu0 0
    %889 = vmatpush1.bf16.msra.mxu0 %v869
    %890 = vmatprep.subr.bf16.mxu0 0
    %891 = vmatpush1.bf16.msra.mxu0 %v868
    %892 = vmatprep.subr.bf16.mxu0 0
    %893 = vmatpush2.bf16.msra.mxu0 0
    %894 = vmatprep.subr.bf16.mxu0 0
    %895 = vmatpush2.bf16.msra.mxu0 0
    %896 = vmatprep.subr.bf16.mxu0 0
    %897 = vmatpush2.bf16.msra.mxu0 0
    %898 = vmatprep.subr.bf16.mxu0 0
    %899 = vmatpush2.bf16.msra.mxu0 0
    %900 = vmatprep.subr.bf16.mxu0 0
    %901 = vmatpush2.bf16.msra.mxu0 0
    %902 = vmatprep.subr.bf16.mxu0 0
    %903 = vmatpush2.bf16.msra.mxu0 0
    %904 = vmatprep.subr.bf16.mxu0 0
    %905 = vmatpush2.bf16.msra.mxu0 0
    %906 = vmatprep.subr.bf16.mxu0 0
    %907 = vmatpush2.bf16.msra.mxu0 0
    %908 = vmatprep.mubr.bf16.mxu0 0
    %909 = vmatmul.mubr.bf16.gmra.mxu0 %v145
    %v910 = vpop.f32.mrf.mxu0
    %v911 = vadd.f32 %v850, %v910
    %v912 = vpop.f32.mrf.mxu0
    %v913 = vpop.f32.mrf.mxu0
    %v914 = vpop.f32.mrf.mxu0
    %915 = vdwg.mxu0
    %v916 = vmax.f32 %v911, 0.0
    %917 = vst [vmem:[#allocation2 + $0x48] sm:$0xff] %v916
    %v918 = vld [vmem:[#allocation3 + $0x28] sm:$0xf]
    %v919 = vld [vmem:[#allocation3 + $0x58] sm:$0xf]
    %v920 = vld [vmem:[#allocation3 + $0x88] sm:$0xf]
    %v921 = vld [vmem:[#allocation3 + $0xb8] sm:$0xf]
    %v922 = vld [vmem:[#allocation3 + $0xe8] sm:$0xf]
    %v923 = vld [vmem:[#allocation3 + $0x118] sm:$0xf]
    %v924 = vld [vmem:[#allocation3 + $0x148] sm:$0xf]
    %v925 = vld [vmem:[#allocation3 + $0x178] sm:$0xf]
    %v926 = vld [vmem:[#allocation5 + $0xa] sm:$0x1]
    %v928 = vlaneseq
    %v929 = vshrl.u32 %v928, 7
    %v930 = vsub.s32 0, %v929
    %v931 = vrot.slane %v926, %v930
    %v941 = vunpack.c.l.b16 %v918
    %v942 = vunpack.c.l.b16 %v919
    %v943 = vunpack.c.l.b16 %v920
    %v944 = vunpack.c.l.b16 %v921
    %v945 = vunpack.c.l.b16 %v922
    %v946 = vunpack.c.l.b16 %v923
    %v947 = vunpack.c.l.b16 %v924
    %v948 = vunpack.c.l.b16 %v925
    %v949 = vpack.c.b16 %v942, %v941
    %v950 = vpack.c.b16 %v944, %v943
    %v951 = vpack.c.b16 %v946, %v945
    %v952 = vpack.c.b16 %v948, %v947
    %957 = vmatprep.subr.bf16.mxu0 0
    %958 = vmatpush1.bf16.msra.mxu0 0
    %959 = vmatprep.subr.bf16.mxu0 0
    %960 = vmatpush1.bf16.msra.mxu0 0
    %961 = vmatprep.subr.bf16.mxu0 0
    %962 = vmatpush1.bf16.msra.mxu0 0
    %963 = vmatprep.subr.bf16.mxu0 0
    %964 = vmatpush1.bf16.msra.mxu0 0
    %965 = vmatprep.subr.bf16.mxu0 0
    %966 = vmatpush1.bf16.msra.mxu0 %v952
    %967 = vmatprep.subr.bf16.mxu0 0
    %968 = vmatpush1.bf16.msra.mxu0 %v951
    %969 = vmatprep.subr.bf16.mxu0 0
    %970 = vmatpush1.bf16.msra.mxu0 %v950
    %971 = vmatprep.subr.bf16.mxu0 0
    %972 = vmatpush1.bf16.msra.mxu0 %v949
    %973 = vmatprep.subr.bf16.mxu0 0
    %974 = vmatpush2.bf16.msra.mxu0 0
    %975 = vmatprep.subr.bf16.mxu0 0
    %976 = vmatpush2.bf16.msra.mxu0 0
    %977 = vmatprep.subr.bf16.mxu0 0
    %978 = vmatpush2.bf16.msra.mxu0 0
    %979 = vmatprep.subr.bf16.mxu0 0
    %980 = vmatpush2.bf16.msra.mxu0 0
    %981 = vmatprep.subr.bf16.mxu0 0
    %982 = vmatpush2.bf16.msra.mxu0 0
    %983 = vmatprep.subr.bf16.mxu0 0
    %984 = vmatpush2.bf16.msra.mxu0 0
    %985 = vmatprep.subr.bf16.mxu0 0
    %986 = vmatpush2.bf16.msra.mxu0 0
    %987 = vmatprep.subr.bf16.mxu0 0
    %988 = vmatpush2.bf16.msra.mxu0 0
    %989 = vmatprep.mubr.bf16.mxu0 0
    %990 = vmatmul.mubr.bf16.gmra.mxu0 %v145
    %v991 = vpop.f32.mrf.mxu0
    %v992 = vadd.f32 %v931, %v991
    %v993 = vpop.f32.mrf.mxu0
    %v994 = vpop.f32.mrf.mxu0
    %v995 = vpop.f32.mrf.mxu0
    %996 = vdwg.mxu0
    %v997 = vmax.f32 %v992, 0.0
    %998 = vst [vmem:[#allocation2 + $0x50] sm:$0xff] %v997
    %v999 = vld [vmem:[#allocation3 + $0x2c] sm:$0xf]
    %v1000 = vld [vmem:[#allocation3 + $0x5c] sm:$0xf]
    %v1001 = vld [vmem:[#allocation3 + $0x8c] sm:$0xf]
    %v1002 = vld [vmem:[#allocation3 + $0xbc] sm:$0xf]
    %v1003 = vld [vmem:[#allocation3 + $0xec] sm:$0xf]
    %v1004 = vld [vmem:[#allocation3 + $0x11c] sm:$0xf]
    %v1005 = vld [vmem:[#allocation3 + $0x14c] sm:$0xf]
    %v1006 = vld [vmem:[#allocation3 + $0x17c] sm:$0xf]
    %v1007 = vld [vmem:[#allocation5 + $0xb] sm:$0x1]
    %v1009 = vlaneseq
    %v1010 = vshrl.u32 %v1009, 7
    %v1011 = vsub.s32 0, %v1010
    %v1012 = vrot.slane %v1007, %v1011
    %v1022 = vunpack.c.l.b16 %v999
    %v1023 = vunpack.c.l.b16 %v1000
    %v1024 = vunpack.c.l.b16 %v1001
    %v1025 = vunpack.c.l.b16 %v1002
    %v1026 = vunpack.c.l.b16 %v1003
    %v1027 = vunpack.c.l.b16 %v1004
    %v1028 = vunpack.c.l.b16 %v1005
    %v1029 = vunpack.c.l.b16 %v1006
    %v1030 = vpack.c.b16 %v1023, %v1022
    %v1031 = vpack.c.b16 %v1025, %v1024
    %v1032 = vpack.c.b16 %v1027, %v1026
    %v1033 = vpack.c.b16 %v1029, %v1028
    %1038 = vmatprep.subr.bf16.mxu0 0
    %1039 = vmatpush1.bf16.msra.mxu0 0
    %1040 = vmatprep.subr.bf16.mxu0 0
    %1041 = vmatpush1.bf16.msra.mxu0 0
    %1042 = vmatprep.subr.bf16.mxu0 0
    %1043 = vmatpush1.bf16.msra.mxu0 0
    %1044 = vmatprep.subr.bf16.mxu0 0
    %1045 = vmatpush1.bf16.msra.mxu0 0
    %1046 = vmatprep.subr.bf16.mxu0 0
    %1047 = vmatpush1.bf16.msra.mxu0 %v1033
    %1048 = vmatprep.subr.bf16.mxu0 0
    %1049 = vmatpush1.bf16.msra.mxu0 %v1032
    %1050 = vmatprep.subr.bf16.mxu0 0
    %1051 = vmatpush1.bf16.msra.mxu0 %v1031
    %1052 = vmatprep.subr.bf16.mxu0 0
    %1053 = vmatpush1.bf16.msra.mxu0 %v1030
    %1054 = vmatprep.subr.bf16.mxu0 0
    %1055 = vmatpush2.bf16.msra.mxu0 0
    %1056 = vmatprep.subr.bf16.mxu0 0
    %1057 = vmatpush2.bf16.msra.mxu0 0
    %1058 = vmatprep.subr.bf16.mxu0 0
    %1059 = vmatpush2.bf16.msra.mxu0 0
    %1060 = vmatprep.subr.bf16.mxu0 0
    %1061 = vmatpush2.bf16.msra.mxu0 0
    %1062 = vmatprep.subr.bf16.mxu0 0
    %1063 = vmatpush2.bf16.msra.mxu0 0
    %1064 = vmatprep.subr.bf16.mxu0 0
    %1065 = vmatpush2.bf16.msra.mxu0 0
    %1066 = vmatprep.subr.bf16.mxu0 0
    %1067 = vmatpush2.bf16.msra.mxu0 0
    %1068 = vmatprep.subr.bf16.mxu0 0
    %1069 = vmatpush2.bf16.msra.mxu0 0
    %1070 = vmatprep.mubr.bf16.mxu0 0
    %1071 = vmatmul.mubr.bf16.gmra.mxu0 %v145
    %v1072 = vpop.f32.mrf.mxu0
    %v1073 = vadd.f32 %v1012, %v1072
    %v1074 = vpop.f32.mrf.mxu0
    %v1075 = vpop.f32.mrf.mxu0
    %v1076 = vpop.f32.mrf.mxu0
    %1077 = vdwg.mxu0
    %v1078 = vmax.f32 %v1073, 0.0
    %1079 = vst [vmem:[#allocation2 + $0x58] sm:$0xff] %v1078
    %v1080 = vld [vmem:[#allocation2] sm:$0xff]
    %v1081 = vld [vmem:[#allocation2 + $0x8] sm:$0xff]
    %v1082 = vld [vmem:[#allocation2 + $0x10] sm:$0xff]
    %v1083 = vld [vmem:[#allocation2 + $0x18] sm:$0xff]
    %v1084 = vld [vmem:[#allocation2 + $0x20] sm:$0xff]
    %v1085 = vld [vmem:[#allocation2 + $0x28] sm:$0xff]
    %v1086 = vld [vmem:[#allocation2 + $0x30] sm:$0xff]
    %v1087 = vld [vmem:[#allocation2 + $0x38] sm:$0xff]
    %v1088 = vld [vmem:[#allocation2 + $0x40] sm:$0xff]
    %v1089 = vld [vmem:[#allocation2 + $0x48] sm:$0xff]
    %v1090 = vld [vmem:[#allocation2 + $0x50] sm:$0xff]
    %v1091 = vld [vmem:[#allocation2 + $0x58] sm:$0xff]
    %v1092 = vpack.c.bf16 %v1081, %v1080
    %v1093 = vpack.c.bf16 %v1083, %v1082
    %v1094 = vpack.c.bf16 %v1085, %v1084
    %v1095 = vpack.c.bf16 %v1087, %v1086
    %v1096 = vpack.c.bf16 %v1089, %v1088
    %v1097 = vpack.c.bf16 %v1091, %v1090
    %v1098 = vld [vmem:[#allocation10] sm:$0xf]
    %v1099 = vld [vmem:[#allocation10 + $0x4] sm:$0xf]
    %v1100 = vld [vmem:[#allocation10 + $0x8] sm:$0xf]
    %v1101 = vld [vmem:[#allocation10 + $0xc] sm:$0xf]
    %v1102 = vld [vmem:[#allocation10 + $0x10] sm:$0xf]
    %v1103 = vld [vmem:[#allocation10 + $0x14] sm:$0xf]
    %v1104 = vld [vmem:[#allocation10 + $0x18] sm:$0xf]
    %v1105 = vld [vmem:[#allocation10 + $0x1c] sm:$0xf]
    %v1106 = vld [vmem:[#allocation10 + $0x20] sm:$0xf]
    %v1107 = vld [vmem:[#allocation10 + $0x24] sm:$0xf]
    %v1108 = vld [vmem:[#allocation10 + $0x28] sm:$0xf]
    %v1109 = vld [vmem:[#allocation10 + $0x2c] sm:$0xf]
    %v1110 = vld [vmem:[#allocation10 + $0x30] sm:$0xf]
    %v1111 = vld [vmem:[#allocation10 + $0x34] sm:$0xf]
    %v1112 = vld [vmem:[#allocation10 + $0x38] sm:$0xf]
    %v1113 = vld [vmem:[#allocation10 + $0x3c] sm:$0xf]
    %v1114 = vld [vmem:[#allocation11] sm:$0x1]
    %v1115 = vld [vmem:[#allocation7] sm:$0xf]
    %v1116 = vld [vmem:[#allocation7 + $0x40] sm:$0xf]
    %v1117 = vld [vmem:[#allocation7 + $0x80] sm:$0xf]
    %v1118 = vld [vmem:[#allocation7 + $0xc0] sm:$0xf]
    %v1119 = vld [vmem:[#allocation7 + $0x100] sm:$0xf]
    %v1120 = vld [vmem:[#allocation7 + $0x140] sm:$0xf]
    %v1121 = vld [vmem:[#allocation7 + $0x180] sm:$0xf]
    %v1122 = vld [vmem:[#allocation7 + $0x1c0] sm:$0xf]
    %v1123 = vld [vmem:[#allocation7 + $0x200] sm:$0xf]
    %v1124 = vld [vmem:[#allocation7 + $0x240] sm:$0xf]
    %v1125 = vld [vmem:[#allocation7 + $0x280] sm:$0xf]
    %v1126 = vld [vmem:[#allocation7 + $0x2c0] sm:$0xf]
    %v1127 = vld [vmem:[#allocation7 + $0x300] sm:$0xf]
    %v1128 = vld [vmem:[#allocation7 + $0x340] sm:$0xf]
    %v1129 = vld [vmem:[#allocation7 + $0x380] sm:$0xf]
    %v1130 = vld [vmem:[#allocation7 + $0x3c0] sm:$0xf]
    %v1131 = vld [vmem:[#allocation8] sm:$0x1]
    %v1133 = vlaneseq
    %v1134 = vshrl.u32 %v1133, 7
    %v1135 = vsub.s32 0, %v1134
    %v1136 = vrot.slane %v1131, %v1135
    %v1154 = vunpack.c.l.b16 %v1115
    %v1155 = vunpack.c.l.b16 %v1116
    %v1156 = vunpack.c.l.b16 %v1117
    %v1157 = vunpack.c.l.b16 %v1118
    %v1158 = vunpack.c.l.b16 %v1119
    %v1159 = vunpack.c.l.b16 %v1120
    %v1160 = vunpack.c.l.b16 %v1121
    %v1161 = vunpack.c.l.b16 %v1122
    %v1162 = vunpack.c.l.b16 %v1123
    %v1163 = vunpack.c.l.b16 %v1124
    %v1164 = vunpack.c.l.b16 %v1125
    %v1165 = vunpack.c.l.b16 %v1126
    %v1166 = vunpack.c.l.b16 %v1127
    %v1167 = vunpack.c.l.b16 %v1128
    %v1168 = vunpack.c.l.b16 %v1129
    %v1169 = vunpack.c.l.b16 %v1130
    %v1170 = vpack.c.b16 %v1155, %v1154
    %v1171 = vpack.c.b16 %v1157, %v1156
    %v1172 = vpack.c.b16 %v1159, %v1158
    %v1173 = vpack.c.b16 %v1161, %v1160
    %v1174 = vpack.c.b16 %v1163, %v1162
    %v1175 = vpack.c.b16 %v1165, %v1164
    %v1176 = vpack.c.b16 %v1167, %v1166
    %v1177 = vpack.c.b16 %v1169, %v1168
    %1186 = vmatprep.subr.bf16.mxu0 0
    %1187 = vmatpush1.bf16.msra.mxu0 %v1177
    %1188 = vmatprep.subr.bf16.mxu0 0
    %1189 = vmatpush1.bf16.msra.mxu0 %v1176
    %1190 = vmatprep.subr.bf16.mxu0 0
    %1191 = vmatpush1.bf16.msra.mxu0 %v1175
    %1192 = vmatprep.subr.bf16.mxu0 0
    %1193 = vmatpush1.bf16.msra.mxu0 %v1174
    %1194 = vmatprep.subr.bf16.mxu0 0
    %1195 = vmatpush1.bf16.msra.mxu0 %v1173
    %1196 = vmatprep.subr.bf16.mxu0 0
    %1197 = vmatpush1.bf16.msra.mxu0 %v1172
    %1198 = vmatprep.subr.bf16.mxu0 0
    %1199 = vmatpush1.bf16.msra.mxu0 %v1171
    %1200 = vmatprep.subr.bf16.mxu0 0
    %1201 = vmatpush1.bf16.msra.mxu0 %v1170
    %1202 = vmatprep.subr.bf16.mxu0 0
    %1203 = vmatpush2.bf16.msra.mxu0 0
    %1204 = vmatprep.subr.bf16.mxu0 0
    %1205 = vmatpush2.bf16.msra.mxu0 0
    %1206 = vmatprep.subr.bf16.mxu0 0
    %1207 = vmatpush2.bf16.msra.mxu0 0
    %1208 = vmatprep.subr.bf16.mxu0 0
    %1209 = vmatpush2.bf16.msra.mxu0 0
    %1210 = vmatprep.subr.bf16.mxu0 0
    %1211 = vmatpush2.bf16.msra.mxu0 0
    %1212 = vmatprep.subr.bf16.mxu0 0
    %1213 = vmatpush2.bf16.msra.mxu0 0
    %1214 = vmatprep.subr.bf16.mxu0 0
    %1215 = vmatpush2.bf16.msra.mxu0 0
    %1216 = vmatprep.subr.bf16.mxu0 0
    %1217 = vmatpush2.bf16.msra.mxu0 0
    %1218 = vmatprep.mubr.bf16.mxu0 0
    %1219 = vmatmul.mubr.bf16.gmra.mxu0 %v1092
    %v1220 = vpop.f32.mrf.mxu0
    %v1221 = vadd.f32 %v1136, %v1220
    %v1222 = vpop.f32.mrf.mxu0
    %v1223 = vpop.f32.mrf.mxu0
    %v1224 = vadd.f32 %v1136, %v1223
    %v1225 = vpop.f32.mrf.mxu0
    %1226 = vmatprep.mubr.bf16.mxu0 0
    %1227 = vmatmul.mubr.bf16.gmra.mxu0 %v1093
    %v1228 = vpop.f32.mrf.mxu0
    %v1229 = vadd.f32 %v1136, %v1228
    %v1230 = vpop.f32.mrf.mxu0
    %v1231 = vpop.f32.mrf.mxu0
    %v1232 = vadd.f32 %v1136, %v1231
    %v1233 = vpop.f32.mrf.mxu0
    %1234 = vmatprep.mubr.bf16.mxu0 0
    %1235 = vmatmul.mubr.bf16.gmra.mxu0 %v1094
    %v1236 = vpop.f32.mrf.mxu0
    %v1237 = vadd.f32 %v1136, %v1236
    %v1238 = vpop.f32.mrf.mxu0
    %v1239 = vpop.f32.mrf.mxu0
    %v1240 = vadd.f32 %v1136, %v1239
    %v1241 = vpop.f32.mrf.mxu0
    %1242 = vmatprep.mubr.bf16.mxu0 0
    %1243 = vmatmul.mubr.bf16.gmra.mxu0 %v1095
    %v1244 = vpop.f32.mrf.mxu0
    %v1245 = vadd.f32 %v1136, %v1244
    %v1246 = vpop.f32.mrf.mxu0
    %v1247 = vpop.f32.mrf.mxu0
    %v1248 = vadd.f32 %v1136, %v1247
    %v1249 = vpop.f32.mrf.mxu0
    %1250 = vmatprep.mubr.bf16.mxu0 0
    %1251 = vmatmul.mubr.bf16.gmra.mxu0 %v1096
    %v1252 = vpop.f32.mrf.mxu0
    %v1253 = vadd.f32 %v1136, %v1252
    %v1254 = vpop.f32.mrf.mxu0
    %v1255 = vpop.f32.mrf.mxu0
    %v1256 = vadd.f32 %v1136, %v1255
    %v1257 = vpop.f32.mrf.mxu0
    %1258 = vmatprep.mubr.bf16.mxu0 0
    %1259 = vmatmul.mubr.bf16.gmra.mxu0 %v1097
    %v1260 = vpop.f32.mrf.mxu0
    %v1261 = vadd.f32 %v1136, %v1260
    %v1262 = vpop.f32.mrf.mxu0
    %v1263 = vpop.f32.mrf.mxu0
    %v1264 = vadd.f32 %v1136, %v1263
    %v1265 = vpop.f32.mrf.mxu0
    %1266 = vdwg.mxu0
    %v1267 = vmax.f32 %v1221, 0.0
    %v1268 = vmax.f32 %v1224, 0.0
    %v1269 = vmax.f32 %v1229, 0.0
    %v1270 = vmax.f32 %v1232, 0.0
    %v1271 = vmax.f32 %v1237, 0.0
    %v1272 = vmax.f32 %v1240, 0.0
    %v1273 = vmax.f32 %v1245, 0.0
    %v1274 = vmax.f32 %v1248, 0.0
    %v1275 = vmax.f32 %v1253, 0.0
    %v1276 = vmax.f32 %v1256, 0.0
    %v1277 = vmax.f32 %v1261, 0.0
    %v1278 = vmax.f32 %v1264, 0.0
    %v1279 = vpack.c.bf16 %v1268, %v1267
    %v1280 = vpack.c.bf16 %v1270, %v1269
    %v1281 = vpack.c.bf16 %v1272, %v1271
    %v1282 = vpack.c.bf16 %v1274, %v1273
    %v1283 = vpack.c.bf16 %v1276, %v1275
    %v1284 = vpack.c.bf16 %v1278, %v1277
    %v1286 = vlaneseq
    %v1287 = vshrl.u32 %v1286, 7
    %v1288 = vsub.s32 0, %v1287
    %v1289 = vrot.slane %v1114, %v1288
    %v1307 = vunpack.c.l.b16 %v1098
    %v1308 = vunpack.c.l.b16 %v1099
    %v1309 = vunpack.c.l.b16 %v1100
    %v1310 = vunpack.c.l.b16 %v1101
    %v1311 = vunpack.c.l.b16 %v1102
    %v1312 = vunpack.c.l.b16 %v1103
    %v1313 = vunpack.c.l.b16 %v1104
    %v1314 = vunpack.c.l.b16 %v1105
    %v1315 = vunpack.c.l.b16 %v1106
    %v1316 = vunpack.c.l.b16 %v1107
    %v1317 = vunpack.c.l.b16 %v1108
    %v1318 = vunpack.c.l.b16 %v1109
    %v1319 = vunpack.c.l.b16 %v1110
    %v1320 = vunpack.c.l.b16 %v1111
    %v1321 = vunpack.c.l.b16 %v1112
    %v1322 = vunpack.c.l.b16 %v1113
    %v1323 = vpack.c.b16 %v1308, %v1307
    %v1324 = vpack.c.b16 %v1310, %v1309
    %v1325 = vpack.c.b16 %v1312, %v1311
    %v1326 = vpack.c.b16 %v1314, %v1313
    %v1327 = vpack.c.b16 %v1316, %v1315
    %v1328 = vpack.c.b16 %v1318, %v1317
    %v1329 = vpack.c.b16 %v1320, %v1319
    %v1330 = vpack.c.b16 %v1322, %v1321
    %1339 = vmatprep.subr.bf16.mxu0 0
    %1340 = vmatpush1.bf16.msra.mxu0 %v1330
    %1341 = vmatprep.subr.bf16.mxu0 0
    %1342 = vmatpush1.bf16.msra.mxu0 %v1329
    %1343 = vmatprep.subr.bf16.mxu0 0
    %1344 = vmatpush1.bf16.msra.mxu0 %v1328
    %1345 = vmatprep.subr.bf16.mxu0 0
    %1346 = vmatpush1.bf16.msra.mxu0 %v1327
    %1347 = vmatprep.subr.bf16.mxu0 0
    %1348 = vmatpush1.bf16.msra.mxu0 %v1326
    %1349 = vmatprep.subr.bf16.mxu0 0
    %1350 = vmatpush1.bf16.msra.mxu0 %v1325
    %1351 = vmatprep.subr.bf16.mxu0 0
    %1352 = vmatpush1.bf16.msra.mxu0 %v1324
    %1353 = vmatprep.subr.bf16.mxu0 0
    %1354 = vmatpush1.bf16.msra.mxu0 %v1323
    %1355 = vmatprep.subr.bf16.mxu0 0
    %1356 = vmatpush2.bf16.msra.mxu0 0
    %1357 = vmatprep.subr.bf16.mxu0 0
    %1358 = vmatpush2.bf16.msra.mxu0 0
    %1359 = vmatprep.subr.bf16.mxu0 0
    %1360 = vmatpush2.bf16.msra.mxu0 0
    %1361 = vmatprep.subr.bf16.mxu0 0
    %1362 = vmatpush2.bf16.msra.mxu0 0
    %1363 = vmatprep.subr.bf16.mxu0 0
    %1364 = vmatpush2.bf16.msra.mxu0 0
    %1365 = vmatprep.subr.bf16.mxu0 0
    %1366 = vmatpush2.bf16.msra.mxu0 0
    %1367 = vmatprep.subr.bf16.mxu0 0
    %1368 = vmatpush2.bf16.msra.mxu0 0
    %1369 = vmatprep.subr.bf16.mxu0 0
    %1370 = vmatpush2.bf16.msra.mxu0 0
    %1371 = vmatprep.mubr.bf16.mxu0 0
    %1372 = vmatmul.mubr.bf16.gmra.mxu0 %v1279
    %v1373 = vpop.f32.mrf.mxu0
    %v1374 = vadd.f32 %v1289, %v1373
    %v1375 = vpop.f32.mrf.mxu0
    %v1376 = vpop.f32.mrf.mxu0
    %v1377 = vadd.f32 %v1289, %v1376
    %v1378 = vpop.f32.mrf.mxu0
    %1379 = vmatprep.mubr.bf16.mxu0 0
    %1380 = vmatmul.mubr.bf16.gmra.mxu0 %v1280
    %v1381 = vpop.f32.mrf.mxu0
    %v1382 = vadd.f32 %v1289, %v1381
    %v1383 = vpop.f32.mrf.mxu0
    %v1384 = vpop.f32.mrf.mxu0
    %v1385 = vadd.f32 %v1289, %v1384
    %v1386 = vpop.f32.mrf.mxu0
    %1387 = vmatprep.mubr.bf16.mxu0 0
    %1388 = vmatmul.mubr.bf16.gmra.mxu0 %v1281
    %v1389 = vpop.f32.mrf.mxu0
    %v1390 = vadd.f32 %v1289, %v1389
    %v1391 = vpop.f32.mrf.mxu0
    %v1392 = vpop.f32.mrf.mxu0
    %v1393 = vadd.f32 %v1289, %v1392
    %v1394 = vpop.f32.mrf.mxu0
    %1395 = vmatprep.mubr.bf16.mxu0 0
    %1396 = vmatmul.mubr.bf16.gmra.mxu0 %v1282
    %v1397 = vpop.f32.mrf.mxu0
    %v1398 = vadd.f32 %v1289, %v1397
    %v1399 = vpop.f32.mrf.mxu0
    %v1400 = vpop.f32.mrf.mxu0
    %v1401 = vadd.f32 %v1289, %v1400
    %v1402 = vpop.f32.mrf.mxu0
    %1403 = vmatprep.mubr.bf16.mxu0 0
    %1404 = vmatmul.mubr.bf16.gmra.mxu0 %v1283
    %v1405 = vpop.f32.mrf.mxu0
    %v1406 = vadd.f32 %v1289, %v1405
    %v1407 = vpop.f32.mrf.mxu0
    %v1408 = vpop.f32.mrf.mxu0
    %v1409 = vadd.f32 %v1289, %v1408
    %v1410 = vpop.f32.mrf.mxu0
    %1411 = vmatprep.mubr.bf16.mxu0 0
    %1412 = vmatmul.mubr.bf16.gmra.mxu0 %v1284
    %v1413 = vpop.f32.mrf.mxu0
    %v1414 = vadd.f32 %v1289, %v1413
    %v1415 = vpop.f32.mrf.mxu0
    %v1416 = vpop.f32.mrf.mxu0
    %v1417 = vadd.f32 %v1289, %v1416
    %v1418 = vpop.f32.mrf.mxu0
    %1419 = vdwg.mxu0
    %v1420 = vmax.f32 %v1374, 0.0
    %v1421 = vmax.f32 %v1377, 0.0
    %v1422 = vmax.f32 %v1382, 0.0
    %v1423 = vmax.f32 %v1385, 0.0
    %v1424 = vmax.f32 %v1390, 0.0
    %v1425 = vmax.f32 %v1393, 0.0
    %v1426 = vmax.f32 %v1398, 0.0
    %v1427 = vmax.f32 %v1401, 0.0
    %v1428 = vmax.f32 %v1406, 0.0
    %v1429 = vmax.f32 %v1409, 0.0
    %v1430 = vmax.f32 %v1414, 0.0
    %v1431 = vmax.f32 %v1417, 0.0
    %1432 = vst [vmem:[%s7] sm:$0xff] %v1420
    %1433 = vst [vmem:[%s7 + $0x8] sm:$0xff] %v1421
    %1434 = vst [vmem:[%s7 + $0x10] sm:$0xff] %v1422
    %1435 = vst [vmem:[%s7 + $0x18] sm:$0xff] %v1423
    %1436 = vst [vmem:[%s7 + $0x20] sm:$0xff] %v1424
    %1437 = vst [vmem:[%s7 + $0x28] sm:$0xff] %v1425
    %1438 = vst [vmem:[%s7 + $0x30] sm:$0xff] %v1426
    %1439 = vst [vmem:[%s7 + $0x38] sm:$0xff] %v1427
    %1440 = vst [vmem:[%s7 + $0x40] sm:$0xff] %v1428
    %1441 = vst [vmem:[%s7 + $0x48] sm:$0xff] %v1429
    %1442 = vst [vmem:[%s7 + $0x50] sm:$0xff] %v1430
    %1443 = vst [vmem:[%s7 + $0x58] sm:$0xff] %v1431
    %v1444 = vld [vmem:[#allocation7 + $0x4] sm:$0xf]
    %v1445 = vld [vmem:[#allocation7 + $0x44] sm:$0xf]
    %v1446 = vld [vmem:[#allocation7 + $0x84] sm:$0xf]
    %v1447 = vld [vmem:[#allocation7 + $0xc4] sm:$0xf]
    %v1448 = vld [vmem:[#allocation7 + $0x104] sm:$0xf]
    %v1449 = vld [vmem:[#allocation7 + $0x144] sm:$0xf]
    %v1450 = vld [vmem:[#allocation7 + $0x184] sm:$0xf]
    %v1451 = vld [vmem:[#allocation7 + $0x1c4] sm:$0xf]
    %v1452 = vld [vmem:[#allocation7 + $0x204] sm:$0xf]
    %v1453 = vld [vmem:[#allocation7 + $0x244] sm:$0xf]
    %v1454 = vld [vmem:[#allocation7 + $0x284] sm:$0xf]
    %v1455 = vld [vmem:[#allocation7 + $0x2c4] sm:$0xf]
    %v1456 = vld [vmem:[#allocation7 + $0x304] sm:$0xf]
    %v1457 = vld [vmem:[#allocation7 + $0x344] sm:$0xf]
    %v1458 = vld [vmem:[#allocation7 + $0x384] sm:$0xf]
    %v1459 = vld [vmem:[#allocation7 + $0x3c4] sm:$0xf]
    %v1460 = vld [vmem:[#allocation8 + $0x1] sm:$0x1]
    %v1462 = vlaneseq
    %v1463 = vshrl.u32 %v1462, 7
    %v1464 = vsub.s32 0, %v1463
    %v1465 = vrot.slane %v1460, %v1464
    %v1483 = vunpack.c.l.b16 %v1444
    %v1484 = vunpack.c.l.b16 %v1445
    %v1485 = vunpack.c.l.b16 %v1446
    %v1486 = vunpack.c.l.b16 %v1447
    %v1487 = vunpack.c.l.b16 %v1448
    %v1488 = vunpack.c.l.b16 %v1449
    %v1489 = vunpack.c.l.b16 %v1450
    %v1490 = vunpack.c.l.b16 %v1451
    %v1491 = vunpack.c.l.b16 %v1452
    %v1492 = vunpack.c.l.b16 %v1453
    %v1493 = vunpack.c.l.b16 %v1454
    %v1494 = vunpack.c.l.b16 %v1455
    %v1495 = vunpack.c.l.b16 %v1456
    %v1496 = vunpack.c.l.b16 %v1457
    %v1497 = vunpack.c.l.b16 %v1458
    %v1498 = vunpack.c.l.b16 %v1459
    %v1499 = vpack.c.b16 %v1484, %v1483
    %v1500 = vpack.c.b16 %v1486, %v1485
    %v1501 = vpack.c.b16 %v1488, %v1487
    %v1502 = vpack.c.b16 %v1490, %v1489
    %v1503 = vpack.c.b16 %v1492, %v1491
    %v1504 = vpack.c.b16 %v1494, %v1493
    %v1505 = vpack.c.b16 %v1496, %v1495
    %v1506 = vpack.c.b16 %v1498, %v1497
    %1515 = vmatprep.subr.bf16.mxu0 0
    %1516 = vmatpush1.bf16.msra.mxu0 %v1506
    %1517 = vmatprep.subr.bf16.mxu0 0
    %1518 = vmatpush1.bf16.msra.mxu0 %v1505
    %1519 = vmatprep.subr.bf16.mxu0 0
    %1520 = vmatpush1.bf16.msra.mxu0 %v1504
    %1521 = vmatprep.subr.bf16.mxu0 0
    %1522 = vmatpush1.bf16.msra.mxu0 %v1503
    %1523 = vmatprep.subr.bf16.mxu0 0
    %1524 = vmatpush1.bf16.msra.mxu0 %v1502
    %1525 = vmatprep.subr.bf16.mxu0 0
    %1526 = vmatpush1.bf16.msra.mxu0 %v1501
    %1527 = vmatprep.subr.bf16.mxu0 0
    %1528 = vmatpush1.bf16.msra.mxu0 %v1500
    %1529 = vmatprep.subr.bf16.mxu0 0
    %1530 = vmatpush1.bf16.msra.mxu0 %v1499
    %1531 = vmatprep.subr.bf16.mxu0 0
    %1532 = vmatpush2.bf16.msra.mxu0 0
    %1533 = vmatprep.subr.bf16.mxu0 0
    %1534 = vmatpush2.bf16.msra.mxu0 0
    %1535 = vmatprep.subr.bf16.mxu0 0
    %1536 = vmatpush2.bf16.msra.mxu0 0
    %1537 = vmatprep.subr.bf16.mxu0 0
    %1538 = vmatpush2.bf16.msra.mxu0 0
    %1539 = vmatprep.subr.bf16.mxu0 0
    %1540 = vmatpush2.bf16.msra.mxu0 0
    %1541 = vmatprep.subr.bf16.mxu0 0
    %1542 = vmatpush2.bf16.msra.mxu0 0
    %1543 = vmatprep.subr.bf16.mxu0 0
    %1544 = vmatpush2.bf16.msra.mxu0 0
    %1545 = vmatprep.subr.bf16.mxu0 0
    %1546 = vmatpush2.bf16.msra.mxu0 0
    %1547 = vmatprep.mubr.bf16.mxu0 0
    %1548 = vmatmul.mubr.bf16.gmra.mxu0 %v1092
    %v1549 = vpop.f32.mrf.mxu0
    %v1550 = vadd.f32 %v1465, %v1549
    %v1551 = vpop.f32.mrf.mxu0
    %v1552 = vpop.f32.mrf.mxu0
    %v1553 = vadd.f32 %v1465, %v1552
    %v1554 = vpop.f32.mrf.mxu0
    %1555 = vmatprep.mubr.bf16.mxu0 0
    %1556 = vmatmul.mubr.bf16.gmra.mxu0 %v1093
    %v1557 = vpop.f32.mrf.mxu0
    %v1558 = vadd.f32 %v1465, %v1557
    %v1559 = vpop.f32.mrf.mxu0
    %v1560 = vpop.f32.mrf.mxu0
    %v1561 = vadd.f32 %v1465, %v1560
    %v1562 = vpop.f32.mrf.mxu0
    %1563 = vmatprep.mubr.bf16.mxu0 0
    %1564 = vmatmul.mubr.bf16.gmra.mxu0 %v1094
    %v1565 = vpop.f32.mrf.mxu0
    %v1566 = vadd.f32 %v1465, %v1565
    %v1567 = vpop.f32.mrf.mxu0
    %v1568 = vpop.f32.mrf.mxu0
    %v1569 = vadd.f32 %v1465, %v1568
    %v1570 = vpop.f32.mrf.mxu0
    %1571 = vmatprep.mubr.bf16.mxu0 0
    %1572 = vmatmul.mubr.bf16.gmra.mxu0 %v1095
    %v1573 = vpop.f32.mrf.mxu0
    %v1574 = vadd.f32 %v1465, %v1573
    %v1575 = vpop.f32.mrf.mxu0
    %v1576 = vpop.f32.mrf.mxu0
    %v1577 = vadd.f32 %v1465, %v1576
    %v1578 = vpop.f32.mrf.mxu0
    %1579 = vmatprep.mubr.bf16.mxu0 0
    %1580 = vmatmul.mubr.bf16.gmra.mxu0 %v1096
    %v1581 = vpop.f32.mrf.mxu0
    %v1582 = vadd.f32 %v1465, %v1581
    %v1583 = vpop.f32.mrf.mxu0
    %v1584 = vpop.f32.mrf.mxu0
    %v1585 = vadd.f32 %v1465, %v1584
    %v1586 = vpop.f32.mrf.mxu0
    %1587 = vmatprep.mubr.bf16.mxu0 0
    %1588 = vmatmul.mubr.bf16.gmra.mxu0 %v1097
    %v1589 = vpop.f32.mrf.mxu0
    %v1590 = vadd.f32 %v1465, %v1589
    %v1591 = vpop.f32.mrf.mxu0
    %v1592 = vpop.f32.mrf.mxu0
    %v1593 = vadd.f32 %v1465, %v1592
    %v1594 = vpop.f32.mrf.mxu0
    %1595 = vdwg.mxu0
    %v1596 = vmax.f32 %v1550, 0.0
    %v1597 = vmax.f32 %v1553, 0.0
    %v1598 = vmax.f32 %v1558, 0.0
    %v1599 = vmax.f32 %v1561, 0.0
    %v1600 = vmax.f32 %v1566, 0.0
    %v1601 = vmax.f32 %v1569, 0.0
    %v1602 = vmax.f32 %v1574, 0.0
    %v1603 = vmax.f32 %v1577, 0.0
    %v1604 = vmax.f32 %v1582, 0.0
    %v1605 = vmax.f32 %v1585, 0.0
    %v1606 = vmax.f32 %v1590, 0.0
    %v1607 = vmax.f32 %v1593, 0.0
    %v1608 = vpack.c.bf16 %v1597, %v1596
    %v1609 = vpack.c.bf16 %v1599, %v1598
    %v1610 = vpack.c.bf16 %v1601, %v1600
    %v1611 = vpack.c.bf16 %v1603, %v1602
    %v1612 = vpack.c.bf16 %v1605, %v1604
    %v1613 = vpack.c.bf16 %v1607, %v1606
    %1614 = vmatprep.subr.bf16.mxu0 0
    %1615 = vmatpush1.bf16.msra.mxu0 %v1330
    %1616 = vmatprep.subr.bf16.mxu0 0
    %1617 = vmatpush1.bf16.msra.mxu0 %v1329
    %1618 = vmatprep.subr.bf16.mxu0 0
    %1619 = vmatpush1.bf16.msra.mxu0 %v1328
    %1620 = vmatprep.subr.bf16.mxu0 0
    %1621 = vmatpush1.bf16.msra.mxu0 %v1327
    %1622 = vmatprep.subr.bf16.mxu0 0
    %1623 = vmatpush1.bf16.msra.mxu0 %v1326
    %1624 = vmatprep.subr.bf16.mxu0 0
    %1625 = vmatpush1.bf16.msra.mxu0 %v1325
    %1626 = vmatprep.subr.bf16.mxu0 0
    %1627 = vmatpush1.bf16.msra.mxu0 %v1324
    %1628 = vmatprep.subr.bf16.mxu0 0
    %1629 = vmatpush1.bf16.msra.mxu0 %v1323
    %1630 = vmatprep.subr.bf16.mxu0 0
    %1631 = vmatpush2.bf16.msra.mxu0 0
    %1632 = vmatprep.subr.bf16.mxu0 0
    %1633 = vmatpush2.bf16.msra.mxu0 0
    %1634 = vmatprep.subr.bf16.mxu0 0
    %1635 = vmatpush2.bf16.msra.mxu0 0
    %1636 = vmatprep.subr.bf16.mxu0 0
    %1637 = vmatpush2.bf16.msra.mxu0 0
    %1638 = vmatprep.subr.bf16.mxu0 0
    %1639 = vmatpush2.bf16.msra.mxu0 0
    %1640 = vmatprep.subr.bf16.mxu0 0
    %1641 = vmatpush2.bf16.msra.mxu0 0
    %1642 = vmatprep.subr.bf16.mxu0 0
    %1643 = vmatpush2.bf16.msra.mxu0 0
    %1644 = vmatprep.subr.bf16.mxu0 0
    %1645 = vmatpush2.bf16.msra.mxu0 0
    %1646 = vmatprep.mubr.bf16.mxu0 0
    %1647 = vmatmul.mubr.bf16.gmra.mxu0 %v1608
    %v1648 = vpop.f32.mrf.mxu0
    %v1649 = vadd.f32 %v1289, %v1648
    %v1650 = vpop.f32.mrf.mxu0
    %v1651 = vpop.f32.mrf.mxu0
    %v1652 = vadd.f32 %v1289, %v1651
    %v1653 = vpop.f32.mrf.mxu0
    %1654 = vmatprep.mubr.bf16.mxu0 0
    %1655 = vmatmul.mubr.bf16.gmra.mxu0 %v1609
    %v1656 = vpop.f32.mrf.mxu0
    %v1657 = vadd.f32 %v1289, %v1656
    %v1658 = vpop.f32.mrf.mxu0
    %v1659 = vpop.f32.mrf.mxu0
    %v1660 = vadd.f32 %v1289, %v1659
    %v1661 = vpop.f32.mrf.mxu0
    %1662 = vmatprep.mubr.bf16.mxu0 0
    %1663 = vmatmul.mubr.bf16.gmra.mxu0 %v1610
    %v1664 = vpop.f32.mrf.mxu0
    %v1665 = vadd.f32 %v1289, %v1664
    %v1666 = vpop.f32.mrf.mxu0
    %v1667 = vpop.f32.mrf.mxu0
    %v1668 = vadd.f32 %v1289, %v1667
    %v1669 = vpop.f32.mrf.mxu0
    %1670 = vmatprep.mubr.bf16.mxu0 0
    %1671 = vmatmul.mubr.bf16.gmra.mxu0 %v1611
    %v1672 = vpop.f32.mrf.mxu0
    %v1673 = vadd.f32 %v1289, %v1672
    %v1674 = vpop.f32.mrf.mxu0
    %v1675 = vpop.f32.mrf.mxu0
    %v1676 = vadd.f32 %v1289, %v1675
    %v1677 = vpop.f32.mrf.mxu0
    %1678 = vmatprep.mubr.bf16.mxu0 0
    %1679 = vmatmul.mubr.bf16.gmra.mxu0 %v1612
    %v1680 = vpop.f32.mrf.mxu0
    %v1681 = vadd.f32 %v1289, %v1680
    %v1682 = vpop.f32.mrf.mxu0
    %v1683 = vpop.f32.mrf.mxu0
    %v1684 = vadd.f32 %v1289, %v1683
    %v1685 = vpop.f32.mrf.mxu0
    %1686 = vmatprep.mubr.bf16.mxu0 0
    %1687 = vmatmul.mubr.bf16.gmra.mxu0 %v1613
    %v1688 = vpop.f32.mrf.mxu0
    %v1689 = vadd.f32 %v1289, %v1688
    %v1690 = vpop.f32.mrf.mxu0
    %v1691 = vpop.f32.mrf.mxu0
    %v1692 = vadd.f32 %v1289, %v1691
    %v1693 = vpop.f32.mrf.mxu0
    %1694 = vdwg.mxu0
    %v1695 = vmax.f32 %v1649, 0.0
    %v1696 = vmax.f32 %v1652, 0.0
    %v1697 = vmax.f32 %v1657, 0.0
    %v1698 = vmax.f32 %v1660, 0.0
    %v1699 = vmax.f32 %v1665, 0.0
    %v1700 = vmax.f32 %v1668, 0.0
    %v1701 = vmax.f32 %v1673, 0.0
    %v1702 = vmax.f32 %v1676, 0.0
    %v1703 = vmax.f32 %v1681, 0.0
    %v1704 = vmax.f32 %v1684, 0.0
    %v1705 = vmax.f32 %v1689, 0.0
    %v1706 = vmax.f32 %v1692, 0.0
    %1707 = vst [vmem:[%s7 + $0x60] sm:$0xff] %v1695
    %1708 = vst [vmem:[%s7 + $0x68] sm:$0xff] %v1696
    %1709 = vst [vmem:[%s7 + $0x70] sm:$0xff] %v1697
    %1710 = vst [vmem:[%s7 + $0x78] sm:$0xff] %v1698
    %1711 = vst [vmem:[%s7 + $0x80] sm:$0xff] %v1699
    %1712 = vst [vmem:[%s7 + $0x88] sm:$0xff] %v1700
    %1713 = vst [vmem:[%s7 + $0x90] sm:$0xff] %v1701
    %1714 = vst [vmem:[%s7 + $0x98] sm:$0xff] %v1702
    %1715 = vst [vmem:[%s7 + $0xa0] sm:$0xff] %v1703
    %1716 = vst [vmem:[%s7 + $0xa8] sm:$0xff] %v1704
    %1717 = vst [vmem:[%s7 + $0xb0] sm:$0xff] %v1705
    %1718 = vst [vmem:[%s7 + $0xb8] sm:$0xff] %v1706
    %v1719 = vld [vmem:[#allocation7 + $0x8] sm:$0xf]
    %v1720 = vld [vmem:[#allocation7 + $0x48] sm:$0xf]
    %v1721 = vld [vmem:[#allocation7 + $0x88] sm:$0xf]
    %v1722 = vld [vmem:[#allocation7 + $0xc8] sm:$0xf]
    %v1723 = vld [vmem:[#allocation7 + $0x108] sm:$0xf]
    %v1724 = vld [vmem:[#allocation7 + $0x148] sm:$0xf]
    %v1725 = vld [vmem:[#allocation7 + $0x188] sm:$0xf]
    %v1726 = vld [vmem:[#allocation7 + $0x1c8] sm:$0xf]
    %v1727 = vld [vmem:[#allocation7 + $0x208] sm:$0xf]
    %v1728 = vld [vmem:[#allocation7 + $0x248] sm:$0xf]
    %v1729 = vld [vmem:[#allocation7 + $0x288] sm:$0xf]
    %v1730 = vld [vmem:[#allocation7 + $0x2c8] sm:$0xf]
    %v1731 = vld [vmem:[#allocation7 + $0x308] sm:$0xf]
    %v1732 = vld [vmem:[#allocation7 + $0x348] sm:$0xf]
    %v1733 = vld [vmem:[#allocation7 + $0x388] sm:$0xf]
    %v1734 = vld [vmem:[#allocation7 + $0x3c8] sm:$0xf]
    %v1735 = vld [vmem:[#allocation8 + $0x2] sm:$0x1]
    %v1737 = vlaneseq
    %v1738 = vshrl.u32 %v1737, 7
    %v1739 = vsub.s32 0, %v1738
    %v1740 = vrot.slane %v1735, %v1739
    %v1758 = vunpack.c.l.b16 %v1719
    %v1759 = vunpack.c.l.b16 %v1720
    %v1760 = vunpack.c.l.b16 %v1721
    %v1761 = vunpack.c.l.b16 %v1722
    %v1762 = vunpack.c.l.b16 %v1723
    %v1763 = vunpack.c.l.b16 %v1724
    %v1764 = vunpack.c.l.b16 %v1725
    %v1765 = vunpack.c.l.b16 %v1726
    %v1766 = vunpack.c.l.b16 %v1727
    %v1767 = vunpack.c.l.b16 %v1728
    %v1768 = vunpack.c.l.b16 %v1729
    %v1769 = vunpack.c.l.b16 %v1730
    %v1770 = vunpack.c.l.b16 %v1731
    %v1771 = vunpack.c.l.b16 %v1732
    %v1772 = vunpack.c.l.b16 %v1733
    %v1773 = vunpack.c.l.b16 %v1734
    %v1774 = vpack.c.b16 %v1759, %v1758
    %v1775 = vpack.c.b16 %v1761, %v1760
    %v1776 = vpack.c.b16 %v1763, %v1762
    %v1777 = vpack.c.b16 %v1765, %v1764
    %v1778 = vpack.c.b16 %v1767, %v1766
    %v1779 = vpack.c.b16 %v1769, %v1768
    %v1780 = vpack.c.b16 %v1771, %v1770
    %v1781 = vpack.c.b16 %v1773, %v1772
    %1790 = vmatprep.subr.bf16.mxu0 0
    %1791 = vmatpush1.bf16.msra.mxu0 %v1781
    %1792 = vmatprep.subr.bf16.mxu0 0
    %1793 = vmatpush1.bf16.msra.mxu0 %v1780
    %1794 = vmatprep.subr.bf16.mxu0 0
    %1795 = vmatpush1.bf16.msra.mxu0 %v1779
    %1796 = vmatprep.subr.bf16.mxu0 0
    %1797 = vmatpush1.bf16.msra.mxu0 %v1778
    %1798 = vmatprep.subr.bf16.mxu0 0
    %1799 = vmatpush1.bf16.msra.mxu0 %v1777
    %1800 = vmatprep.subr.bf16.mxu0 0
    %1801 = vmatpush1.bf16.msra.mxu0 %v1776
    %1802 = vmatprep.subr.bf16.mxu0 0
    %1803 = vmatpush1.bf16.msra.mxu0 %v1775
    %1804 = vmatprep.subr.bf16.mxu0 0
    %1805 = vmatpush1.bf16.msra.mxu0 %v1774
    %1806 = vmatprep.subr.bf16.mxu0 0
    %1807 = vmatpush2.bf16.msra.mxu0 0
    %1808 = vmatprep.subr.bf16.mxu0 0
    %1809 = vmatpush2.bf16.msra.mxu0 0
    %1810 = vmatprep.subr.bf16.mxu0 0
    %1811 = vmatpush2.bf16.msra.mxu0 0
    %1812 = vmatprep.subr.bf16.mxu0 0
    %1813 = vmatpush2.bf16.msra.mxu0 0
    %1814 = vmatprep.subr.bf16.mxu0 0
    %1815 = vmatpush2.bf16.msra.mxu0 0
    %1816 = vmatprep.subr.bf16.mxu0 0
    %1817 = vmatpush2.bf16.msra.mxu0 0
    %1818 = vmatprep.subr.bf16.mxu0 0
    %1819 = vmatpush2.bf16.msra.mxu0 0
    %1820 = vmatprep.subr.bf16.mxu0 0
    %1821 = vmatpush2.bf16.msra.mxu0 0
    %1822 = vmatprep.mubr.bf16.mxu0 0
    %1823 = vmatmul.mubr.bf16.gmra.mxu0 %v1092
    %v1824 = vpop.f32.mrf.mxu0
    %v1825 = vadd.f32 %v1740, %v1824
    %v1826 = vpop.f32.mrf.mxu0
    %v1827 = vpop.f32.mrf.mxu0
    %v1828 = vadd.f32 %v1740, %v1827
    %v1829 = vpop.f32.mrf.mxu0
    %1830 = vmatprep.mubr.bf16.mxu0 0
    %1831 = vmatmul.mubr.bf16.gmra.mxu0 %v1093
    %v1832 = vpop.f32.mrf.mxu0
    %v1833 = vadd.f32 %v1740, %v1832
    %v1834 = vpop.f32.mrf.mxu0
    %v1835 = vpop.f32.mrf.mxu0
    %v1836 = vadd.f32 %v1740, %v1835
    %v1837 = vpop.f32.mrf.mxu0
    %1838 = vmatprep.mubr.bf16.mxu0 0
    %1839 = vmatmul.mubr.bf16.gmra.mxu0 %v1094
    %v1840 = vpop.f32.mrf.mxu0
    %v1841 = vadd.f32 %v1740, %v1840
    %v1842 = vpop.f32.mrf.mxu0
    %v1843 = vpop.f32.mrf.mxu0
    %v1844 = vadd.f32 %v1740, %v1843
    %v1845 = vpop.f32.mrf.mxu0
    %1846 = vmatprep.mubr.bf16.mxu0 0
    %1847 = vmatmul.mubr.bf16.gmra.mxu0 %v1095
    %v1848 = vpop.f32.mrf.mxu0
    %v1849 = vadd.f32 %v1740, %v1848
    %v1850 = vpop.f32.mrf.mxu0
    %v1851 = vpop.f32.mrf.mxu0
    %v1852 = vadd.f32 %v1740, %v1851
    %v1853 = vpop.f32.mrf.mxu0
    %1854 = vmatprep.mubr.bf16.mxu0 0
    %1855 = vmatmul.mubr.bf16.gmra.mxu0 %v1096
    %v1856 = vpop.f32.mrf.mxu0
    %v1857 = vadd.f32 %v1740, %v1856
    %v1858 = vpop.f32.mrf.mxu0
    %v1859 = vpop.f32.mrf.mxu0
    %v1860 = vadd.f32 %v1740, %v1859
    %v1861 = vpop.f32.mrf.mxu0
    %1862 = vmatprep.mubr.bf16.mxu0 0
    %1863 = vmatmul.mubr.bf16.gmra.mxu0 %v1097
    %v1864 = vpop.f32.mrf.mxu0
    %v1865 = vadd.f32 %v1740, %v1864
    %v1866 = vpop.f32.mrf.mxu0
    %v1867 = vpop.f32.mrf.mxu0
    %v1868 = vadd.f32 %v1740, %v1867
    %v1869 = vpop.f32.mrf.mxu0
    %1870 = vdwg.mxu0
    %v1871 = vmax.f32 %v1825, 0.0
    %v1872 = vmax.f32 %v1828, 0.0
    %v1873 = vmax.f32 %v1833, 0.0
    %v1874 = vmax.f32 %v1836, 0.0
    %v1875 = vmax.f32 %v1841, 0.0
    %v1876 = vmax.f32 %v1844, 0.0
    %v1877 = vmax.f32 %v1849, 0.0
    %v1878 = vmax.f32 %v1852, 0.0
    %v1879 = vmax.f32 %v1857, 0.0
    %v1880 = vmax.f32 %v1860, 0.0
    %v1881 = vmax.f32 %v1865, 0.0
    %v1882 = vmax.f32 %v1868, 0.0
    %v1883 = vpack.c.bf16 %v1872, %v1871
    %v1884 = vpack.c.bf16 %v1874, %v1873
    %v1885 = vpack.c.bf16 %v1876, %v1875
    %v1886 = vpack.c.bf16 %v1878, %v1877
    %v1887 = vpack.c.bf16 %v1880, %v1879
    %v1888 = vpack.c.bf16 %v1882, %v1881
    %1889 = vmatprep.subr.bf16.mxu0 0
    %1890 = vmatpush1.bf16.msra.mxu0 %v1330
    %1891 = vmatprep.subr.bf16.mxu0 0
    %1892 = vmatpush1.bf16.msra.mxu0 %v1329
    %1893 = vmatprep.subr.bf16.mxu0 0
    %1894 = vmatpush1.bf16.msra.mxu0 %v1328
    %1895 = vmatprep.subr.bf16.mxu0 0
    %1896 = vmatpush1.bf16.msra.mxu0 %v1327
    %1897 = vmatprep.subr.bf16.mxu0 0
    %1898 = vmatpush1.bf16.msra.mxu0 %v1326
    %1899 = vmatprep.subr.bf16.mxu0 0
    %1900 = vmatpush1.bf16.msra.mxu0 %v1325
    %1901 = vmatprep.subr.bf16.mxu0 0
    %1902 = vmatpush1.bf16.msra.mxu0 %v1324
    %1903 = vmatprep.subr.bf16.mxu0 0
    %1904 = vmatpush1.bf16.msra.mxu0 %v1323
    %1905 = vmatprep.subr.bf16.mxu0 0
    %1906 = vmatpush2.bf16.msra.mxu0 0
    %1907 = vmatprep.subr.bf16.mxu0 0
    %1908 = vmatpush2.bf16.msra.mxu0 0
    %1909 = vmatprep.subr.bf16.mxu0 0
    %1910 = vmatpush2.bf16.msra.mxu0 0
    %1911 = vmatprep.subr.bf16.mxu0 0
    %1912 = vmatpush2.bf16.msra.mxu0 0
    %1913 = vmatprep.subr.bf16.mxu0 0
    %1914 = vmatpush2.bf16.msra.mxu0 0
    %1915 = vmatprep.subr.bf16.mxu0 0
    %1916 = vmatpush2.bf16.msra.mxu0 0
    %1917 = vmatprep.subr.bf16.mxu0 0
    %1918 = vmatpush2.bf16.msra.mxu0 0
    %1919 = vmatprep.subr.bf16.mxu0 0
    %1920 = vmatpush2.bf16.msra.mxu0 0
    %1921 = vmatprep.mubr.bf16.mxu0 0
    %1922 = vmatmul.mubr.bf16.gmra.mxu0 %v1883
    %v1923 = vpop.f32.mrf.mxu0
    %v1924 = vadd.f32 %v1289, %v1923
    %v1925 = vpop.f32.mrf.mxu0
    %v1926 = vpop.f32.mrf.mxu0
    %v1927 = vadd.f32 %v1289, %v1926
    %v1928 = vpop.f32.mrf.mxu0
    %1929 = vmatprep.mubr.bf16.mxu0 0
    %1930 = vmatmul.mubr.bf16.gmra.mxu0 %v1884
    %v1931 = vpop.f32.mrf.mxu0
    %v1932 = vadd.f32 %v1289, %v1931
    %v1933 = vpop.f32.mrf.mxu0
    %v1934 = vpop.f32.mrf.mxu0
    %v1935 = vadd.f32 %v1289, %v1934
    %v1936 = vpop.f32.mrf.mxu0
    %1937 = vmatprep.mubr.bf16.mxu0 0
    %1938 = vmatmul.mubr.bf16.gmra.mxu0 %v1885
    %v1939 = vpop.f32.mrf.mxu0
    %v1940 = vadd.f32 %v1289, %v1939
    %v1941 = vpop.f32.mrf.mxu0
    %v1942 = vpop.f32.mrf.mxu0
    %v1943 = vadd.f32 %v1289, %v1942
    %v1944 = vpop.f32.mrf.mxu0
    %1945 = vmatprep.mubr.bf16.mxu0 0
    %1946 = vmatmul.mubr.bf16.gmra.mxu0 %v1886
    %v1947 = vpop.f32.mrf.mxu0
    %v1948 = vadd.f32 %v1289, %v1947
    %v1949 = vpop.f32.mrf.mxu0
    %v1950 = vpop.f32.mrf.mxu0
    %v1951 = vadd.f32 %v1289, %v1950
    %v1952 = vpop.f32.mrf.mxu0
    %1953 = vmatprep.mubr.bf16.mxu0 0
    %1954 = vmatmul.mubr.bf16.gmra.mxu0 %v1887
    %v1955 = vpop.f32.mrf.mxu0
    %v1956 = vadd.f32 %v1289, %v1955
    %v1957 = vpop.f32.mrf.mxu0
    %v1958 = vpop.f32.mrf.mxu0
    %v1959 = vadd.f32 %v1289, %v1958
    %v1960 = vpop.f32.mrf.mxu0
    %1961 = vmatprep.mubr.bf16.mxu0 0
    %1962 = vmatmul.mubr.bf16.gmra.mxu0 %v1888
    %v1963 = vpop.f32.mrf.mxu0
    %v1964 = vadd.f32 %v1289, %v1963
    %v1965 = vpop.f32.mrf.mxu0
    %v1966 = vpop.f32.mrf.mxu0
    %v1967 = vadd.f32 %v1289, %v1966
    %v1968 = vpop.f32.mrf.mxu0
    %1969 = vdwg.mxu0
    %v1970 = vmax.f32 %v1924, 0.0
    %v1971 = vmax.f32 %v1927, 0.0
    %v1972 = vmax.f32 %v1932, 0.0
    %v1973 = vmax.f32 %v1935, 0.0
    %v1974 = vmax.f32 %v1940, 0.0
    %v1975 = vmax.f32 %v1943, 0.0
    %v1976 = vmax.f32 %v1948, 0.0
    %v1977 = vmax.f32 %v1951, 0.0
    %v1978 = vmax.f32 %v1956, 0.0
    %v1979 = vmax.f32 %v1959, 0.0
    %v1980 = vmax.f32 %v1964, 0.0
    %v1981 = vmax.f32 %v1967, 0.0
    %1982 = vst [vmem:[%s7 + $0xc0] sm:$0xff] %v1970
    %1983 = vst [vmem:[%s7 + $0xc8] sm:$0xff] %v1971
    %1984 = vst [vmem:[%s7 + $0xd0] sm:$0xff] %v1972
    %1985 = vst [vmem:[%s7 + $0xd8] sm:$0xff] %v1973
    %1986 = vst [vmem:[%s7 + $0xe0] sm:$0xff] %v1974
    %1987 = vst [vmem:[%s7 + $0xe8] sm:$0xff] %v1975
    %1988 = vst [vmem:[%s7 + $0xf0] sm:$0xff] %v1976
    %1989 = vst [vmem:[%s7 + $0xf8] sm:$0xff] %v1977
    %1990 = vst [vmem:[%s7 + $0x100] sm:$0xff] %v1978
    %1991 = vst [vmem:[%s7 + $0x108] sm:$0xff] %v1979
    %1992 = vst [vmem:[%s7 + $0x110] sm:$0xff] %v1980
    %1993 = vst [vmem:[%s7 + $0x118] sm:$0xff] %v1981
    %v1994 = vld [vmem:[#allocation7 + $0xc] sm:$0xf]
    %v1995 = vld [vmem:[#allocation7 + $0x4c] sm:$0xf]
    %v1996 = vld [vmem:[#allocation7 + $0x8c] sm:$0xf]
    %v1997 = vld [vmem:[#allocation7 + $0xcc] sm:$0xf]
    %v1998 = vld [vmem:[#allocation7 + $0x10c] sm:$0xf]
    %v1999 = vld [vmem:[#allocation7 + $0x14c] sm:$0xf]
    %v2000 = vld [vmem:[#allocation7 + $0x18c] sm:$0xf]
    %v2001 = vld [vmem:[#allocation7 + $0x1cc] sm:$0xf]
    %v2002 = vld [vmem:[#allocation7 + $0x20c] sm:$0xf]
    %v2003 = vld [vmem:[#allocation7 + $0x24c] sm:$0xf]
    %v2004 = vld [vmem:[#allocation7 + $0x28c] sm:$0xf]
    %v2005 = vld [vmem:[#allocation7 + $0x2cc] sm:$0xf]
    %v2006 = vld [vmem:[#allocation7 + $0x30c] sm:$0xf]
    %v2007 = vld [vmem:[#allocation7 + $0x34c] sm:$0xf]
    %v2008 = vld [vmem:[#allocation7 + $0x38c] sm:$0xf]
    %v2009 = vld [vmem:[#allocation7 + $0x3cc] sm:$0xf]
    %v2010 = vld [vmem:[#allocation8 + $0x3] sm:$0x1]
    %v2012 = vlaneseq
    %v2013 = vshrl.u32 %v2012, 7
    %v2014 = vsub.s32 0, %v2013
    %v2015 = vrot.slane %v2010, %v2014
    %v2033 = vunpack.c.l.b16 %v1994
    %v2034 = vunpack.c.l.b16 %v1995
    %v2035 = vunpack.c.l.b16 %v1996
    %v2036 = vunpack.c.l.b16 %v1997
    %v2037 = vunpack.c.l.b16 %v1998
    %v2038 = vunpack.c.l.b16 %v1999
    %v2039 = vunpack.c.l.b16 %v2000
    %v2040 = vunpack.c.l.b16 %v2001
    %v2041 = vunpack.c.l.b16 %v2002
    %v2042 = vunpack.c.l.b16 %v2003
    %v2043 = vunpack.c.l.b16 %v2004
    %v2044 = vunpack.c.l.b16 %v2005
    %v2045 = vunpack.c.l.b16 %v2006
    %v2046 = vunpack.c.l.b16 %v2007
    %v2047 = vunpack.c.l.b16 %v2008
    %v2048 = vunpack.c.l.b16 %v2009
    %v2049 = vpack.c.b16 %v2034, %v2033
    %v2050 = vpack.c.b16 %v2036, %v2035
    %v2051 = vpack.c.b16 %v2038, %v2037
    %v2052 = vpack.c.b16 %v2040, %v2039
    %v2053 = vpack.c.b16 %v2042, %v2041
    %v2054 = vpack.c.b16 %v2044, %v2043
    %v2055 = vpack.c.b16 %v2046, %v2045
    %v2056 = vpack.c.b16 %v2048, %v2047
    %2065 = vmatprep.subr.bf16.mxu0 0
    %2066 = vmatpush1.bf16.msra.mxu0 %v2056
    %2067 = vmatprep.subr.bf16.mxu0 0
    %2068 = vmatpush1.bf16.msra.mxu0 %v2055
    %2069 = vmatprep.subr.bf16.mxu0 0
    %2070 = vmatpush1.bf16.msra.mxu0 %v2054
    %2071 = vmatprep.subr.bf16.mxu0 0
    %2072 = vmatpush1.bf16.msra.mxu0 %v2053
    %2073 = vmatprep.subr.bf16.mxu0 0
    %2074 = vmatpush1.bf16.msra.mxu0 %v2052
    %2075 = vmatprep.subr.bf16.mxu0 0
    %2076 = vmatpush1.bf16.msra.mxu0 %v2051
    %2077 = vmatprep.subr.bf16.mxu0 0
    %2078 = vmatpush1.bf16.msra.mxu0 %v2050
    %2079 = vmatprep.subr.bf16.mxu0 0
    %2080 = vmatpush1.bf16.msra.mxu0 %v2049
    %2081 = vmatprep.subr.bf16.mxu0 0
    %2082 = vmatpush2.bf16.msra.mxu0 0
    %2083 = vmatprep.subr.bf16.mxu0 0
    %2084 = vmatpush2.bf16.msra.mxu0 0
    %2085 = vmatprep.subr.bf16.mxu0 0
    %2086 = vmatpush2.bf16.msra.mxu0 0
    %2087 = vmatprep.subr.bf16.mxu0 0
    %2088 = vmatpush2.bf16.msra.mxu0 0
    %2089 = vmatprep.subr.bf16.mxu0 0
    %2090 = vmatpush2.bf16.msra.mxu0 0
    %2091 = vmatprep.subr.bf16.mxu0 0
    %2092 = vmatpush2.bf16.msra.mxu0 0
    %2093 = vmatprep.subr.bf16.mxu0 0
    %2094 = vmatpush2.bf16.msra.mxu0 0
    %2095 = vmatprep.subr.bf16.mxu0 0
    %2096 = vmatpush2.bf16.msra.mxu0 0
    %2097 = vmatprep.mubr.bf16.mxu0 0
    %2098 = vmatmul.mubr.bf16.gmra.mxu0 %v1092
    %v2099 = vpop.f32.mrf.mxu0
    %v2100 = vadd.f32 %v2015, %v2099
    %v2101 = vpop.f32.mrf.mxu0
    %v2102 = vpop.f32.mrf.mxu0
    %v2103 = vadd.f32 %v2015, %v2102
    %v2104 = vpop.f32.mrf.mxu0
    %2105 = vmatprep.mubr.bf16.mxu0 0
    %2106 = vmatmul.mubr.bf16.gmra.mxu0 %v1093
    %v2107 = vpop.f32.mrf.mxu0
    %v2108 = vadd.f32 %v2015, %v2107
    %v2109 = vpop.f32.mrf.mxu0
    %v2110 = vpop.f32.mrf.mxu0
    %v2111 = vadd.f32 %v2015, %v2110
    %v2112 = vpop.f32.mrf.mxu0
    %2113 = vmatprep.mubr.bf16.mxu0 0
    %2114 = vmatmul.mubr.bf16.gmra.mxu0 %v1094
    %v2115 = vpop.f32.mrf.mxu0
    %v2116 = vadd.f32 %v2015, %v2115
    %v2117 = vpop.f32.mrf.mxu0
    %v2118 = vpop.f32.mrf.mxu0
    %v2119 = vadd.f32 %v2015, %v2118
    %v2120 = vpop.f32.mrf.mxu0
    %2121 = vmatprep.mubr.bf16.mxu0 0
    %2122 = vmatmul.mubr.bf16.gmra.mxu0 %v1095
    %v2123 = vpop.f32.mrf.mxu0
    %v2124 = vadd.f32 %v2015, %v2123
    %v2125 = vpop.f32.mrf.mxu0
    %v2126 = vpop.f32.mrf.mxu0
    %v2127 = vadd.f32 %v2015, %v2126
    %v2128 = vpop.f32.mrf.mxu0
    %2129 = vmatprep.mubr.bf16.mxu0 0
    %2130 = vmatmul.mubr.bf16.gmra.mxu0 %v1096
    %v2131 = vpop.f32.mrf.mxu0
    %v2132 = vadd.f32 %v2015, %v2131
    %v2133 = vpop.f32.mrf.mxu0
    %v2134 = vpop.f32.mrf.mxu0
    %v2135 = vadd.f32 %v2015, %v2134
    %v2136 = vpop.f32.mrf.mxu0
    %2137 = vmatprep.mubr.bf16.mxu0 0
    %2138 = vmatmul.mubr.bf16.gmra.mxu0 %v1097
    %v2139 = vpop.f32.mrf.mxu0
    %v2140 = vadd.f32 %v2015, %v2139
    %v2141 = vpop.f32.mrf.mxu0
    %v2142 = vpop.f32.mrf.mxu0
    %v2143 = vadd.f32 %v2015, %v2142
    %v2144 = vpop.f32.mrf.mxu0
    %2145 = vdwg.mxu0
    %v2146 = vmax.f32 %v2100, 0.0
    %v2147 = vmax.f32 %v2103, 0.0
    %v2148 = vmax.f32 %v2108, 0.0
    %v2149 = vmax.f32 %v2111, 0.0
    %v2150 = vmax.f32 %v2116, 0.0
    %v2151 = vmax.f32 %v2119, 0.0
    %v2152 = vmax.f32 %v2124, 0.0
    %v2153 = vmax.f32 %v2127, 0.0
    %v2154 = vmax.f32 %v2132, 0.0
    %v2155 = vmax.f32 %v2135, 0.0
    %v2156 = vmax.f32 %v2140, 0.0
    %v2157 = vmax.f32 %v2143, 0.0
    %v2158 = vpack.c.bf16 %v2147, %v2146
    %v2159 = vpack.c.bf16 %v2149, %v2148
    %v2160 = vpack.c.bf16 %v2151, %v2150
    %v2161 = vpack.c.bf16 %v2153, %v2152
    %v2162 = vpack.c.bf16 %v2155, %v2154
    %v2163 = vpack.c.bf16 %v2157, %v2156
    %2164 = vmatprep.subr.bf16.mxu0 0
    %2165 = vmatpush1.bf16.msra.mxu0 %v1330
    %2166 = vmatprep.subr.bf16.mxu0 0
    %2167 = vmatpush1.bf16.msra.mxu0 %v1329
    %2168 = vmatprep.subr.bf16.mxu0 0
    %2169 = vmatpush1.bf16.msra.mxu0 %v1328
    %2170 = vmatprep.subr.bf16.mxu0 0
    %2171 = vmatpush1.bf16.msra.mxu0 %v1327
    %2172 = vmatprep.subr.bf16.mxu0 0
    %2173 = vmatpush1.bf16.msra.mxu0 %v1326
    %2174 = vmatprep.subr.bf16.mxu0 0
    %2175 = vmatpush1.bf16.msra.mxu0 %v1325
    %2176 = vmatprep.subr.bf16.mxu0 0
    %2177 = vmatpush1.bf16.msra.mxu0 %v1324
    %2178 = vmatprep.subr.bf16.mxu0 0
    %2179 = vmatpush1.bf16.msra.mxu0 %v1323
    %2180 = vmatprep.subr.bf16.mxu0 0
    %2181 = vmatpush2.bf16.msra.mxu0 0
    %2182 = vmatprep.subr.bf16.mxu0 0
    %2183 = vmatpush2.bf16.msra.mxu0 0
    %2184 = vmatprep.subr.bf16.mxu0 0
    %2185 = vmatpush2.bf16.msra.mxu0 0
    %2186 = vmatprep.subr.bf16.mxu0 0
    %2187 = vmatpush2.bf16.msra.mxu0 0
    %2188 = vmatprep.subr.bf16.mxu0 0
    %2189 = vmatpush2.bf16.msra.mxu0 0
    %2190 = vmatprep.subr.bf16.mxu0 0
    %2191 = vmatpush2.bf16.msra.mxu0 0
    %2192 = vmatprep.subr.bf16.mxu0 0
    %2193 = vmatpush2.bf16.msra.mxu0 0
    %2194 = vmatprep.subr.bf16.mxu0 0
    %2195 = vmatpush2.bf16.msra.mxu0 0
    %2196 = vmatprep.mubr.bf16.mxu0 0
    %2197 = vmatmul.mubr.bf16.gmra.mxu0 %v2158
    %v2198 = vpop.f32.mrf.mxu0
    %v2199 = vadd.f32 %v1289, %v2198
    %v2200 = vpop.f32.mrf.mxu0
    %v2201 = vpop.f32.mrf.mxu0
    %v2202 = vadd.f32 %v1289, %v2201
    %v2203 = vpop.f32.mrf.mxu0
    %2204 = vmatprep.mubr.bf16.mxu0 0
    %2205 = vmatmul.mubr.bf16.gmra.mxu0 %v2159
    %v2206 = vpop.f32.mrf.mxu0
    %v2207 = vadd.f32 %v1289, %v2206
    %v2208 = vpop.f32.mrf.mxu0
    %v2209 = vpop.f32.mrf.mxu0
    %v2210 = vadd.f32 %v1289, %v2209
    %v2211 = vpop.f32.mrf.mxu0
    %2212 = vmatprep.mubr.bf16.mxu0 0
    %2213 = vmatmul.mubr.bf16.gmra.mxu0 %v2160
    %v2214 = vpop.f32.mrf.mxu0
    %v2215 = vadd.f32 %v1289, %v2214
    %v2216 = vpop.f32.mrf.mxu0
    %v2217 = vpop.f32.mrf.mxu0
    %v2218 = vadd.f32 %v1289, %v2217
    %v2219 = vpop.f32.mrf.mxu0
    %2220 = vmatprep.mubr.bf16.mxu0 0
    %2221 = vmatmul.mubr.bf16.gmra.mxu0 %v2161
    %v2222 = vpop.f32.mrf.mxu0
    %v2223 = vadd.f32 %v1289, %v2222
    %v2224 = vpop.f32.mrf.mxu0
    %v2225 = vpop.f32.mrf.mxu0
    %v2226 = vadd.f32 %v1289, %v2225
    %v2227 = vpop.f32.mrf.mxu0
    %2228 = vmatprep.mubr.bf16.mxu0 0
    %2229 = vmatmul.mubr.bf16.gmra.mxu0 %v2162
    %v2230 = vpop.f32.mrf.mxu0
    %v2231 = vadd.f32 %v1289, %v2230
    %v2232 = vpop.f32.mrf.mxu0
    %v2233 = vpop.f32.mrf.mxu0
    %v2234 = vadd.f32 %v1289, %v2233
    %v2235 = vpop.f32.mrf.mxu0
    %2236 = vmatprep.mubr.bf16.mxu0 0
    %2237 = vmatmul.mubr.bf16.gmra.mxu0 %v2163
    %v2238 = vpop.f32.mrf.mxu0
    %v2239 = vadd.f32 %v1289, %v2238
    %v2240 = vpop.f32.mrf.mxu0
    %v2241 = vpop.f32.mrf.mxu0
    %v2242 = vadd.f32 %v1289, %v2241
    %v2243 = vpop.f32.mrf.mxu0
    %2244 = vdwg.mxu0
    %v2245 = vmax.f32 %v2199, 0.0
    %v2246 = vmax.f32 %v2202, 0.0
    %v2247 = vmax.f32 %v2207, 0.0
    %v2248 = vmax.f32 %v2210, 0.0
    %v2249 = vmax.f32 %v2215, 0.0
    %v2250 = vmax.f32 %v2218, 0.0
    %v2251 = vmax.f32 %v2223, 0.0
    %v2252 = vmax.f32 %v2226, 0.0
    %v2253 = vmax.f32 %v2231, 0.0
    %v2254 = vmax.f32 %v2234, 0.0
    %v2255 = vmax.f32 %v2239, 0.0
    %v2256 = vmax.f32 %v2242, 0.0
    %2257 = vst [vmem:[%s7 + $0x120] sm:$0xff] %v2245
    %2258 = vst [vmem:[%s7 + $0x128] sm:$0xff] %v2246
    %2259 = vst [vmem:[%s7 + $0x130] sm:$0xff] %v2247
    %2260 = vst [vmem:[%s7 + $0x138] sm:$0xff] %v2248
    %2261 = vst [vmem:[%s7 + $0x140] sm:$0xff] %v2249
    %2262 = vst [vmem:[%s7 + $0x148] sm:$0xff] %v2250
    %2263 = vst [vmem:[%s7 + $0x150] sm:$0xff] %v2251
    %2264 = vst [vmem:[%s7 + $0x158] sm:$0xff] %v2252
    %2265 = vst [vmem:[%s7 + $0x160] sm:$0xff] %v2253
    %2266 = vst [vmem:[%s7 + $0x168] sm:$0xff] %v2254
    %2267 = vst [vmem:[%s7 + $0x170] sm:$0xff] %v2255
    %2268 = vst [vmem:[%s7 + $0x178] sm:$0xff] %v2256
    %v2269 = vld [vmem:[#allocation7 + $0x10] sm:$0xf]
    %v2270 = vld [vmem:[#allocation7 + $0x50] sm:$0xf]
    %v2271 = vld [vmem:[#allocation7 + $0x90] sm:$0xf]
    %v2272 = vld [vmem:[#allocation7 + $0xd0] sm:$0xf]
    %v2273 = vld [vmem:[#allocation7 + $0x110] sm:$0xf]
    %v2274 = vld [vmem:[#allocation7 + $0x150] sm:$0xf]
    %v2275 = vld [vmem:[#allocation7 + $0x190] sm:$0xf]
    %v2276 = vld [vmem:[#allocation7 + $0x1d0] sm:$0xf]
    %v2277 = vld [vmem:[#allocation7 + $0x210] sm:$0xf]
    %v2278 = vld [vmem:[#allocation7 + $0x250] sm:$0xf]
    %v2279 = vld [vmem:[#allocation7 + $0x290] sm:$0xf]
    %v2280 = vld [vmem:[#allocation7 + $0x2d0] sm:$0xf]
    %v2281 = vld [vmem:[#allocation7 + $0x310] sm:$0xf]
    %v2282 = vld [vmem:[#allocation7 + $0x350] sm:$0xf]
    %v2283 = vld [vmem:[#allocation7 + $0x390] sm:$0xf]
    %v2284 = vld [vmem:[#allocation7 + $0x3d0] sm:$0xf]
    %v2285 = vld [vmem:[#allocation8 + $0x4] sm:$0x1]
    %v2287 = vlaneseq
    %v2288 = vshrl.u32 %v2287, 7
    %v2289 = vsub.s32 0, %v2288
    %v2290 = vrot.slane %v2285, %v2289
    %v2308 = vunpack.c.l.b16 %v2269
    %v2309 = vunpack.c.l.b16 %v2270
    %v2310 = vunpack.c.l.b16 %v2271
    %v2311 = vunpack.c.l.b16 %v2272
    %v2312 = vunpack.c.l.b16 %v2273
    %v2313 = vunpack.c.l.b16 %v2274
    %v2314 = vunpack.c.l.b16 %v2275
    %v2315 = vunpack.c.l.b16 %v2276
    %v2316 = vunpack.c.l.b16 %v2277
    %v2317 = vunpack.c.l.b16 %v2278
    %v2318 = vunpack.c.l.b16 %v2279
    %v2319 = vunpack.c.l.b16 %v2280
    %v2320 = vunpack.c.l.b16 %v2281
    %v2321 = vunpack.c.l.b16 %v2282
    %v2322 = vunpack.c.l.b16 %v2283
    %v2323 = vunpack.c.l.b16 %v2284
    %v2324 = vpack.c.b16 %v2309, %v2308
    %v2325 = vpack.c.b16 %v2311, %v2310
    %v2326 = vpack.c.b16 %v2313, %v2312
    %v2327 = vpack.c.b16 %v2315, %v2314
    %v2328 = vpack.c.b16 %v2317, %v2316
    %v2329 = vpack.c.b16 %v2319, %v2318
    %v2330 = vpack.c.b16 %v2321, %v2320
    %v2331 = vpack.c.b16 %v2323, %v2322
    %2340 = vmatprep.subr.bf16.mxu0 0
    %2341 = vmatpush1.bf16.msra.mxu0 %v2331
    %2342 = vmatprep.subr.bf16.mxu0 0
    %2343 = vmatpush1.bf16.msra.mxu0 %v2330
    %2344 = vmatprep.subr.bf16.mxu0 0
    %2345 = vmatpush1.bf16.msra.mxu0 %v2329
    %2346 = vmatprep.subr.bf16.mxu0 0
    %2347 = vmatpush1.bf16.msra.mxu0 %v2328
    %2348 = vmatprep.subr.bf16.mxu0 0
    %2349 = vmatpush1.bf16.msra.mxu0 %v2327
    %2350 = vmatprep.subr.bf16.mxu0 0
    %2351 = vmatpush1.bf16.msra.mxu0 %v2326
    %2352 = vmatprep.subr.bf16.mxu0 0
    %2353 = vmatpush1.bf16.msra.mxu0 %v2325
    %2354 = vmatprep.subr.bf16.mxu0 0
    %2355 = vmatpush1.bf16.msra.mxu0 %v2324
    %2356 = vmatprep.subr.bf16.mxu0 0
    %2357 = vmatpush2.bf16.msra.mxu0 0
    %2358 = vmatprep.subr.bf16.mxu0 0
    %2359 = vmatpush2.bf16.msra.mxu0 0
    %2360 = vmatprep.subr.bf16.mxu0 0
    %2361 = vmatpush2.bf16.msra.mxu0 0
    %2362 = vmatprep.subr.bf16.mxu0 0
    %2363 = vmatpush2.bf16.msra.mxu0 0
    %2364 = vmatprep.subr.bf16.mxu0 0
    %2365 = vmatpush2.bf16.msra.mxu0 0
    %2366 = vmatprep.subr.bf16.mxu0 0
    %2367 = vmatpush2.bf16.msra.mxu0 0
    %2368 = vmatprep.subr.bf16.mxu0 0
    %2369 = vmatpush2.bf16.msra.mxu0 0
    %2370 = vmatprep.subr.bf16.mxu0 0
    %2371 = vmatpush2.bf16.msra.mxu0 0
    %2372 = vmatprep.mubr.bf16.mxu0 0
    %2373 = vmatmul.mubr.bf16.gmra.mxu0 %v1092
    %v2374 = vpop.f32.mrf.mxu0
    %v2375 = vadd.f32 %v2290, %v2374
    %v2376 = vpop.f32.mrf.mxu0
    %v2377 = vpop.f32.mrf.mxu0
    %v2378 = vadd.f32 %v2290, %v2377
    %v2379 = vpop.f32.mrf.mxu0
    %2380 = vmatprep.mubr.bf16.mxu0 0
    %2381 = vmatmul.mubr.bf16.gmra.mxu0 %v1093
    %v2382 = vpop.f32.mrf.mxu0
    %v2383 = vadd.f32 %v2290, %v2382
    %v2384 = vpop.f32.mrf.mxu0
    %v2385 = vpop.f32.mrf.mxu0
    %v2386 = vadd.f32 %v2290, %v2385
    %v2387 = vpop.f32.mrf.mxu0
    %2388 = vmatprep.mubr.bf16.mxu0 0
    %2389 = vmatmul.mubr.bf16.gmra.mxu0 %v1094
    %v2390 = vpop.f32.mrf.mxu0
    %v2391 = vadd.f32 %v2290, %v2390
    %v2392 = vpop.f32.mrf.mxu0
    %v2393 = vpop.f32.mrf.mxu0
    %v2394 = vadd.f32 %v2290, %v2393
    %v2395 = vpop.f32.mrf.mxu0
    %2396 = vmatprep.mubr.bf16.mxu0 0
    %2397 = vmatmul.mubr.bf16.gmra.mxu0 %v1095
    %v2398 = vpop.f32.mrf.mxu0
    %v2399 = vadd.f32 %v2290, %v2398
    %v2400 = vpop.f32.mrf.mxu0
    %v2401 = vpop.f32.mrf.mxu0
    %v2402 = vadd.f32 %v2290, %v2401
    %v2403 = vpop.f32.mrf.mxu0
    %2404 = vmatprep.mubr.bf16.mxu0 0
    %2405 = vmatmul.mubr.bf16.gmra.mxu0 %v1096
    %v2406 = vpop.f32.mrf.mxu0
    %v2407 = vadd.f32 %v2290, %v2406
    %v2408 = vpop.f32.mrf.mxu0
    %v2409 = vpop.f32.mrf.mxu0
    %v2410 = vadd.f32 %v2290, %v2409
    %v2411 = vpop.f32.mrf.mxu0
    %2412 = vmatprep.mubr.bf16.mxu0 0
    %2413 = vmatmul.mubr.bf16.gmra.mxu0 %v1097
    %v2414 = vpop.f32.mrf.mxu0
    %v2415 = vadd.f32 %v2290, %v2414
    %v2416 = vpop.f32.mrf.mxu0
    %v2417 = vpop.f32.mrf.mxu0
    %v2418 = vadd.f32 %v2290, %v2417
    %v2419 = vpop.f32.mrf.mxu0
    %2420 = vdwg.mxu0
    %v2421 = vmax.f32 %v2375, 0.0
    %v2422 = vmax.f32 %v2378, 0.0
    %v2423 = vmax.f32 %v2383, 0.0
    %v2424 = vmax.f32 %v2386, 0.0
    %v2425 = vmax.f32 %v2391, 0.0
    %v2426 = vmax.f32 %v2394, 0.0
    %v2427 = vmax.f32 %v2399, 0.0
    %v2428 = vmax.f32 %v2402, 0.0
    %v2429 = vmax.f32 %v2407, 0.0
    %v2430 = vmax.f32 %v2410, 0.0
    %v2431 = vmax.f32 %v2415, 0.0
    %v2432 = vmax.f32 %v2418, 0.0
    %v2433 = vpack.c.bf16 %v2422, %v2421
    %v2434 = vpack.c.bf16 %v2424, %v2423
    %v2435 = vpack.c.bf16 %v2426, %v2425
    %v2436 = vpack.c.bf16 %v2428, %v2427
    %v2437 = vpack.c.bf16 %v2430, %v2429
    %v2438 = vpack.c.bf16 %v2432, %v2431
    %2439 = vmatprep.subr.bf16.mxu0 0
    %2440 = vmatpush1.bf16.msra.mxu0 %v1330
    %2441 = vmatprep.subr.bf16.mxu0 0
    %2442 = vmatpush1.bf16.msra.mxu0 %v1329
    %2443 = vmatprep.subr.bf16.mxu0 0
    %2444 = vmatpush1.bf16.msra.mxu0 %v1328
    %2445 = vmatprep.subr.bf16.mxu0 0
    %2446 = vmatpush1.bf16.msra.mxu0 %v1327
    %2447 = vmatprep.subr.bf16.mxu0 0
    %2448 = vmatpush1.bf16.msra.mxu0 %v1326
    %2449 = vmatprep.subr.bf16.mxu0 0
    %2450 = vmatpush1.bf16.msra.mxu0 %v1325
    %2451 = vmatprep.subr.bf16.mxu0 0
    %2452 = vmatpush1.bf16.msra.mxu0 %v1324
    %2453 = vmatprep.subr.bf16.mxu0 0
    %2454 = vmatpush1.bf16.msra.mxu0 %v1323
    %2455 = vmatprep.subr.bf16.mxu0 0
    %2456 = vmatpush2.bf16.msra.mxu0 0
    %2457 = vmatprep.subr.bf16.mxu0 0
    %2458 = vmatpush2.bf16.msra.mxu0 0
    %2459 = vmatprep.subr.bf16.mxu0 0
    %2460 = vmatpush2.bf16.msra.mxu0 0
    %2461 = vmatprep.subr.bf16.mxu0 0
    %2462 = vmatpush2.bf16.msra.mxu0 0
    %2463 = vmatprep.subr.bf16.mxu0 0
    %2464 = vmatpush2.bf16.msra.mxu0 0
    %2465 = vmatprep.subr.bf16.mxu0 0
    %2466 = vmatpush2.bf16.msra.mxu0 0
    %2467 = vmatprep.subr.bf16.mxu0 0
    %2468 = vmatpush2.bf16.msra.mxu0 0
    %2469 = vmatprep.subr.bf16.mxu0 0
    %2470 = vmatpush2.bf16.msra.mxu0 0
    %2471 = vmatprep.mubr.bf16.mxu0 0
    %2472 = vmatmul.mubr.bf16.gmra.mxu0 %v2433
    %v2473 = vpop.f32.mrf.mxu0
    %v2474 = vadd.f32 %v1289, %v2473
    %v2475 = vpop.f32.mrf.mxu0
    %v2476 = vpop.f32.mrf.mxu0
    %v2477 = vadd.f32 %v1289, %v2476
    %v2478 = vpop.f32.mrf.mxu0
    %2479 = vmatprep.mubr.bf16.mxu0 0
    %2480 = vmatmul.mubr.bf16.gmra.mxu0 %v2434
    %v2481 = vpop.f32.mrf.mxu0
    %v2482 = vadd.f32 %v1289, %v2481
    %v2483 = vpop.f32.mrf.mxu0
    %v2484 = vpop.f32.mrf.mxu0
    %v2485 = vadd.f32 %v1289, %v2484
    %v2486 = vpop.f32.mrf.mxu0
    %2487 = vmatprep.mubr.bf16.mxu0 0
    %2488 = vmatmul.mubr.bf16.gmra.mxu0 %v2435
    %v2489 = vpop.f32.mrf.mxu0
    %v2490 = vadd.f32 %v1289, %v2489
    %v2491 = vpop.f32.mrf.mxu0
    %v2492 = vpop.f32.mrf.mxu0
    %v2493 = vadd.f32 %v1289, %v2492
    %v2494 = vpop.f32.mrf.mxu0
    %2495 = vmatprep.mubr.bf16.mxu0 0
    %2496 = vmatmul.mubr.bf16.gmra.mxu0 %v2436
    %v2497 = vpop.f32.mrf.mxu0
    %v2498 = vadd.f32 %v1289, %v2497
    %v2499 = vpop.f32.mrf.mxu0
    %v2500 = vpop.f32.mrf.mxu0
    %v2501 = vadd.f32 %v1289, %v2500
    %v2502 = vpop.f32.mrf.mxu0
    %2503 = vmatprep.mubr.bf16.mxu0 0
    %2504 = vmatmul.mubr.bf16.gmra.mxu0 %v2437
    %v2505 = vpop.f32.mrf.mxu0
    %v2506 = vadd.f32 %v1289, %v2505
    %v2507 = vpop.f32.mrf.mxu0
    %v2508 = vpop.f32.mrf.mxu0
    %v2509 = vadd.f32 %v1289, %v2508
    %v2510 = vpop.f32.mrf.mxu0
    %2511 = vmatprep.mubr.bf16.mxu0 0
    %2512 = vmatmul.mubr.bf16.gmra.mxu0 %v2438
    %v2513 = vpop.f32.mrf.mxu0
    %v2514 = vadd.f32 %v1289, %v2513
    %v2515 = vpop.f32.mrf.mxu0
    %v2516 = vpop.f32.mrf.mxu0
    %v2517 = vadd.f32 %v1289, %v2516
    %v2518 = vpop.f32.mrf.mxu0
    %2519 = vdwg.mxu0
    %v2520 = vmax.f32 %v2474, 0.0
    %v2521 = vmax.f32 %v2477, 0.0
    %v2522 = vmax.f32 %v2482, 0.0
    %v2523 = vmax.f32 %v2485, 0.0
    %v2524 = vmax.f32 %v2490, 0.0
    %v2525 = vmax.f32 %v2493, 0.0
    %v2526 = vmax.f32 %v2498, 0.0
    %v2527 = vmax.f32 %v2501, 0.0
    %v2528 = vmax.f32 %v2506, 0.0
    %v2529 = vmax.f32 %v2509, 0.0
    %v2530 = vmax.f32 %v2514, 0.0
    %v2531 = vmax.f32 %v2517, 0.0
    %2532 = vst [vmem:[%s7 + $0x180] sm:$0xff] %v2520
    %2533 = vst [vmem:[%s7 + $0x188] sm:$0xff] %v2521
    %2534 = vst [vmem:[%s7 + $0x190] sm:$0xff] %v2522
    %2535 = vst [vmem:[%s7 + $0x198] sm:$0xff] %v2523
    %2536 = vst [vmem:[%s7 + $0x1a0] sm:$0xff] %v2524
    %2537 = vst [vmem:[%s7 + $0x1a8] sm:$0xff] %v2525
    %2538 = vst [vmem:[%s7 + $0x1b0] sm:$0xff] %v2526
    %2539 = vst [vmem:[%s7 + $0x1b8] sm:$0xff] %v2527
    %2540 = vst [vmem:[%s7 + $0x1c0] sm:$0xff] %v2528
    %2541 = vst [vmem:[%s7 + $0x1c8] sm:$0xff] %v2529
    %2542 = vst [vmem:[%s7 + $0x1d0] sm:$0xff] %v2530
    %2543 = vst [vmem:[%s7 + $0x1d8] sm:$0xff] %v2531
    %v2544 = vld [vmem:[#allocation7 + $0x14] sm:$0xf]
    %v2545 = vld [vmem:[#allocation7 + $0x54] sm:$0xf]
    %v2546 = vld [vmem:[#allocation7 + $0x94] sm:$0xf]
    %v2547 = vld [vmem:[#allocation7 + $0xd4] sm:$0xf]
    %v2548 = vld [vmem:[#allocation7 + $0x114] sm:$0xf]
    %v2549 = vld [vmem:[#allocation7 + $0x154] sm:$0xf]
    %v2550 = vld [vmem:[#allocation7 + $0x194] sm:$0xf]
    %v2551 = vld [vmem:[#allocation7 + $0x1d4] sm:$0xf]
    %v2552 = vld [vmem:[#allocation7 + $0x214] sm:$0xf]
    %v2553 = vld [vmem:[#allocation7 + $0x254] sm:$0xf]
    %v2554 = vld [vmem:[#allocation7 + $0x294] sm:$0xf]
    %v2555 = vld [vmem:[#allocation7 + $0x2d4] sm:$0xf]
    %v2556 = vld [vmem:[#allocation7 + $0x314] sm:$0xf]
    %v2557 = vld [vmem:[#allocation7 + $0x354] sm:$0xf]
    %v2558 = vld [vmem:[#allocation7 + $0x394] sm:$0xf]
    %v2559 = vld [vmem:[#allocation7 + $0x3d4] sm:$0xf]
    %v2560 = vld [vmem:[#allocation8 + $0x5] sm:$0x1]
    %v2562 = vlaneseq
    %v2563 = vshrl.u32 %v2562, 7
    %v2564 = vsub.s32 0, %v2563
    %v2565 = vrot.slane %v2560, %v2564
    %v2583 = vunpack.c.l.b16 %v2544
    %v2584 = vunpack.c.l.b16 %v2545
    %v2585 = vunpack.c.l.b16 %v2546
    %v2586 = vunpack.c.l.b16 %v2547
    %v2587 = vunpack.c.l.b16 %v2548
    %v2588 = vunpack.c.l.b16 %v2549
    %v2589 = vunpack.c.l.b16 %v2550
    %v2590 = vunpack.c.l.b16 %v2551
    %v2591 = vunpack.c.l.b16 %v2552
    %v2592 = vunpack.c.l.b16 %v2553
    %v2593 = vunpack.c.l.b16 %v2554
    %v2594 = vunpack.c.l.b16 %v2555
    %v2595 = vunpack.c.l.b16 %v2556
    %v2596 = vunpack.c.l.b16 %v2557
    %v2597 = vunpack.c.l.b16 %v2558
    %v2598 = vunpack.c.l.b16 %v2559
    %v2599 = vpack.c.b16 %v2584, %v2583
    %v2600 = vpack.c.b16 %v2586, %v2585
    %v2601 = vpack.c.b16 %v2588, %v2587
    %v2602 = vpack.c.b16 %v2590, %v2589
    %v2603 = vpack.c.b16 %v2592, %v2591
    %v2604 = vpack.c.b16 %v2594, %v2593
    %v2605 = vpack.c.b16 %v2596, %v2595
    %v2606 = vpack.c.b16 %v2598, %v2597
    %2615 = vmatprep.subr.bf16.mxu0 0
    %2616 = vmatpush1.bf16.msra.mxu0 %v2606
    %2617 = vmatprep.subr.bf16.mxu0 0
    %2618 = vmatpush1.bf16.msra.mxu0 %v2605
    %2619 = vmatprep.subr.bf16.mxu0 0
    %2620 = vmatpush1.bf16.msra.mxu0 %v2604
    %2621 = vmatprep.subr.bf16.mxu0 0
    %2622 = vmatpush1.bf16.msra.mxu0 %v2603
    %2623 = vmatprep.subr.bf16.mxu0 0
    %2624 = vmatpush1.bf16.msra.mxu0 %v2602
    %2625 = vmatprep.subr.bf16.mxu0 0
    %2626 = vmatpush1.bf16.msra.mxu0 %v2601
    %2627 = vmatprep.subr.bf16.mxu0 0
    %2628 = vmatpush1.bf16.msra.mxu0 %v2600
    %2629 = vmatprep.subr.bf16.mxu0 0
    %2630 = vmatpush1.bf16.msra.mxu0 %v2599
    %2631 = vmatprep.subr.bf16.mxu0 0
    %2632 = vmatpush2.bf16.msra.mxu0 0
    %2633 = vmatprep.subr.bf16.mxu0 0
    %2634 = vmatpush2.bf16.msra.mxu0 0
    %2635 = vmatprep.subr.bf16.mxu0 0
    %2636 = vmatpush2.bf16.msra.mxu0 0
    %2637 = vmatprep.subr.bf16.mxu0 0
    %2638 = vmatpush2.bf16.msra.mxu0 0
    %2639 = vmatprep.subr.bf16.mxu0 0
    %2640 = vmatpush2.bf16.msra.mxu0 0
    %2641 = vmatprep.subr.bf16.mxu0 0
    %2642 = vmatpush2.bf16.msra.mxu0 0
    %2643 = vmatprep.subr.bf16.mxu0 0
    %2644 = vmatpush2.bf16.msra.mxu0 0
    %2645 = vmatprep.subr.bf16.mxu0 0
    %2646 = vmatpush2.bf16.msra.mxu0 0
    %2647 = vmatprep.mubr.bf16.mxu0 0
    %2648 = vmatmul.mubr.bf16.gmra.mxu0 %v1092
    %v2649 = vpop.f32.mrf.mxu0
    %v2650 = vadd.f32 %v2565, %v2649
    %v2651 = vpop.f32.mrf.mxu0
    %v2652 = vpop.f32.mrf.mxu0
    %v2653 = vadd.f32 %v2565, %v2652
    %v2654 = vpop.f32.mrf.mxu0
    %2655 = vmatprep.mubr.bf16.mxu0 0
    %2656 = vmatmul.mubr.bf16.gmra.mxu0 %v1093
    %v2657 = vpop.f32.mrf.mxu0
    %v2658 = vadd.f32 %v2565, %v2657
    %v2659 = vpop.f32.mrf.mxu0
    %v2660 = vpop.f32.mrf.mxu0
    %v2661 = vadd.f32 %v2565, %v2660
    %v2662 = vpop.f32.mrf.mxu0
    %2663 = vmatprep.mubr.bf16.mxu0 0
    %2664 = vmatmul.mubr.bf16.gmra.mxu0 %v1094
    %v2665 = vpop.f32.mrf.mxu0
    %v2666 = vadd.f32 %v2565, %v2665
    %v2667 = vpop.f32.mrf.mxu0
    %v2668 = vpop.f32.mrf.mxu0
    %v2669 = vadd.f32 %v2565, %v2668
    %v2670 = vpop.f32.mrf.mxu0
    %2671 = vmatprep.mubr.bf16.mxu0 0
    %2672 = vmatmul.mubr.bf16.gmra.mxu0 %v1095
    %v2673 = vpop.f32.mrf.mxu0
    %v2674 = vadd.f32 %v2565, %v2673
    %v2675 = vpop.f32.mrf.mxu0
    %v2676 = vpop.f32.mrf.mxu0
    %v2677 = vadd.f32 %v2565, %v2676
    %v2678 = vpop.f32.mrf.mxu0
    %2679 = vmatprep.mubr.bf16.mxu0 0
    %2680 = vmatmul.mubr.bf16.gmra.mxu0 %v1096
    %v2681 = vpop.f32.mrf.mxu0
    %v2682 = vadd.f32 %v2565, %v2681
    %v2683 = vpop.f32.mrf.mxu0
    %v2684 = vpop.f32.mrf.mxu0
    %v2685 = vadd.f32 %v2565, %v2684
    %v2686 = vpop.f32.mrf.mxu0
    %2687 = vmatprep.mubr.bf16.mxu0 0
    %2688 = vmatmul.mubr.bf16.gmra.mxu0 %v1097
    %v2689 = vpop.f32.mrf.mxu0
    %v2690 = vadd.f32 %v2565, %v2689
    %v2691 = vpop.f32.mrf.mxu0
    %v2692 = vpop.f32.mrf.mxu0
    %v2693 = vadd.f32 %v2565, %v2692
    %v2694 = vpop.f32.mrf.mxu0
    %2695 = vdwg.mxu0
    %v2696 = vmax.f32 %v2650, 0.0
    %v2697 = vmax.f32 %v2653, 0.0
    %v2698 = vmax.f32 %v2658, 0.0
    %v2699 = vmax.f32 %v2661, 0.0
    %v2700 = vmax.f32 %v2666, 0.0
    %v2701 = vmax.f32 %v2669, 0.0
    %v2702 = vmax.f32 %v2674, 0.0
    %v2703 = vmax.f32 %v2677, 0.0
    %v2704 = vmax.f32 %v2682, 0.0
    %v2705 = vmax.f32 %v2685, 0.0
    %v2706 = vmax.f32 %v2690, 0.0
    %v2707 = vmax.f32 %v2693, 0.0
    %v2708 = vpack.c.bf16 %v2697, %v2696
    %v2709 = vpack.c.bf16 %v2699, %v2698
    %v2710 = vpack.c.bf16 %v2701, %v2700
    %v2711 = vpack.c.bf16 %v2703, %v2702
    %v2712 = vpack.c.bf16 %v2705, %v2704
    %v2713 = vpack.c.bf16 %v2707, %v2706
    %2714 = vmatprep.subr.bf16.mxu0 0
    %2715 = vmatpush1.bf16.msra.mxu0 %v1330
    %2716 = vmatprep.subr.bf16.mxu0 0
    %2717 = vmatpush1.bf16.msra.mxu0 %v1329
    %2718 = vmatprep.subr.bf16.mxu0 0
    %2719 = vmatpush1.bf16.msra.mxu0 %v1328
    %2720 = vmatprep.subr.bf16.mxu0 0
    %2721 = vmatpush1.bf16.msra.mxu0 %v1327
    %2722 = vmatprep.subr.bf16.mxu0 0
    %2723 = vmatpush1.bf16.msra.mxu0 %v1326
    %2724 = vmatprep.subr.bf16.mxu0 0
    %2725 = vmatpush1.bf16.msra.mxu0 %v1325
    %2726 = vmatprep.subr.bf16.mxu0 0
    %2727 = vmatpush1.bf16.msra.mxu0 %v1324
    %2728 = vmatprep.subr.bf16.mxu0 0
    %2729 = vmatpush1.bf16.msra.mxu0 %v1323
    %2730 = vmatprep.subr.bf16.mxu0 0
    %2731 = vmatpush2.bf16.msra.mxu0 0
    %2732 = vmatprep.subr.bf16.mxu0 0
    %2733 = vmatpush2.bf16.msra.mxu0 0
    %2734 = vmatprep.subr.bf16.mxu0 0
    %2735 = vmatpush2.bf16.msra.mxu0 0
    %2736 = vmatprep.subr.bf16.mxu0 0
    %2737 = vmatpush2.bf16.msra.mxu0 0
    %2738 = vmatprep.subr.bf16.mxu0 0
    %2739 = vmatpush2.bf16.msra.mxu0 0
    %2740 = vmatprep.subr.bf16.mxu0 0
    %2741 = vmatpush2.bf16.msra.mxu0 0
    %2742 = vmatprep.subr.bf16.mxu0 0
    %2743 = vmatpush2.bf16.msra.mxu0 0
    %2744 = vmatprep.subr.bf16.mxu0 0
    %2745 = vmatpush2.bf16.msra.mxu0 0
    %2746 = vmatprep.mubr.bf16.mxu0 0
    %2747 = vmatmul.mubr.bf16.gmra.mxu0 %v2708
    %v2748 = vpop.f32.mrf.mxu0
    %v2749 = vadd.f32 %v1289, %v2748
    %v2750 = vpop.f32.mrf.mxu0
    %v2751 = vpop.f32.mrf.mxu0
    %v2752 = vadd.f32 %v1289, %v2751
    %v2753 = vpop.f32.mrf.mxu0
    %2754 = vmatprep.mubr.bf16.mxu0 0
    %2755 = vmatmul.mubr.bf16.gmra.mxu0 %v2709
    %v2756 = vpop.f32.mrf.mxu0
    %v2757 = vadd.f32 %v1289, %v2756
    %v2758 = vpop.f32.mrf.mxu0
    %v2759 = vpop.f32.mrf.mxu0
    %v2760 = vadd.f32 %v1289, %v2759
    %v2761 = vpop.f32.mrf.mxu0
    %2762 = vmatprep.mubr.bf16.mxu0 0
    %2763 = vmatmul.mubr.bf16.gmra.mxu0 %v2710
    %v2764 = vpop.f32.mrf.mxu0
    %v2765 = vadd.f32 %v1289, %v2764
    %v2766 = vpop.f32.mrf.mxu0
    %v2767 = vpop.f32.mrf.mxu0
    %v2768 = vadd.f32 %v1289, %v2767
    %v2769 = vpop.f32.mrf.mxu0
    %2770 = vmatprep.mubr.bf16.mxu0 0
    %2771 = vmatmul.mubr.bf16.gmra.mxu0 %v2711
    %v2772 = vpop.f32.mrf.mxu0
    %v2773 = vadd.f32 %v1289, %v2772
    %v2774 = vpop.f32.mrf.mxu0
    %v2775 = vpop.f32.mrf.mxu0
    %v2776 = vadd.f32 %v1289, %v2775
    %v2777 = vpop.f32.mrf.mxu0
    %2778 = vmatprep.mubr.bf16.mxu0 0
    %2779 = vmatmul.mubr.bf16.gmra.mxu0 %v2712
    %v2780 = vpop.f32.mrf.mxu0
    %v2781 = vadd.f32 %v1289, %v2780
    %v2782 = vpop.f32.mrf.mxu0
    %v2783 = vpop.f32.mrf.mxu0
    %v2784 = vadd.f32 %v1289, %v2783
    %v2785 = vpop.f32.mrf.mxu0
    %2786 = vmatprep.mubr.bf16.mxu0 0
    %2787 = vmatmul.mubr.bf16.gmra.mxu0 %v2713
    %v2788 = vpop.f32.mrf.mxu0
    %v2789 = vadd.f32 %v1289, %v2788
    %v2790 = vpop.f32.mrf.mxu0
    %v2791 = vpop.f32.mrf.mxu0
    %v2792 = vadd.f32 %v1289, %v2791
    %v2793 = vpop.f32.mrf.mxu0
    %2794 = vdwg.mxu0
    %v2795 = vmax.f32 %v2749, 0.0
    %v2796 = vmax.f32 %v2752, 0.0
    %v2797 = vmax.f32 %v2757, 0.0
    %v2798 = vmax.f32 %v2760, 0.0
    %v2799 = vmax.f32 %v2765, 0.0
    %v2800 = vmax.f32 %v2768, 0.0
    %v2801 = vmax.f32 %v2773, 0.0
    %v2802 = vmax.f32 %v2776, 0.0
    %v2803 = vmax.f32 %v2781, 0.0
    %v2804 = vmax.f32 %v2784, 0.0
    %v2805 = vmax.f32 %v2789, 0.0
    %v2806 = vmax.f32 %v2792, 0.0
    %2807 = vst [vmem:[%s7 + $0x1e0] sm:$0xff] %v2795
    %2808 = vst [vmem:[%s7 + $0x1e8] sm:$0xff] %v2796
    %2809 = vst [vmem:[%s7 + $0x1f0] sm:$0xff] %v2797
    %2810 = vst [vmem:[%s7 + $0x1f8] sm:$0xff] %v2798
    %2811 = vst [vmem:[%s7 + $0x200] sm:$0xff] %v2799
    %2812 = vst [vmem:[%s7 + $0x208] sm:$0xff] %v2800
    %2813 = vst [vmem:[%s7 + $0x210] sm:$0xff] %v2801
    %2814 = vst [vmem:[%s7 + $0x218] sm:$0xff] %v2802
    %2815 = vst [vmem:[%s7 + $0x220] sm:$0xff] %v2803
    %2816 = vst [vmem:[%s7 + $0x228] sm:$0xff] %v2804
    %2817 = vst [vmem:[%s7 + $0x230] sm:$0xff] %v2805
    %2818 = vst [vmem:[%s7 + $0x238] sm:$0xff] %v2806
    %v2819 = vld [vmem:[#allocation7 + $0x18] sm:$0xf]
    %v2820 = vld [vmem:[#allocation7 + $0x58] sm:$0xf]
    %v2821 = vld [vmem:[#allocation7 + $0x98] sm:$0xf]
    %v2822 = vld [vmem:[#allocation7 + $0xd8] sm:$0xf]
    %v2823 = vld [vmem:[#allocation7 + $0x118] sm:$0xf]
    %v2824 = vld [vmem:[#allocation7 + $0x158] sm:$0xf]
    %v2825 = vld [vmem:[#allocation7 + $0x198] sm:$0xf]
    %v2826 = vld [vmem:[#allocation7 + $0x1d8] sm:$0xf]
    %v2827 = vld [vmem:[#allocation7 + $0x218] sm:$0xf]
    %v2828 = vld [vmem:[#allocation7 + $0x258] sm:$0xf]
    %v2829 = vld [vmem:[#allocation7 + $0x298] sm:$0xf]
    %v2830 = vld [vmem:[#allocation7 + $0x2d8] sm:$0xf]
    %v2831 = vld [vmem:[#allocation7 + $0x318] sm:$0xf]
    %v2832 = vld [vmem:[#allocation7 + $0x358] sm:$0xf]
    %v2833 = vld [vmem:[#allocation7 + $0x398] sm:$0xf]
    %v2834 = vld [vmem:[#allocation7 + $0x3d8] sm:$0xf]
    %v2835 = vld [vmem:[#allocation8 + $0x6] sm:$0x1]
    %v2837 = vlaneseq
    %v2838 = vshrl.u32 %v2837, 7
    %v2839 = vsub.s32 0, %v2838
    %v2840 = vrot.slane %v2835, %v2839
    %v2858 = vunpack.c.l.b16 %v2819
    %v2859 = vunpack.c.l.b16 %v2820
    %v2860 = vunpack.c.l.b16 %v2821
    %v2861 = vunpack.c.l.b16 %v2822
    %v2862 = vunpack.c.l.b16 %v2823
    %v2863 = vunpack.c.l.b16 %v2824
    %v2864 = vunpack.c.l.b16 %v2825
    %v2865 = vunpack.c.l.b16 %v2826
    %v2866 = vunpack.c.l.b16 %v2827
    %v2867 = vunpack.c.l.b16 %v2828
    %v2868 = vunpack.c.l.b16 %v2829
    %v2869 = vunpack.c.l.b16 %v2830
    %v2870 = vunpack.c.l.b16 %v2831
    %v2871 = vunpack.c.l.b16 %v2832
    %v2872 = vunpack.c.l.b16 %v2833
    %v2873 = vunpack.c.l.b16 %v2834
    %v2874 = vpack.c.b16 %v2859, %v2858
    %v2875 = vpack.c.b16 %v2861, %v2860
    %v2876 = vpack.c.b16 %v2863, %v2862
    %v2877 = vpack.c.b16 %v2865, %v2864
    %v2878 = vpack.c.b16 %v2867, %v2866
    %v2879 = vpack.c.b16 %v2869, %v2868
    %v2880 = vpack.c.b16 %v2871, %v2870
    %v2881 = vpack.c.b16 %v2873, %v2872
    %2890 = vmatprep.subr.bf16.mxu0 0
    %2891 = vmatpush1.bf16.msra.mxu0 %v2881
    %2892 = vmatprep.subr.bf16.mxu0 0
    %2893 = vmatpush1.bf16.msra.mxu0 %v2880
    %2894 = vmatprep.subr.bf16.mxu0 0
    %2895 = vmatpush1.bf16.msra.mxu0 %v2879
    %2896 = vmatprep.subr.bf16.mxu0 0
    %2897 = vmatpush1.bf16.msra.mxu0 %v2878
    %2898 = vmatprep.subr.bf16.mxu0 0
    %2899 = vmatpush1.bf16.msra.mxu0 %v2877
    %2900 = vmatprep.subr.bf16.mxu0 0
    %2901 = vmatpush1.bf16.msra.mxu0 %v2876
    %2902 = vmatprep.subr.bf16.mxu0 0
    %2903 = vmatpush1.bf16.msra.mxu0 %v2875
    %2904 = vmatprep.subr.bf16.mxu0 0
    %2905 = vmatpush1.bf16.msra.mxu0 %v2874
    %2906 = vmatprep.subr.bf16.mxu0 0
    %2907 = vmatpush2.bf16.msra.mxu0 0
    %2908 = vmatprep.subr.bf16.mxu0 0
    %2909 = vmatpush2.bf16.msra.mxu0 0
    %2910 = vmatprep.subr.bf16.mxu0 0
    %2911 = vmatpush2.bf16.msra.mxu0 0
    %2912 = vmatprep.subr.bf16.mxu0 0
    %2913 = vmatpush2.bf16.msra.mxu0 0
    %2914 = vmatprep.subr.bf16.mxu0 0
    %2915 = vmatpush2.bf16.msra.mxu0 0
    %2916 = vmatprep.subr.bf16.mxu0 0
    %2917 = vmatpush2.bf16.msra.mxu0 0
    %2918 = vmatprep.subr.bf16.mxu0 0
    %2919 = vmatpush2.bf16.msra.mxu0 0
    %2920 = vmatprep.subr.bf16.mxu0 0
    %2921 = vmatpush2.bf16.msra.mxu0 0
    %2922 = vmatprep.mubr.bf16.mxu0 0
    %2923 = vmatmul.mubr.bf16.gmra.mxu0 %v1092
    %v2924 = vpop.f32.mrf.mxu0
    %v2925 = vadd.f32 %v2840, %v2924
    %v2926 = vpop.f32.mrf.mxu0
    %v2927 = vpop.f32.mrf.mxu0
    %v2928 = vadd.f32 %v2840, %v2927
    %v2929 = vpop.f32.mrf.mxu0
    %2930 = vmatprep.mubr.bf16.mxu0 0
    %2931 = vmatmul.mubr.bf16.gmra.mxu0 %v1093
    %v2932 = vpop.f32.mrf.mxu0
    %v2933 = vadd.f32 %v2840, %v2932
    %v2934 = vpop.f32.mrf.mxu0
    %v2935 = vpop.f32.mrf.mxu0
    %v2936 = vadd.f32 %v2840, %v2935
    %v2937 = vpop.f32.mrf.mxu0
    %2938 = vmatprep.mubr.bf16.mxu0 0
    %2939 = vmatmul.mubr.bf16.gmra.mxu0 %v1094
    %v2940 = vpop.f32.mrf.mxu0
    %v2941 = vadd.f32 %v2840, %v2940
    %v2942 = vpop.f32.mrf.mxu0
    %v2943 = vpop.f32.mrf.mxu0
    %v2944 = vadd.f32 %v2840, %v2943
    %v2945 = vpop.f32.mrf.mxu0
    %2946 = vmatprep.mubr.bf16.mxu0 0
    %2947 = vmatmul.mubr.bf16.gmra.mxu0 %v1095
    %v2948 = vpop.f32.mrf.mxu0
    %v2949 = vadd.f32 %v2840, %v2948
    %v2950 = vpop.f32.mrf.mxu0
    %v2951 = vpop.f32.mrf.mxu0
    %v2952 = vadd.f32 %v2840, %v2951
    %v2953 = vpop.f32.mrf.mxu0
    %2954 = vmatprep.mubr.bf16.mxu0 0
    %2955 = vmatmul.mubr.bf16.gmra.mxu0 %v1096
    %v2956 = vpop.f32.mrf.mxu0
    %v2957 = vadd.f32 %v2840, %v2956
    %v2958 = vpop.f32.mrf.mxu0
    %v2959 = vpop.f32.mrf.mxu0
    %v2960 = vadd.f32 %v2840, %v2959
    %v2961 = vpop.f32.mrf.mxu0
    %2962 = vmatprep.mubr.bf16.mxu0 0
    %2963 = vmatmul.mubr.bf16.gmra.mxu0 %v1097
    %v2964 = vpop.f32.mrf.mxu0
    %v2965 = vadd.f32 %v2840, %v2964
    %v2966 = vpop.f32.mrf.mxu0
    %v2967 = vpop.f32.mrf.mxu0
    %v2968 = vadd.f32 %v2840, %v2967
    %v2969 = vpop.f32.mrf.mxu0
    %2970 = vdwg.mxu0
    %v2971 = vmax.f32 %v2925, 0.0
    %v2972 = vmax.f32 %v2928, 0.0
    %v2973 = vmax.f32 %v2933, 0.0
    %v2974 = vmax.f32 %v2936, 0.0
    %v2975 = vmax.f32 %v2941, 0.0
    %v2976 = vmax.f32 %v2944, 0.0
    %v2977 = vmax.f32 %v2949, 0.0
    %v2978 = vmax.f32 %v2952, 0.0
    %v2979 = vmax.f32 %v2957, 0.0
    %v2980 = vmax.f32 %v2960, 0.0
    %v2981 = vmax.f32 %v2965, 0.0
    %v2982 = vmax.f32 %v2968, 0.0
    %v2983 = vpack.c.bf16 %v2972, %v2971
    %v2984 = vpack.c.bf16 %v2974, %v2973
    %v2985 = vpack.c.bf16 %v2976, %v2975
    %v2986 = vpack.c.bf16 %v2978, %v2977
    %v2987 = vpack.c.bf16 %v2980, %v2979
    %v2988 = vpack.c.bf16 %v2982, %v2981
    %2989 = vmatprep.subr.bf16.mxu0 0
    %2990 = vmatpush1.bf16.msra.mxu0 %v1330
    %2991 = vmatprep.subr.bf16.mxu0 0
    %2992 = vmatpush1.bf16.msra.mxu0 %v1329
    %2993 = vmatprep.subr.bf16.mxu0 0
    %2994 = vmatpush1.bf16.msra.mxu0 %v1328
    %2995 = vmatprep.subr.bf16.mxu0 0
    %2996 = vmatpush1.bf16.msra.mxu0 %v1327
    %2997 = vmatprep.subr.bf16.mxu0 0
    %2998 = vmatpush1.bf16.msra.mxu0 %v1326
    %2999 = vmatprep.subr.bf16.mxu0 0
    %3000 = vmatpush1.bf16.msra.mxu0 %v1325
    %3001 = vmatprep.subr.bf16.mxu0 0
    %3002 = vmatpush1.bf16.msra.mxu0 %v1324
    %3003 = vmatprep.subr.bf16.mxu0 0
    %3004 = vmatpush1.bf16.msra.mxu0 %v1323
    %3005 = vmatprep.subr.bf16.mxu0 0
    %3006 = vmatpush2.bf16.msra.mxu0 0
    %3007 = vmatprep.subr.bf16.mxu0 0
    %3008 = vmatpush2.bf16.msra.mxu0 0
    %3009 = vmatprep.subr.bf16.mxu0 0
    %3010 = vmatpush2.bf16.msra.mxu0 0
    %3011 = vmatprep.subr.bf16.mxu0 0
    %3012 = vmatpush2.bf16.msra.mxu0 0
    %3013 = vmatprep.subr.bf16.mxu0 0
    %3014 = vmatpush2.bf16.msra.mxu0 0
    %3015 = vmatprep.subr.bf16.mxu0 0
    %3016 = vmatpush2.bf16.msra.mxu0 0
    %3017 = vmatprep.subr.bf16.mxu0 0
    %3018 = vmatpush2.bf16.msra.mxu0 0
    %3019 = vmatprep.subr.bf16.mxu0 0
    %3020 = vmatpush2.bf16.msra.mxu0 0
    %3021 = vmatprep.mubr.bf16.mxu0 0
    %3022 = vmatmul.mubr.bf16.gmra.mxu0 %v2983
    %v3023 = vpop.f32.mrf.mxu0
    %v3024 = vadd.f32 %v1289, %v3023
    %v3025 = vpop.f32.mrf.mxu0
    %v3026 = vpop.f32.mrf.mxu0
    %v3027 = vadd.f32 %v1289, %v3026
    %v3028 = vpop.f32.mrf.mxu0
    %3029 = vmatprep.mubr.bf16.mxu0 0
    %3030 = vmatmul.mubr.bf16.gmra.mxu0 %v2984
    %v3031 = vpop.f32.mrf.mxu0
    %v3032 = vadd.f32 %v1289, %v3031
    %v3033 = vpop.f32.mrf.mxu0
    %v3034 = vpop.f32.mrf.mxu0
    %v3035 = vadd.f32 %v1289, %v3034
    %v3036 = vpop.f32.mrf.mxu0
    %3037 = vmatprep.mubr.bf16.mxu0 0
    %3038 = vmatmul.mubr.bf16.gmra.mxu0 %v2985
    %v3039 = vpop.f32.mrf.mxu0
    %v3040 = vadd.f32 %v1289, %v3039
    %v3041 = vpop.f32.mrf.mxu0
    %v3042 = vpop.f32.mrf.mxu0
    %v3043 = vadd.f32 %v1289, %v3042
    %v3044 = vpop.f32.mrf.mxu0
    %3045 = vmatprep.mubr.bf16.mxu0 0
    %3046 = vmatmul.mubr.bf16.gmra.mxu0 %v2986
    %v3047 = vpop.f32.mrf.mxu0
    %v3048 = vadd.f32 %v1289, %v3047
    %v3049 = vpop.f32.mrf.mxu0
    %v3050 = vpop.f32.mrf.mxu0
    %v3051 = vadd.f32 %v1289, %v3050
    %v3052 = vpop.f32.mrf.mxu0
    %3053 = vmatprep.mubr.bf16.mxu0 0
    %3054 = vmatmul.mubr.bf16.gmra.mxu0 %v2987
    %v3055 = vpop.f32.mrf.mxu0
    %v3056 = vadd.f32 %v1289, %v3055
    %v3057 = vpop.f32.mrf.mxu0
    %v3058 = vpop.f32.mrf.mxu0
    %v3059 = vadd.f32 %v1289, %v3058
    %v3060 = vpop.f32.mrf.mxu0
    %3061 = vmatprep.mubr.bf16.mxu0 0
    %3062 = vmatmul.mubr.bf16.gmra.mxu0 %v2988
    %v3063 = vpop.f32.mrf.mxu0
    %v3064 = vadd.f32 %v1289, %v3063
    %v3065 = vpop.f32.mrf.mxu0
    %v3066 = vpop.f32.mrf.mxu0
    %v3067 = vadd.f32 %v1289, %v3066
    %v3068 = vpop.f32.mrf.mxu0
    %3069 = vdwg.mxu0
    %v3070 = vmax.f32 %v3024, 0.0
    %v3071 = vmax.f32 %v3027, 0.0
    %v3072 = vmax.f32 %v3032, 0.0
    %v3073 = vmax.f32 %v3035, 0.0
    %v3074 = vmax.f32 %v3040, 0.0
    %v3075 = vmax.f32 %v3043, 0.0
    %v3076 = vmax.f32 %v3048, 0.0
    %v3077 = vmax.f32 %v3051, 0.0
    %v3078 = vmax.f32 %v3056, 0.0
    %v3079 = vmax.f32 %v3059, 0.0
    %v3080 = vmax.f32 %v3064, 0.0
    %v3081 = vmax.f32 %v3067, 0.0
    %3082 = vst [vmem:[%s7 + $0x240] sm:$0xff] %v3070
    %3083 = vst [vmem:[%s7 + $0x248] sm:$0xff] %v3071
    %3084 = vst [vmem:[%s7 + $0x250] sm:$0xff] %v3072
    %3085 = vst [vmem:[%s7 + $0x258] sm:$0xff] %v3073
    %3086 = vst [vmem:[%s7 + $0x260] sm:$0xff] %v3074
    %3087 = vst [vmem:[%s7 + $0x268] sm:$0xff] %v3075
    %3088 = vst [vmem:[%s7 + $0x270] sm:$0xff] %v3076
    %3089 = vst [vmem:[%s7 + $0x278] sm:$0xff] %v3077
    %3090 = vst [vmem:[%s7 + $0x280] sm:$0xff] %v3078
    %3091 = vst [vmem:[%s7 + $0x288] sm:$0xff] %v3079
    %3092 = vst [vmem:[%s7 + $0x290] sm:$0xff] %v3080
    %3093 = vst [vmem:[%s7 + $0x298] sm:$0xff] %v3081
    %v3094 = vld [vmem:[#allocation7 + $0x1c] sm:$0xf]
    %v3095 = vld [vmem:[#allocation7 + $0x5c] sm:$0xf]
    %v3096 = vld [vmem:[#allocation7 + $0x9c] sm:$0xf]
    %v3097 = vld [vmem:[#allocation7 + $0xdc] sm:$0xf]
    %v3098 = vld [vmem:[#allocation7 + $0x11c] sm:$0xf]
    %v3099 = vld [vmem:[#allocation7 + $0x15c] sm:$0xf]
    %v3100 = vld [vmem:[#allocation7 + $0x19c] sm:$0xf]
    %v3101 = vld [vmem:[#allocation7 + $0x1dc] sm:$0xf]
    %v3102 = vld [vmem:[#allocation7 + $0x21c] sm:$0xf]
    %v3103 = vld [vmem:[#allocation7 + $0x25c] sm:$0xf]
    %v3104 = vld [vmem:[#allocation7 + $0x29c] sm:$0xf]
    %v3105 = vld [vmem:[#allocation7 + $0x2dc] sm:$0xf]
    %v3106 = vld [vmem:[#allocation7 + $0x31c] sm:$0xf]
    %v3107 = vld [vmem:[#allocation7 + $0x35c] sm:$0xf]
    %v3108 = vld [vmem:[#allocation7 + $0x39c] sm:$0xf]
    %v3109 = vld [vmem:[#allocation7 + $0x3dc] sm:$0xf]
    %v3110 = vld [vmem:[#allocation8 + $0x7] sm:$0x1]
    %v3112 = vlaneseq
    %v3113 = vshrl.u32 %v3112, 7
    %v3114 = vsub.s32 0, %v3113
    %v3115 = vrot.slane %v3110, %v3114
    %v3133 = vunpack.c.l.b16 %v3094
    %v3134 = vunpack.c.l.b16 %v3095
    %v3135 = vunpack.c.l.b16 %v3096
    %v3136 = vunpack.c.l.b16 %v3097
    %v3137 = vunpack.c.l.b16 %v3098
    %v3138 = vunpack.c.l.b16 %v3099
    %v3139 = vunpack.c.l.b16 %v3100
    %v3140 = vunpack.c.l.b16 %v3101
    %v3141 = vunpack.c.l.b16 %v3102
    %v3142 = vunpack.c.l.b16 %v3103
    %v3143 = vunpack.c.l.b16 %v3104
    %v3144 = vunpack.c.l.b16 %v3105
    %v3145 = vunpack.c.l.b16 %v3106
    %v3146 = vunpack.c.l.b16 %v3107
    %v3147 = vunpack.c.l.b16 %v3108
    %v3148 = vunpack.c.l.b16 %v3109
    %v3149 = vpack.c.b16 %v3134, %v3133
    %v3150 = vpack.c.b16 %v3136, %v3135
    %v3151 = vpack.c.b16 %v3138, %v3137
    %v3152 = vpack.c.b16 %v3140, %v3139
    %v3153 = vpack.c.b16 %v3142, %v3141
    %v3154 = vpack.c.b16 %v3144, %v3143
    %v3155 = vpack.c.b16 %v3146, %v3145
    %v3156 = vpack.c.b16 %v3148, %v3147
    %3165 = vmatprep.subr.bf16.mxu0 0
    %3166 = vmatpush1.bf16.msra.mxu0 %v3156
    %3167 = vmatprep.subr.bf16.mxu0 0
    %3168 = vmatpush1.bf16.msra.mxu0 %v3155
    %3169 = vmatprep.subr.bf16.mxu0 0
    %3170 = vmatpush1.bf16.msra.mxu0 %v3154
    %3171 = vmatprep.subr.bf16.mxu0 0
    %3172 = vmatpush1.bf16.msra.mxu0 %v3153
    %3173 = vmatprep.subr.bf16.mxu0 0
    %3174 = vmatpush1.bf16.msra.mxu0 %v3152
    %3175 = vmatprep.subr.bf16.mxu0 0
    %3176 = vmatpush1.bf16.msra.mxu0 %v3151
    %3177 = vmatprep.subr.bf16.mxu0 0
    %3178 = vmatpush1.bf16.msra.mxu0 %v3150
    %3179 = vmatprep.subr.bf16.mxu0 0
    %3180 = vmatpush1.bf16.msra.mxu0 %v3149
    %3181 = vmatprep.subr.bf16.mxu0 0
    %3182 = vmatpush2.bf16.msra.mxu0 0
    %3183 = vmatprep.subr.bf16.mxu0 0
    %3184 = vmatpush2.bf16.msra.mxu0 0
    %3185 = vmatprep.subr.bf16.mxu0 0
    %3186 = vmatpush2.bf16.msra.mxu0 0
    %3187 = vmatprep.subr.bf16.mxu0 0
    %3188 = vmatpush2.bf16.msra.mxu0 0
    %3189 = vmatprep.subr.bf16.mxu0 0
    %3190 = vmatpush2.bf16.msra.mxu0 0
    %3191 = vmatprep.subr.bf16.mxu0 0
    %3192 = vmatpush2.bf16.msra.mxu0 0
    %3193 = vmatprep.subr.bf16.mxu0 0
    %3194 = vmatpush2.bf16.msra.mxu0 0
    %3195 = vmatprep.subr.bf16.mxu0 0
    %3196 = vmatpush2.bf16.msra.mxu0 0
    %3197 = vmatprep.mubr.bf16.mxu0 0
    %3198 = vmatmul.mubr.bf16.gmra.mxu0 %v1092
    %v3199 = vpop.f32.mrf.mxu0
    %v3200 = vadd.f32 %v3115, %v3199
    %v3201 = vpop.f32.mrf.mxu0
    %v3202 = vpop.f32.mrf.mxu0
    %v3203 = vadd.f32 %v3115, %v3202
    %v3204 = vpop.f32.mrf.mxu0
    %3205 = vmatprep.mubr.bf16.mxu0 0
    %3206 = vmatmul.mubr.bf16.gmra.mxu0 %v1093
    %v3207 = vpop.f32.mrf.mxu0
    %v3208 = vadd.f32 %v3115, %v3207
    %v3209 = vpop.f32.mrf.mxu0
    %v3210 = vpop.f32.mrf.mxu0
    %v3211 = vadd.f32 %v3115, %v3210
    %v3212 = vpop.f32.mrf.mxu0
    %3213 = vmatprep.mubr.bf16.mxu0 0
    %3214 = vmatmul.mubr.bf16.gmra.mxu0 %v1094
    %v3215 = vpop.f32.mrf.mxu0
    %v3216 = vadd.f32 %v3115, %v3215
    %v3217 = vpop.f32.mrf.mxu0
    %v3218 = vpop.f32.mrf.mxu0
    %v3219 = vadd.f32 %v3115, %v3218
    %v3220 = vpop.f32.mrf.mxu0
    %3221 = vmatprep.mubr.bf16.mxu0 0
    %3222 = vmatmul.mubr.bf16.gmra.mxu0 %v1095
    %v3223 = vpop.f32.mrf.mxu0
    %v3224 = vadd.f32 %v3115, %v3223
    %v3225 = vpop.f32.mrf.mxu0
    %v3226 = vpop.f32.mrf.mxu0
    %v3227 = vadd.f32 %v3115, %v3226
    %v3228 = vpop.f32.mrf.mxu0
    %3229 = vmatprep.mubr.bf16.mxu0 0
    %3230 = vmatmul.mubr.bf16.gmra.mxu0 %v1096
    %v3231 = vpop.f32.mrf.mxu0
    %v3232 = vadd.f32 %v3115, %v3231
    %v3233 = vpop.f32.mrf.mxu0
    %v3234 = vpop.f32.mrf.mxu0
    %v3235 = vadd.f32 %v3115, %v3234
    %v3236 = vpop.f32.mrf.mxu0
    %3237 = vmatprep.mubr.bf16.mxu0 0
    %3238 = vmatmul.mubr.bf16.gmra.mxu0 %v1097
    %v3239 = vpop.f32.mrf.mxu0
    %v3240 = vadd.f32 %v3115, %v3239
    %v3241 = vpop.f32.mrf.mxu0
    %v3242 = vpop.f32.mrf.mxu0
    %v3243 = vadd.f32 %v3115, %v3242
    %v3244 = vpop.f32.mrf.mxu0
    %3245 = vdwg.mxu0
    %v3246 = vmax.f32 %v3200, 0.0
    %v3247 = vmax.f32 %v3203, 0.0
    %v3248 = vmax.f32 %v3208, 0.0
    %v3249 = vmax.f32 %v3211, 0.0
    %v3250 = vmax.f32 %v3216, 0.0
    %v3251 = vmax.f32 %v3219, 0.0
    %v3252 = vmax.f32 %v3224, 0.0
    %v3253 = vmax.f32 %v3227, 0.0
    %v3254 = vmax.f32 %v3232, 0.0
    %v3255 = vmax.f32 %v3235, 0.0
    %v3256 = vmax.f32 %v3240, 0.0
    %v3257 = vmax.f32 %v3243, 0.0
    %v3258 = vpack.c.bf16 %v3247, %v3246
    %v3259 = vpack.c.bf16 %v3249, %v3248
    %v3260 = vpack.c.bf16 %v3251, %v3250
    %v3261 = vpack.c.bf16 %v3253, %v3252
    %v3262 = vpack.c.bf16 %v3255, %v3254
    %v3263 = vpack.c.bf16 %v3257, %v3256
    %3264 = vmatprep.subr.bf16.mxu0 0
    %3265 = vmatpush1.bf16.msra.mxu0 %v1330
    %3266 = vmatprep.subr.bf16.mxu0 0
    %3267 = vmatpush1.bf16.msra.mxu0 %v1329
    %3268 = vmatprep.subr.bf16.mxu0 0
    %3269 = vmatpush1.bf16.msra.mxu0 %v1328
    %3270 = vmatprep.subr.bf16.mxu0 0
    %3271 = vmatpush1.bf16.msra.mxu0 %v1327
    %3272 = vmatprep.subr.bf16.mxu0 0
    %3273 = vmatpush1.bf16.msra.mxu0 %v1326
    %3274 = vmatprep.subr.bf16.mxu0 0
    %3275 = vmatpush1.bf16.msra.mxu0 %v1325
    %3276 = vmatprep.subr.bf16.mxu0 0
    %3277 = vmatpush1.bf16.msra.mxu0 %v1324
    %3278 = vmatprep.subr.bf16.mxu0 0
    %3279 = vmatpush1.bf16.msra.mxu0 %v1323
    %3280 = vmatprep.subr.bf16.mxu0 0
    %3281 = vmatpush2.bf16.msra.mxu0 0
    %3282 = vmatprep.subr.bf16.mxu0 0
    %3283 = vmatpush2.bf16.msra.mxu0 0
    %3284 = vmatprep.subr.bf16.mxu0 0
    %3285 = vmatpush2.bf16.msra.mxu0 0
    %3286 = vmatprep.subr.bf16.mxu0 0
    %3287 = vmatpush2.bf16.msra.mxu0 0
    %3288 = vmatprep.subr.bf16.mxu0 0
    %3289 = vmatpush2.bf16.msra.mxu0 0
    %3290 = vmatprep.subr.bf16.mxu0 0
    %3291 = vmatpush2.bf16.msra.mxu0 0
    %3292 = vmatprep.subr.bf16.mxu0 0
    %3293 = vmatpush2.bf16.msra.mxu0 0
    %3294 = vmatprep.subr.bf16.mxu0 0
    %3295 = vmatpush2.bf16.msra.mxu0 0
    %3296 = vmatprep.mubr.bf16.mxu0 0
    %3297 = vmatmul.mubr.bf16.gmra.mxu0 %v3258
    %v3298 = vpop.f32.mrf.mxu0
    %v3299 = vadd.f32 %v1289, %v3298
    %v3300 = vpop.f32.mrf.mxu0
    %v3301 = vpop.f32.mrf.mxu0
    %v3302 = vadd.f32 %v1289, %v3301
    %v3303 = vpop.f32.mrf.mxu0
    %3304 = vmatprep.mubr.bf16.mxu0 0
    %3305 = vmatmul.mubr.bf16.gmra.mxu0 %v3259
    %v3306 = vpop.f32.mrf.mxu0
    %v3307 = vadd.f32 %v1289, %v3306
    %v3308 = vpop.f32.mrf.mxu0
    %v3309 = vpop.f32.mrf.mxu0
    %v3310 = vadd.f32 %v1289, %v3309
    %v3311 = vpop.f32.mrf.mxu0
    %3312 = vmatprep.mubr.bf16.mxu0 0
    %3313 = vmatmul.mubr.bf16.gmra.mxu0 %v3260
    %v3314 = vpop.f32.mrf.mxu0
    %v3315 = vadd.f32 %v1289, %v3314
    %v3316 = vpop.f32.mrf.mxu0
    %v3317 = vpop.f32.mrf.mxu0
    %v3318 = vadd.f32 %v1289, %v3317
    %v3319 = vpop.f32.mrf.mxu0
    %3320 = vmatprep.mubr.bf16.mxu0 0
    %3321 = vmatmul.mubr.bf16.gmra.mxu0 %v3261
    %v3322 = vpop.f32.mrf.mxu0
    %v3323 = vadd.f32 %v1289, %v3322
    %v3324 = vpop.f32.mrf.mxu0
    %v3325 = vpop.f32.mrf.mxu0
    %v3326 = vadd.f32 %v1289, %v3325
    %v3327 = vpop.f32.mrf.mxu0
    %3328 = vmatprep.mubr.bf16.mxu0 0
    %3329 = vmatmul.mubr.bf16.gmra.mxu0 %v3262
    %v3330 = vpop.f32.mrf.mxu0
    %v3331 = vadd.f32 %v1289, %v3330
    %v3332 = vpop.f32.mrf.mxu0
    %v3333 = vpop.f32.mrf.mxu0
    %v3334 = vadd.f32 %v1289, %v3333
    %v3335 = vpop.f32.mrf.mxu0
    %3336 = vmatprep.mubr.bf16.mxu0 0
    %3337 = vmatmul.mubr.bf16.gmra.mxu0 %v3263
    %v3338 = vpop.f32.mrf.mxu0
    %v3339 = vadd.f32 %v1289, %v3338
    %v3340 = vpop.f32.mrf.mxu0
    %v3341 = vpop.f32.mrf.mxu0
    %v3342 = vadd.f32 %v1289, %v3341
    %v3343 = vpop.f32.mrf.mxu0
    %3344 = vdwg.mxu0
    %v3345 = vmax.f32 %v3299, 0.0
    %v3346 = vmax.f32 %v3302, 0.0
    %v3347 = vmax.f32 %v3307, 0.0
    %v3348 = vmax.f32 %v3310, 0.0
    %v3349 = vmax.f32 %v3315, 0.0
    %v3350 = vmax.f32 %v3318, 0.0
    %v3351 = vmax.f32 %v3323, 0.0
    %v3352 = vmax.f32 %v3326, 0.0
    %v3353 = vmax.f32 %v3331, 0.0
    %v3354 = vmax.f32 %v3334, 0.0
    %v3355 = vmax.f32 %v3339, 0.0
    %v3356 = vmax.f32 %v3342, 0.0
    %3357 = vst [vmem:[%s7 + $0x2a0] sm:$0xff] %v3345
    %3358 = vst [vmem:[%s7 + $0x2a8] sm:$0xff] %v3346
    %3359 = vst [vmem:[%s7 + $0x2b0] sm:$0xff] %v3347
    %3360 = vst [vmem:[%s7 + $0x2b8] sm:$0xff] %v3348
    %3361 = vst [vmem:[%s7 + $0x2c0] sm:$0xff] %v3349
    %3362 = vst [vmem:[%s7 + $0x2c8] sm:$0xff] %v3350
    %3363 = vst [vmem:[%s7 + $0x2d0] sm:$0xff] %v3351
    %3364 = vst [vmem:[%s7 + $0x2d8] sm:$0xff] %v3352
    %3365 = vst [vmem:[%s7 + $0x2e0] sm:$0xff] %v3353
    %3366 = vst [vmem:[%s7 + $0x2e8] sm:$0xff] %v3354
    %3367 = vst [vmem:[%s7 + $0x2f0] sm:$0xff] %v3355
    %3368 = vst [vmem:[%s7 + $0x2f8] sm:$0xff] %v3356
    %v3369 = vld [vmem:[#allocation7 + $0x20] sm:$0xf]
    %v3370 = vld [vmem:[#allocation7 + $0x60] sm:$0xf]
    %v3371 = vld [vmem:[#allocation7 + $0xa0] sm:$0xf]
    %v3372 = vld [vmem:[#allocation7 + $0xe0] sm:$0xf]
    %v3373 = vld [vmem:[#allocation7 + $0x120] sm:$0xf]
    %v3374 = vld [vmem:[#allocation7 + $0x160] sm:$0xf]
    %v3375 = vld [vmem:[#allocation7 + $0x1a0] sm:$0xf]
    %v3376 = vld [vmem:[#allocation7 + $0x1e0] sm:$0xf]
    %v3377 = vld [vmem:[#allocation7 + $0x220] sm:$0xf]
    %v3378 = vld [vmem:[#allocation7 + $0x260] sm:$0xf]
    %v3379 = vld [vmem:[#allocation7 + $0x2a0] sm:$0xf]
    %v3380 = vld [vmem:[#allocation7 + $0x2e0] sm:$0xf]
    %v3381 = vld [vmem:[#allocation7 + $0x320] sm:$0xf]
    %v3382 = vld [vmem:[#allocation7 + $0x360] sm:$0xf]
    %v3383 = vld [vmem:[#allocation7 + $0x3a0] sm:$0xf]
    %v3384 = vld [vmem:[#allocation7 + $0x3e0] sm:$0xf]
    %v3385 = vld [vmem:[#allocation8 + $0x8] sm:$0x1]
    %v3387 = vlaneseq
    %v3388 = vshrl.u32 %v3387, 7
    %v3389 = vsub.s32 0, %v3388
    %v3390 = vrot.slane %v3385, %v3389
    %v3408 = vunpack.c.l.b16 %v3369
    %v3409 = vunpack.c.l.b16 %v3370
    %v3410 = vunpack.c.l.b16 %v3371
    %v3411 = vunpack.c.l.b16 %v3372
    %v3412 = vunpack.c.l.b16 %v3373
    %v3413 = vunpack.c.l.b16 %v3374
    %v3414 = vunpack.c.l.b16 %v3375
    %v3415 = vunpack.c.l.b16 %v3376
    %v3416 = vunpack.c.l.b16 %v3377
    %v3417 = vunpack.c.l.b16 %v3378
    %v3418 = vunpack.c.l.b16 %v3379
    %v3419 = vunpack.c.l.b16 %v3380
    %v3420 = vunpack.c.l.b16 %v3381
    %v3421 = vunpack.c.l.b16 %v3382
    %v3422 = vunpack.c.l.b16 %v3383
    %v3423 = vunpack.c.l.b16 %v3384
    %v3424 = vpack.c.b16 %v3409, %v3408
    %v3425 = vpack.c.b16 %v3411, %v3410
    %v3426 = vpack.c.b16 %v3413, %v3412
    %v3427 = vpack.c.b16 %v3415, %v3414
    %v3428 = vpack.c.b16 %v3417, %v3416
    %v3429 = vpack.c.b16 %v3419, %v3418
    %v3430 = vpack.c.b16 %v3421, %v3420
    %v3431 = vpack.c.b16 %v3423, %v3422
    %3440 = vmatprep.subr.bf16.mxu0 0
    %3441 = vmatpush1.bf16.msra.mxu0 %v3431
    %3442 = vmatprep.subr.bf16.mxu0 0
    %3443 = vmatpush1.bf16.msra.mxu0 %v3430
    %3444 = vmatprep.subr.bf16.mxu0 0
    %3445 = vmatpush1.bf16.msra.mxu0 %v3429
    %3446 = vmatprep.subr.bf16.mxu0 0
    %3447 = vmatpush1.bf16.msra.mxu0 %v3428
    %3448 = vmatprep.subr.bf16.mxu0 0
    %3449 = vmatpush1.bf16.msra.mxu0 %v3427
    %3450 = vmatprep.subr.bf16.mxu0 0
    %3451 = vmatpush1.bf16.msra.mxu0 %v3426
    %3452 = vmatprep.subr.bf16.mxu0 0
    %3453 = vmatpush1.bf16.msra.mxu0 %v3425
    %3454 = vmatprep.subr.bf16.mxu0 0
    %3455 = vmatpush1.bf16.msra.mxu0 %v3424
    %3456 = vmatprep.subr.bf16.mxu0 0
    %3457 = vmatpush2.bf16.msra.mxu0 0
    %3458 = vmatprep.subr.bf16.mxu0 0
    %3459 = vmatpush2.bf16.msra.mxu0 0
    %3460 = vmatprep.subr.bf16.mxu0 0
    %3461 = vmatpush2.bf16.msra.mxu0 0
    %3462 = vmatprep.subr.bf16.mxu0 0
    %3463 = vmatpush2.bf16.msra.mxu0 0
    %3464 = vmatprep.subr.bf16.mxu0 0
    %3465 = vmatpush2.bf16.msra.mxu0 0
    %3466 = vmatprep.subr.bf16.mxu0 0
    %3467 = vmatpush2.bf16.msra.mxu0 0
    %3468 = vmatprep.subr.bf16.mxu0 0
    %3469 = vmatpush2.bf16.msra.mxu0 0
    %3470 = vmatprep.subr.bf16.mxu0 0
    %3471 = vmatpush2.bf16.msra.mxu0 0
    %3472 = vmatprep.mubr.bf16.mxu0 0
    %3473 = vmatmul.mubr.bf16.gmra.mxu0 %v1092
    %v3474 = vpop.f32.mrf.mxu0
    %v3475 = vadd.f32 %v3390, %v3474
    %v3476 = vpop.f32.mrf.mxu0
    %v3477 = vpop.f32.mrf.mxu0
    %v3478 = vadd.f32 %v3390, %v3477
    %v3479 = vpop.f32.mrf.mxu0
    %3480 = vmatprep.mubr.bf16.mxu0 0
    %3481 = vmatmul.mubr.bf16.gmra.mxu0 %v1093
    %v3482 = vpop.f32.mrf.mxu0
    %v3483 = vadd.f32 %v3390, %v3482
    %v3484 = vpop.f32.mrf.mxu0
    %v3485 = vpop.f32.mrf.mxu0
    %v3486 = vadd.f32 %v3390, %v3485
    %v3487 = vpop.f32.mrf.mxu0
    %3488 = vmatprep.mubr.bf16.mxu0 0
    %3489 = vmatmul.mubr.bf16.gmra.mxu0 %v1094
    %v3490 = vpop.f32.mrf.mxu0
    %v3491 = vadd.f32 %v3390, %v3490
    %v3492 = vpop.f32.mrf.mxu0
    %v3493 = vpop.f32.mrf.mxu0
    %v3494 = vadd.f32 %v3390, %v3493
    %v3495 = vpop.f32.mrf.mxu0
    %3496 = vmatprep.mubr.bf16.mxu0 0
    %3497 = vmatmul.mubr.bf16.gmra.mxu0 %v1095
    %v3498 = vpop.f32.mrf.mxu0
    %v3499 = vadd.f32 %v3390, %v3498
    %v3500 = vpop.f32.mrf.mxu0
    %v3501 = vpop.f32.mrf.mxu0
    %v3502 = vadd.f32 %v3390, %v3501
    %v3503 = vpop.f32.mrf.mxu0
    %3504 = vmatprep.mubr.bf16.mxu0 0
    %3505 = vmatmul.mubr.bf16.gmra.mxu0 %v1096
    %v3506 = vpop.f32.mrf.mxu0
    %v3507 = vadd.f32 %v3390, %v3506
    %v3508 = vpop.f32.mrf.mxu0
    %v3509 = vpop.f32.mrf.mxu0
    %v3510 = vadd.f32 %v3390, %v3509
    %v3511 = vpop.f32.mrf.mxu0
    %3512 = vmatprep.mubr.bf16.mxu0 0
    %3513 = vmatmul.mubr.bf16.gmra.mxu0 %v1097
    %v3514 = vpop.f32.mrf.mxu0
    %v3515 = vadd.f32 %v3390, %v3514
    %v3516 = vpop.f32.mrf.mxu0
    %v3517 = vpop.f32.mrf.mxu0
    %v3518 = vadd.f32 %v3390, %v3517
    %v3519 = vpop.f32.mrf.mxu0
    %3520 = vdwg.mxu0
    %v3521 = vmax.f32 %v3475, 0.0
    %v3522 = vmax.f32 %v3478, 0.0
    %v3523 = vmax.f32 %v3483, 0.0
    %v3524 = vmax.f32 %v3486, 0.0
    %v3525 = vmax.f32 %v3491, 0.0
    %v3526 = vmax.f32 %v3494, 0.0
    %v3527 = vmax.f32 %v3499, 0.0
    %v3528 = vmax.f32 %v3502, 0.0
    %v3529 = vmax.f32 %v3507, 0.0
    %v3530 = vmax.f32 %v3510, 0.0
    %v3531 = vmax.f32 %v3515, 0.0
    %v3532 = vmax.f32 %v3518, 0.0
    %v3533 = vpack.c.bf16 %v3522, %v3521
    %v3534 = vpack.c.bf16 %v3524, %v3523
    %v3535 = vpack.c.bf16 %v3526, %v3525
    %v3536 = vpack.c.bf16 %v3528, %v3527
    %v3537 = vpack.c.bf16 %v3530, %v3529
    %v3538 = vpack.c.bf16 %v3532, %v3531
    %3539 = vmatprep.subr.bf16.mxu0 0
    %3540 = vmatpush1.bf16.msra.mxu0 %v1330
    %3541 = vmatprep.subr.bf16.mxu0 0
    %3542 = vmatpush1.bf16.msra.mxu0 %v1329
    %3543 = vmatprep.subr.bf16.mxu0 0
    %3544 = vmatpush1.bf16.msra.mxu0 %v1328
    %3545 = vmatprep.subr.bf16.mxu0 0
    %3546 = vmatpush1.bf16.msra.mxu0 %v1327
    %3547 = vmatprep.subr.bf16.mxu0 0
    %3548 = vmatpush1.bf16.msra.mxu0 %v1326
    %3549 = vmatprep.subr.bf16.mxu0 0
    %3550 = vmatpush1.bf16.msra.mxu0 %v1325
    %3551 = vmatprep.subr.bf16.mxu0 0
    %3552 = vmatpush1.bf16.msra.mxu0 %v1324
    %3553 = vmatprep.subr.bf16.mxu0 0
    %3554 = vmatpush1.bf16.msra.mxu0 %v1323
    %3555 = vmatprep.subr.bf16.mxu0 0
    %3556 = vmatpush2.bf16.msra.mxu0 0
    %3557 = vmatprep.subr.bf16.mxu0 0
    %3558 = vmatpush2.bf16.msra.mxu0 0
    %3559 = vmatprep.subr.bf16.mxu0 0
    %3560 = vmatpush2.bf16.msra.mxu0 0
    %3561 = vmatprep.subr.bf16.mxu0 0
    %3562 = vmatpush2.bf16.msra.mxu0 0
    %3563 = vmatprep.subr.bf16.mxu0 0
    %3564 = vmatpush2.bf16.msra.mxu0 0
    %3565 = vmatprep.subr.bf16.mxu0 0
    %3566 = vmatpush2.bf16.msra.mxu0 0
    %3567 = vmatprep.subr.bf16.mxu0 0
    %3568 = vmatpush2.bf16.msra.mxu0 0
    %3569 = vmatprep.subr.bf16.mxu0 0
    %3570 = vmatpush2.bf16.msra.mxu0 0
    %3571 = vmatprep.mubr.bf16.mxu0 0
    %3572 = vmatmul.mubr.bf16.gmra.mxu0 %v3533
    %v3573 = vpop.f32.mrf.mxu0
    %v3574 = vadd.f32 %v1289, %v3573
    %v3575 = vpop.f32.mrf.mxu0
    %v3576 = vpop.f32.mrf.mxu0
    %v3577 = vadd.f32 %v1289, %v3576
    %v3578 = vpop.f32.mrf.mxu0
    %3579 = vmatprep.mubr.bf16.mxu0 0
    %3580 = vmatmul.mubr.bf16.gmra.mxu0 %v3534
    %v3581 = vpop.f32.mrf.mxu0
    %v3582 = vadd.f32 %v1289, %v3581
    %v3583 = vpop.f32.mrf.mxu0
    %v3584 = vpop.f32.mrf.mxu0
    %v3585 = vadd.f32 %v1289, %v3584
    %v3586 = vpop.f32.mrf.mxu0
    %3587 = vmatprep.mubr.bf16.mxu0 0
    %3588 = vmatmul.mubr.bf16.gmra.mxu0 %v3535
    %v3589 = vpop.f32.mrf.mxu0
    %v3590 = vadd.f32 %v1289, %v3589
    %v3591 = vpop.f32.mrf.mxu0
    %v3592 = vpop.f32.mrf.mxu0
    %v3593 = vadd.f32 %v1289, %v3592
    %v3594 = vpop.f32.mrf.mxu0
    %3595 = vmatprep.mubr.bf16.mxu0 0
    %3596 = vmatmul.mubr.bf16.gmra.mxu0 %v3536
    %v3597 = vpop.f32.mrf.mxu0
    %v3598 = vadd.f32 %v1289, %v3597
    %v3599 = vpop.f32.mrf.mxu0
    %v3600 = vpop.f32.mrf.mxu0
    %v3601 = vadd.f32 %v1289, %v3600
    %v3602 = vpop.f32.mrf.mxu0
    %3603 = vmatprep.mubr.bf16.mxu0 0
    %3604 = vmatmul.mubr.bf16.gmra.mxu0 %v3537
    %v3605 = vpop.f32.mrf.mxu0
    %v3606 = vadd.f32 %v1289, %v3605
    %v3607 = vpop.f32.mrf.mxu0
    %v3608 = vpop.f32.mrf.mxu0
    %v3609 = vadd.f32 %v1289, %v3608
    %v3610 = vpop.f32.mrf.mxu0
    %3611 = vmatprep.mubr.bf16.mxu0 0
    %3612 = vmatmul.mubr.bf16.gmra.mxu0 %v3538
    %v3613 = vpop.f32.mrf.mxu0
    %v3614 = vadd.f32 %v1289, %v3613
    %v3615 = vpop.f32.mrf.mxu0
    %v3616 = vpop.f32.mrf.mxu0
    %v3617 = vadd.f32 %v1289, %v3616
    %v3618 = vpop.f32.mrf.mxu0
    %3619 = vdwg.mxu0
    %v3620 = vmax.f32 %v3574, 0.0
    %v3621 = vmax.f32 %v3577, 0.0
    %v3622 = vmax.f32 %v3582, 0.0
    %v3623 = vmax.f32 %v3585, 0.0
    %v3624 = vmax.f32 %v3590, 0.0
    %v3625 = vmax.f32 %v3593, 0.0
    %v3626 = vmax.f32 %v3598, 0.0
    %v3627 = vmax.f32 %v3601, 0.0
    %v3628 = vmax.f32 %v3606, 0.0
    %v3629 = vmax.f32 %v3609, 0.0
    %v3630 = vmax.f32 %v3614, 0.0
    %v3631 = vmax.f32 %v3617, 0.0
    %3632 = vst [vmem:[%s7 + $0x300] sm:$0xff] %v3620
    %3633 = vst [vmem:[%s7 + $0x308] sm:$0xff] %v3621
    %3634 = vst [vmem:[%s7 + $0x310] sm:$0xff] %v3622
    %3635 = vst [vmem:[%s7 + $0x318] sm:$0xff] %v3623
    %3636 = vst [vmem:[%s7 + $0x320] sm:$0xff] %v3624
    %3637 = vst [vmem:[%s7 + $0x328] sm:$0xff] %v3625
    %3638 = vst [vmem:[%s7 + $0x330] sm:$0xff] %v3626
    %3639 = vst [vmem:[%s7 + $0x338] sm:$0xff] %v3627
    %3640 = vst [vmem:[%s7 + $0x340] sm:$0xff] %v3628
    %3641 = vst [vmem:[%s7 + $0x348] sm:$0xff] %v3629
    %3642 = vst [vmem:[%s7 + $0x350] sm:$0xff] %v3630
    %3643 = vst [vmem:[%s7 + $0x358] sm:$0xff] %v3631
    %v3644 = vld [vmem:[#allocation7 + $0x24] sm:$0xf]
    %v3645 = vld [vmem:[#allocation7 + $0x64] sm:$0xf]
    %v3646 = vld [vmem:[#allocation7 + $0xa4] sm:$0xf]
    %v3647 = vld [vmem:[#allocation7 + $0xe4] sm:$0xf]
    %v3648 = vld [vmem:[#allocation7 + $0x124] sm:$0xf]
    %v3649 = vld [vmem:[#allocation7 + $0x164] sm:$0xf]
    %v3650 = vld [vmem:[#allocation7 + $0x1a4] sm:$0xf]
    %v3651 = vld [vmem:[#allocation7 + $0x1e4] sm:$0xf]
    %v3652 = vld [vmem:[#allocation7 + $0x224] sm:$0xf]
    %v3653 = vld [vmem:[#allocation7 + $0x264] sm:$0xf]
    %v3654 = vld [vmem:[#allocation7 + $0x2a4] sm:$0xf]
    %v3655 = vld [vmem:[#allocation7 + $0x2e4] sm:$0xf]
    %v3656 = vld [vmem:[#allocation7 + $0x324] sm:$0xf]
    %v3657 = vld [vmem:[#allocation7 + $0x364] sm:$0xf]
    %v3658 = vld [vmem:[#allocation7 + $0x3a4] sm:$0xf]
    %v3659 = vld [vmem:[#allocation7 + $0x3e4] sm:$0xf]
    %v3660 = vld [vmem:[#allocation8 + $0x9] sm:$0x1]
    %v3662 = vlaneseq
    %v3663 = vshrl.u32 %v3662, 7
    %v3664 = vsub.s32 0, %v3663
    %v3665 = vrot.slane %v3660, %v3664
    %v3683 = vunpack.c.l.b16 %v3644
    %v3684 = vunpack.c.l.b16 %v3645
    %v3685 = vunpack.c.l.b16 %v3646
    %v3686 = vunpack.c.l.b16 %v3647
    %v3687 = vunpack.c.l.b16 %v3648
    %v3688 = vunpack.c.l.b16 %v3649
    %v3689 = vunpack.c.l.b16 %v3650
    %v3690 = vunpack.c.l.b16 %v3651
    %v3691 = vunpack.c.l.b16 %v3652
    %v3692 = vunpack.c.l.b16 %v3653
    %v3693 = vunpack.c.l.b16 %v3654
    %v3694 = vunpack.c.l.b16 %v3655
    %v3695 = vunpack.c.l.b16 %v3656
    %v3696 = vunpack.c.l.b16 %v3657
    %v3697 = vunpack.c.l.b16 %v3658
    %v3698 = vunpack.c.l.b16 %v3659
    %v3699 = vpack.c.b16 %v3684, %v3683
    %v3700 = vpack.c.b16 %v3686, %v3685
    %v3701 = vpack.c.b16 %v3688, %v3687
    %v3702 = vpack.c.b16 %v3690, %v3689
    %v3703 = vpack.c.b16 %v3692, %v3691
    %v3704 = vpack.c.b16 %v3694, %v3693
    %v3705 = vpack.c.b16 %v3696, %v3695
    %v3706 = vpack.c.b16 %v3698, %v3697
    %3715 = vmatprep.subr.bf16.mxu0 0
    %3716 = vmatpush1.bf16.msra.mxu0 %v3706
    %3717 = vmatprep.subr.bf16.mxu0 0
    %3718 = vmatpush1.bf16.msra.mxu0 %v3705
    %3719 = vmatprep.subr.bf16.mxu0 0
    %3720 = vmatpush1.bf16.msra.mxu0 %v3704
    %3721 = vmatprep.subr.bf16.mxu0 0
    %3722 = vmatpush1.bf16.msra.mxu0 %v3703
    %3723 = vmatprep.subr.bf16.mxu0 0
    %3724 = vmatpush1.bf16.msra.mxu0 %v3702
    %3725 = vmatprep.subr.bf16.mxu0 0
    %3726 = vmatpush1.bf16.msra.mxu0 %v3701
    %3727 = vmatprep.subr.bf16.mxu0 0
    %3728 = vmatpush1.bf16.msra.mxu0 %v3700
    %3729 = vmatprep.subr.bf16.mxu0 0
    %3730 = vmatpush1.bf16.msra.mxu0 %v3699
    %3731 = vmatprep.subr.bf16.mxu0 0
    %3732 = vmatpush2.bf16.msra.mxu0 0
    %3733 = vmatprep.subr.bf16.mxu0 0
    %3734 = vmatpush2.bf16.msra.mxu0 0
    %3735 = vmatprep.subr.bf16.mxu0 0
    %3736 = vmatpush2.bf16.msra.mxu0 0
    %3737 = vmatprep.subr.bf16.mxu0 0
    %3738 = vmatpush2.bf16.msra.mxu0 0
    %3739 = vmatprep.subr.bf16.mxu0 0
    %3740 = vmatpush2.bf16.msra.mxu0 0
    %3741 = vmatprep.subr.bf16.mxu0 0
    %3742 = vmatpush2.bf16.msra.mxu0 0
    %3743 = vmatprep.subr.bf16.mxu0 0
    %3744 = vmatpush2.bf16.msra.mxu0 0
    %3745 = vmatprep.subr.bf16.mxu0 0
    %3746 = vmatpush2.bf16.msra.mxu0 0
    %3747 = vmatprep.mubr.bf16.mxu0 0
    %3748 = vmatmul.mubr.bf16.gmra.mxu0 %v1092
    %v3749 = vpop.f32.mrf.mxu0
    %v3750 = vadd.f32 %v3665, %v3749
    %v3751 = vpop.f32.mrf.mxu0
    %v3752 = vpop.f32.mrf.mxu0
    %v3753 = vadd.f32 %v3665, %v3752
    %v3754 = vpop.f32.mrf.mxu0
    %3755 = vmatprep.mubr.bf16.mxu0 0
    %3756 = vmatmul.mubr.bf16.gmra.mxu0 %v1093
    %v3757 = vpop.f32.mrf.mxu0
    %v3758 = vadd.f32 %v3665, %v3757
    %v3759 = vpop.f32.mrf.mxu0
    %v3760 = vpop.f32.mrf.mxu0
    %v3761 = vadd.f32 %v3665, %v3760
    %v3762 = vpop.f32.mrf.mxu0
    %3763 = vmatprep.mubr.bf16.mxu0 0
    %3764 = vmatmul.mubr.bf16.gmra.mxu0 %v1094
    %v3765 = vpop.f32.mrf.mxu0
    %v3766 = vadd.f32 %v3665, %v3765
    %v3767 = vpop.f32.mrf.mxu0
    %v3768 = vpop.f32.mrf.mxu0
    %v3769 = vadd.f32 %v3665, %v3768
    %v3770 = vpop.f32.mrf.mxu0
    %3771 = vmatprep.mubr.bf16.mxu0 0
    %3772 = vmatmul.mubr.bf16.gmra.mxu0 %v1095
    %v3773 = vpop.f32.mrf.mxu0
    %v3774 = vadd.f32 %v3665, %v3773
    %v3775 = vpop.f32.mrf.mxu0
    %v3776 = vpop.f32.mrf.mxu0
    %v3777 = vadd.f32 %v3665, %v3776
    %v3778 = vpop.f32.mrf.mxu0
    %3779 = vmatprep.mubr.bf16.mxu0 0
    %3780 = vmatmul.mubr.bf16.gmra.mxu0 %v1096
    %v3781 = vpop.f32.mrf.mxu0
    %v3782 = vadd.f32 %v3665, %v3781
    %v3783 = vpop.f32.mrf.mxu0
    %v3784 = vpop.f32.mrf.mxu0
    %v3785 = vadd.f32 %v3665, %v3784
    %v3786 = vpop.f32.mrf.mxu0
    %3787 = vmatprep.mubr.bf16.mxu0 0
    %3788 = vmatmul.mubr.bf16.gmra.mxu0 %v1097
    %v3789 = vpop.f32.mrf.mxu0
    %v3790 = vadd.f32 %v3665, %v3789
    %v3791 = vpop.f32.mrf.mxu0
    %v3792 = vpop.f32.mrf.mxu0
    %v3793 = vadd.f32 %v3665, %v3792
    %v3794 = vpop.f32.mrf.mxu0
    %3795 = vdwg.mxu0
    %v3796 = vmax.f32 %v3750, 0.0
    %v3797 = vmax.f32 %v3753, 0.0
    %v3798 = vmax.f32 %v3758, 0.0
    %v3799 = vmax.f32 %v3761, 0.0
    %v3800 = vmax.f32 %v3766, 0.0
    %v3801 = vmax.f32 %v3769, 0.0
    %v3802 = vmax.f32 %v3774, 0.0
    %v3803 = vmax.f32 %v3777, 0.0
    %v3804 = vmax.f32 %v3782, 0.0
    %v3805 = vmax.f32 %v3785, 0.0
    %v3806 = vmax.f32 %v3790, 0.0
    %v3807 = vmax.f32 %v3793, 0.0
    %v3808 = vpack.c.bf16 %v3797, %v3796
    %v3809 = vpack.c.bf16 %v3799, %v3798
    %v3810 = vpack.c.bf16 %v3801, %v3800
    %v3811 = vpack.c.bf16 %v3803, %v3802
    %v3812 = vpack.c.bf16 %v3805, %v3804
    %v3813 = vpack.c.bf16 %v3807, %v3806
    %3814 = vmatprep.subr.bf16.mxu0 0
    %3815 = vmatpush1.bf16.msra.mxu0 %v1330
    %3816 = vmatprep.subr.bf16.mxu0 0
    %3817 = vmatpush1.bf16.msra.mxu0 %v1329
    %3818 = vmatprep.subr.bf16.mxu0 0
    %3819 = vmatpush1.bf16.msra.mxu0 %v1328
    %3820 = vmatprep.subr.bf16.mxu0 0
    %3821 = vmatpush1.bf16.msra.mxu0 %v1327
    %3822 = vmatprep.subr.bf16.mxu0 0
    %3823 = vmatpush1.bf16.msra.mxu0 %v1326
    %3824 = vmatprep.subr.bf16.mxu0 0
    %3825 = vmatpush1.bf16.msra.mxu0 %v1325
    %3826 = vmatprep.subr.bf16.mxu0 0
    %3827 = vmatpush1.bf16.msra.mxu0 %v1324
    %3828 = vmatprep.subr.bf16.mxu0 0
    %3829 = vmatpush1.bf16.msra.mxu0 %v1323
    %3830 = vmatprep.subr.bf16.mxu0 0
    %3831 = vmatpush2.bf16.msra.mxu0 0
    %3832 = vmatprep.subr.bf16.mxu0 0
    %3833 = vmatpush2.bf16.msra.mxu0 0
    %3834 = vmatprep.subr.bf16.mxu0 0
    %3835 = vmatpush2.bf16.msra.mxu0 0
    %3836 = vmatprep.subr.bf16.mxu0 0
    %3837 = vmatpush2.bf16.msra.mxu0 0
    %3838 = vmatprep.subr.bf16.mxu0 0
    %3839 = vmatpush2.bf16.msra.mxu0 0
    %3840 = vmatprep.subr.bf16.mxu0 0
    %3841 = vmatpush2.bf16.msra.mxu0 0
    %3842 = vmatprep.subr.bf16.mxu0 0
    %3843 = vmatpush2.bf16.msra.mxu0 0
    %3844 = vmatprep.subr.bf16.mxu0 0
    %3845 = vmatpush2.bf16.msra.mxu0 0
    %3846 = vmatprep.mubr.bf16.mxu0 0
    %3847 = vmatmul.mubr.bf16.gmra.mxu0 %v3808
    %v3848 = vpop.f32.mrf.mxu0
    %v3849 = vadd.f32 %v1289, %v3848
    %v3850 = vpop.f32.mrf.mxu0
    %v3851 = vpop.f32.mrf.mxu0
    %v3852 = vadd.f32 %v1289, %v3851
    %v3853 = vpop.f32.mrf.mxu0
    %3854 = vmatprep.mubr.bf16.mxu0 0
    %3855 = vmatmul.mubr.bf16.gmra.mxu0 %v3809
    %v3856 = vpop.f32.mrf.mxu0
    %v3857 = vadd.f32 %v1289, %v3856
    %v3858 = vpop.f32.mrf.mxu0
    %v3859 = vpop.f32.mrf.mxu0
    %v3860 = vadd.f32 %v1289, %v3859
    %v3861 = vpop.f32.mrf.mxu0
    %3862 = vmatprep.mubr.bf16.mxu0 0
    %3863 = vmatmul.mubr.bf16.gmra.mxu0 %v3810
    %v3864 = vpop.f32.mrf.mxu0
    %v3865 = vadd.f32 %v1289, %v3864
    %v3866 = vpop.f32.mrf.mxu0
    %v3867 = vpop.f32.mrf.mxu0
    %v3868 = vadd.f32 %v1289, %v3867
    %v3869 = vpop.f32.mrf.mxu0
    %3870 = vmatprep.mubr.bf16.mxu0 0
    %3871 = vmatmul.mubr.bf16.gmra.mxu0 %v3811
    %v3872 = vpop.f32.mrf.mxu0
    %v3873 = vadd.f32 %v1289, %v3872
    %v3874 = vpop.f32.mrf.mxu0
    %v3875 = vpop.f32.mrf.mxu0
    %v3876 = vadd.f32 %v1289, %v3875
    %v3877 = vpop.f32.mrf.mxu0
    %3878 = vmatprep.mubr.bf16.mxu0 0
    %3879 = vmatmul.mubr.bf16.gmra.mxu0 %v3812
    %v3880 = vpop.f32.mrf.mxu0
    %v3881 = vadd.f32 %v1289, %v3880
    %v3882 = vpop.f32.mrf.mxu0
    %v3883 = vpop.f32.mrf.mxu0
    %v3884 = vadd.f32 %v1289, %v3883
    %v3885 = vpop.f32.mrf.mxu0
    %3886 = vmatprep.mubr.bf16.mxu0 0
    %3887 = vmatmul.mubr.bf16.gmra.mxu0 %v3813
    %v3888 = vpop.f32.mrf.mxu0
    %v3889 = vadd.f32 %v1289, %v3888
    %v3890 = vpop.f32.mrf.mxu0
    %v3891 = vpop.f32.mrf.mxu0
    %v3892 = vadd.f32 %v1289, %v3891
    %v3893 = vpop.f32.mrf.mxu0
    %3894 = vdwg.mxu0
    %v3895 = vmax.f32 %v3849, 0.0
    %v3896 = vmax.f32 %v3852, 0.0
    %v3897 = vmax.f32 %v3857, 0.0
    %v3898 = vmax.f32 %v3860, 0.0
    %v3899 = vmax.f32 %v3865, 0.0
    %v3900 = vmax.f32 %v3868, 0.0
    %v3901 = vmax.f32 %v3873, 0.0
    %v3902 = vmax.f32 %v3876, 0.0
    %v3903 = vmax.f32 %v3881, 0.0
    %v3904 = vmax.f32 %v3884, 0.0
    %v3905 = vmax.f32 %v3889, 0.0
    %v3906 = vmax.f32 %v3892, 0.0
    %3907 = vst [vmem:[%s7 + $0x360] sm:$0xff] %v3895
    %3908 = vst [vmem:[%s7 + $0x368] sm:$0xff] %v3896
    %3909 = vst [vmem:[%s7 + $0x370] sm:$0xff] %v3897
    %3910 = vst [vmem:[%s7 + $0x378] sm:$0xff] %v3898
    %3911 = vst [vmem:[%s7 + $0x380] sm:$0xff] %v3899
    %3912 = vst [vmem:[%s7 + $0x388] sm:$0xff] %v3900
    %3913 = vst [vmem:[%s7 + $0x390] sm:$0xff] %v3901
    %3914 = vst [vmem:[%s7 + $0x398] sm:$0xff] %v3902
    %3915 = vst [vmem:[%s7 + $0x3a0] sm:$0xff] %v3903
    %3916 = vst [vmem:[%s7 + $0x3a8] sm:$0xff] %v3904
    %3917 = vst [vmem:[%s7 + $0x3b0] sm:$0xff] %v3905
    %3918 = vst [vmem:[%s7 + $0x3b8] sm:$0xff] %v3906
    %v3919 = vld [vmem:[#allocation7 + $0x28] sm:$0xf]
    %v3920 = vld [vmem:[#allocation7 + $0x68] sm:$0xf]
    %v3921 = vld [vmem:[#allocation7 + $0xa8] sm:$0xf]
    %v3922 = vld [vmem:[#allocation7 + $0xe8] sm:$0xf]
    %v3923 = vld [vmem:[#allocation7 + $0x128] sm:$0xf]
    %v3924 = vld [vmem:[#allocation7 + $0x168] sm:$0xf]
    %v3925 = vld [vmem:[#allocation7 + $0x1a8] sm:$0xf]
    %v3926 = vld [vmem:[#allocation7 + $0x1e8] sm:$0xf]
    %v3927 = vld [vmem:[#allocation7 + $0x228] sm:$0xf]
    %v3928 = vld [vmem:[#allocation7 + $0x268] sm:$0xf]
    %v3929 = vld [vmem:[#allocation7 + $0x2a8] sm:$0xf]
    %v3930 = vld [vmem:[#allocation7 + $0x2e8] sm:$0xf]
    %v3931 = vld [vmem:[#allocation7 + $0x328] sm:$0xf]
    %v3932 = vld [vmem:[#allocation7 + $0x368] sm:$0xf]
    %v3933 = vld [vmem:[#allocation7 + $0x3a8] sm:$0xf]
    %v3934 = vld [vmem:[#allocation7 + $0x3e8] sm:$0xf]
    %v3935 = vld [vmem:[#allocation8 + $0xa] sm:$0x1]
    %v3937 = vlaneseq
    %v3938 = vshrl.u32 %v3937, 7
    %v3939 = vsub.s32 0, %v3938
    %v3940 = vrot.slane %v3935, %v3939
    %v3958 = vunpack.c.l.b16 %v3919
    %v3959 = vunpack.c.l.b16 %v3920
    %v3960 = vunpack.c.l.b16 %v3921
    %v3961 = vunpack.c.l.b16 %v3922
    %v3962 = vunpack.c.l.b16 %v3923
    %v3963 = vunpack.c.l.b16 %v3924
    %v3964 = vunpack.c.l.b16 %v3925
    %v3965 = vunpack.c.l.b16 %v3926
    %v3966 = vunpack.c.l.b16 %v3927
    %v3967 = vunpack.c.l.b16 %v3928
    %v3968 = vunpack.c.l.b16 %v3929
    %v3969 = vunpack.c.l.b16 %v3930
    %v3970 = vunpack.c.l.b16 %v3931
    %v3971 = vunpack.c.l.b16 %v3932
    %v3972 = vunpack.c.l.b16 %v3933
    %v3973 = vunpack.c.l.b16 %v3934
    %v3974 = vpack.c.b16 %v3959, %v3958
    %v3975 = vpack.c.b16 %v3961, %v3960
    %v3976 = vpack.c.b16 %v3963, %v3962
    %v3977 = vpack.c.b16 %v3965, %v3964
    %v3978 = vpack.c.b16 %v3967, %v3966
    %v3979 = vpack.c.b16 %v3969, %v3968
    %v3980 = vpack.c.b16 %v3971, %v3970
    %v3981 = vpack.c.b16 %v3973, %v3972
    %3990 = vmatprep.subr.bf16.mxu0 0
    %3991 = vmatpush1.bf16.msra.mxu0 %v3981
    %3992 = vmatprep.subr.bf16.mxu0 0
    %3993 = vmatpush1.bf16.msra.mxu0 %v3980
    %3994 = vmatprep.subr.bf16.mxu0 0
    %3995 = vmatpush1.bf16.msra.mxu0 %v3979
    %3996 = vmatprep.subr.bf16.mxu0 0
    %3997 = vmatpush1.bf16.msra.mxu0 %v3978
    %3998 = vmatprep.subr.bf16.mxu0 0
    %3999 = vmatpush1.bf16.msra.mxu0 %v3977
    %4000 = vmatprep.subr.bf16.mxu0 0
    %4001 = vmatpush1.bf16.msra.mxu0 %v3976
    %4002 = vmatprep.subr.bf16.mxu0 0
    %4003 = vmatpush1.bf16.msra.mxu0 %v3975
    %4004 = vmatprep.subr.bf16.mxu0 0
    %4005 = vmatpush1.bf16.msra.mxu0 %v3974
    %4006 = vmatprep.subr.bf16.mxu0 0
    %4007 = vmatpush2.bf16.msra.mxu0 0
    %4008 = vmatprep.subr.bf16.mxu0 0
    %4009 = vmatpush2.bf16.msra.mxu0 0
    %4010 = vmatprep.subr.bf16.mxu0 0
    %4011 = vmatpush2.bf16.msra.mxu0 0
    %4012 = vmatprep.subr.bf16.mxu0 0
    %4013 = vmatpush2.bf16.msra.mxu0 0
    %4014 = vmatprep.subr.bf16.mxu0 0
    %4015 = vmatpush2.bf16.msra.mxu0 0
    %4016 = vmatprep.subr.bf16.mxu0 0
    %4017 = vmatpush2.bf16.msra.mxu0 0
    %4018 = vmatprep.subr.bf16.mxu0 0
    %4019 = vmatpush2.bf16.msra.mxu0 0
    %4020 = vmatprep.subr.bf16.mxu0 0
    %4021 = vmatpush2.bf16.msra.mxu0 0
    %4022 = vmatprep.mubr.bf16.mxu0 0
    %4023 = vmatmul.mubr.bf16.gmra.mxu0 %v1092
    %v4024 = vpop.f32.mrf.mxu0
    %v4025 = vadd.f32 %v3940, %v4024
    %v4026 = vpop.f32.mrf.mxu0
    %v4027 = vpop.f32.mrf.mxu0
    %v4028 = vadd.f32 %v3940, %v4027
    %v4029 = vpop.f32.mrf.mxu0
    %4030 = vmatprep.mubr.bf16.mxu0 0
    %4031 = vmatmul.mubr.bf16.gmra.mxu0 %v1093
    %v4032 = vpop.f32.mrf.mxu0
    %v4033 = vadd.f32 %v3940, %v4032
    %v4034 = vpop.f32.mrf.mxu0
    %v4035 = vpop.f32.mrf.mxu0
    %v4036 = vadd.f32 %v3940, %v4035
    %v4037 = vpop.f32.mrf.mxu0
    %4038 = vmatprep.mubr.bf16.mxu0 0
    %4039 = vmatmul.mubr.bf16.gmra.mxu0 %v1094
    %v4040 = vpop.f32.mrf.mxu0
    %v4041 = vadd.f32 %v3940, %v4040
    %v4042 = vpop.f32.mrf.mxu0
    %v4043 = vpop.f32.mrf.mxu0
    %v4044 = vadd.f32 %v3940, %v4043
    %v4045 = vpop.f32.mrf.mxu0
    %4046 = vmatprep.mubr.bf16.mxu0 0
    %4047 = vmatmul.mubr.bf16.gmra.mxu0 %v1095
    %v4048 = vpop.f32.mrf.mxu0
    %v4049 = vadd.f32 %v3940, %v4048
    %v4050 = vpop.f32.mrf.mxu0
    %v4051 = vpop.f32.mrf.mxu0
    %v4052 = vadd.f32 %v3940, %v4051
    %v4053 = vpop.f32.mrf.mxu0
    %4054 = vmatprep.mubr.bf16.mxu0 0
    %4055 = vmatmul.mubr.bf16.gmra.mxu0 %v1096
    %v4056 = vpop.f32.mrf.mxu0
    %v4057 = vadd.f32 %v3940, %v4056
    %v4058 = vpop.f32.mrf.mxu0
    %v4059 = vpop.f32.mrf.mxu0
    %v4060 = vadd.f32 %v3940, %v4059
    %v4061 = vpop.f32.mrf.mxu0
    %4062 = vmatprep.mubr.bf16.mxu0 0
    %4063 = vmatmul.mubr.bf16.gmra.mxu0 %v1097
    %v4064 = vpop.f32.mrf.mxu0
    %v4065 = vadd.f32 %v3940, %v4064
    %v4066 = vpop.f32.mrf.mxu0
    %v4067 = vpop.f32.mrf.mxu0
    %v4068 = vadd.f32 %v3940, %v4067
    %v4069 = vpop.f32.mrf.mxu0
    %4070 = vdwg.mxu0
    %v4071 = vmax.f32 %v4025, 0.0
    %v4072 = vmax.f32 %v4028, 0.0
    %v4073 = vmax.f32 %v4033, 0.0
    %v4074 = vmax.f32 %v4036, 0.0
    %v4075 = vmax.f32 %v4041, 0.0
    %v4076 = vmax.f32 %v4044, 0.0
    %v4077 = vmax.f32 %v4049, 0.0
    %v4078 = vmax.f32 %v4052, 0.0
    %v4079 = vmax.f32 %v4057, 0.0
    %v4080 = vmax.f32 %v4060, 0.0
    %v4081 = vmax.f32 %v4065, 0.0
    %v4082 = vmax.f32 %v4068, 0.0
    %v4083 = vpack.c.bf16 %v4072, %v4071
    %v4084 = vpack.c.bf16 %v4074, %v4073
    %v4085 = vpack.c.bf16 %v4076, %v4075
    %v4086 = vpack.c.bf16 %v4078, %v4077
    %v4087 = vpack.c.bf16 %v4080, %v4079
    %v4088 = vpack.c.bf16 %v4082, %v4081
    %4089 = vmatprep.subr.bf16.mxu0 0
    %4090 = vmatpush1.bf16.msra.mxu0 %v1330
    %4091 = vmatprep.subr.bf16.mxu0 0
    %4092 = vmatpush1.bf16.msra.mxu0 %v1329
    %4093 = vmatprep.subr.bf16.mxu0 0
    %4094 = vmatpush1.bf16.msra.mxu0 %v1328
    %4095 = vmatprep.subr.bf16.mxu0 0
    %4096 = vmatpush1.bf16.msra.mxu0 %v1327
    %4097 = vmatprep.subr.bf16.mxu0 0
    %4098 = vmatpush1.bf16.msra.mxu0 %v1326
    %4099 = vmatprep.subr.bf16.mxu0 0
    %4100 = vmatpush1.bf16.msra.mxu0 %v1325
    %4101 = vmatprep.subr.bf16.mxu0 0
    %4102 = vmatpush1.bf16.msra.mxu0 %v1324
    %4103 = vmatprep.subr.bf16.mxu0 0
    %4104 = vmatpush1.bf16.msra.mxu0 %v1323
    %4105 = vmatprep.subr.bf16.mxu0 0
    %4106 = vmatpush2.bf16.msra.mxu0 0
    %4107 = vmatprep.subr.bf16.mxu0 0
    %4108 = vmatpush2.bf16.msra.mxu0 0
    %4109 = vmatprep.subr.bf16.mxu0 0
    %4110 = vmatpush2.bf16.msra.mxu0 0
    %4111 = vmatprep.subr.bf16.mxu0 0
    %4112 = vmatpush2.bf16.msra.mxu0 0
    %4113 = vmatprep.subr.bf16.mxu0 0
    %4114 = vmatpush2.bf16.msra.mxu0 0
    %4115 = vmatprep.subr.bf16.mxu0 0
    %4116 = vmatpush2.bf16.msra.mxu0 0
    %4117 = vmatprep.subr.bf16.mxu0 0
    %4118 = vmatpush2.bf16.msra.mxu0 0
    %4119 = vmatprep.subr.bf16.mxu0 0
    %4120 = vmatpush2.bf16.msra.mxu0 0
    %4121 = vmatprep.mubr.bf16.mxu0 0
    %4122 = vmatmul.mubr.bf16.gmra.mxu0 %v4083
    %v4123 = vpop.f32.mrf.mxu0
    %v4124 = vadd.f32 %v1289, %v4123
    %v4125 = vpop.f32.mrf.mxu0
    %v4126 = vpop.f32.mrf.mxu0
    %v4127 = vadd.f32 %v1289, %v4126
    %v4128 = vpop.f32.mrf.mxu0
    %4129 = vmatprep.mubr.bf16.mxu0 0
    %4130 = vmatmul.mubr.bf16.gmra.mxu0 %v4084
    %v4131 = vpop.f32.mrf.mxu0
    %v4132 = vadd.f32 %v1289, %v4131
    %v4133 = vpop.f32.mrf.mxu0
    %v4134 = vpop.f32.mrf.mxu0
    %v4135 = vadd.f32 %v1289, %v4134
    %v4136 = vpop.f32.mrf.mxu0
    %4137 = vmatprep.mubr.bf16.mxu0 0
    %4138 = vmatmul.mubr.bf16.gmra.mxu0 %v4085
    %v4139 = vpop.f32.mrf.mxu0
    %v4140 = vadd.f32 %v1289, %v4139
    %v4141 = vpop.f32.mrf.mxu0
    %v4142 = vpop.f32.mrf.mxu0
    %v4143 = vadd.f32 %v1289, %v4142
    %v4144 = vpop.f32.mrf.mxu0
    %4145 = vmatprep.mubr.bf16.mxu0 0
    %4146 = vmatmul.mubr.bf16.gmra.mxu0 %v4086
    %v4147 = vpop.f32.mrf.mxu0
    %v4148 = vadd.f32 %v1289, %v4147
    %v4149 = vpop.f32.mrf.mxu0
    %v4150 = vpop.f32.mrf.mxu0
    %v4151 = vadd.f32 %v1289, %v4150
    %v4152 = vpop.f32.mrf.mxu0
    %4153 = vmatprep.mubr.bf16.mxu0 0
    %4154 = vmatmul.mubr.bf16.gmra.mxu0 %v4087
    %v4155 = vpop.f32.mrf.mxu0
    %v4156 = vadd.f32 %v1289, %v4155
    %v4157 = vpop.f32.mrf.mxu0
    %v4158 = vpop.f32.mrf.mxu0
    %v4159 = vadd.f32 %v1289, %v4158
    %v4160 = vpop.f32.mrf.mxu0
    %4161 = vmatprep.mubr.bf16.mxu0 0
    %4162 = vmatmul.mubr.bf16.gmra.mxu0 %v4088
    %v4163 = vpop.f32.mrf.mxu0
    %v4164 = vadd.f32 %v1289, %v4163
    %v4165 = vpop.f32.mrf.mxu0
    %v4166 = vpop.f32.mrf.mxu0
    %v4167 = vadd.f32 %v1289, %v4166
    %v4168 = vpop.f32.mrf.mxu0
    %4169 = vdwg.mxu0
    %v4170 = vmax.f32 %v4124, 0.0
    %v4171 = vmax.f32 %v4127, 0.0
    %v4172 = vmax.f32 %v4132, 0.0
    %v4173 = vmax.f32 %v4135, 0.0
    %v4174 = vmax.f32 %v4140, 0.0
    %v4175 = vmax.f32 %v4143, 0.0
    %v4176 = vmax.f32 %v4148, 0.0
    %v4177 = vmax.f32 %v4151, 0.0
    %v4178 = vmax.f32 %v4156, 0.0
    %v4179 = vmax.f32 %v4159, 0.0
    %v4180 = vmax.f32 %v4164, 0.0
    %v4181 = vmax.f32 %v4167, 0.0
    %4182 = vst [vmem:[%s7 + $0x3c0] sm:$0xff] %v4170
    %4183 = vst [vmem:[%s7 + $0x3c8] sm:$0xff] %v4171
    %4184 = vst [vmem:[%s7 + $0x3d0] sm:$0xff] %v4172
    %4185 = vst [vmem:[%s7 + $0x3d8] sm:$0xff] %v4173
    %4186 = vst [vmem:[%s7 + $0x3e0] sm:$0xff] %v4174
    %4187 = vst [vmem:[%s7 + $0x3e8] sm:$0xff] %v4175
    %4188 = vst [vmem:[%s7 + $0x3f0] sm:$0xff] %v4176
    %4189 = vst [vmem:[%s7 + $0x3f8] sm:$0xff] %v4177
    %4190 = vst [vmem:[%s7 + $0x400] sm:$0xff] %v4178
    %4191 = vst [vmem:[%s7 + $0x408] sm:$0xff] %v4179
    %4192 = vst [vmem:[%s7 + $0x410] sm:$0xff] %v4180
    %4193 = vst [vmem:[%s7 + $0x418] sm:$0xff] %v4181
    %v4194 = vld [vmem:[#allocation7 + $0x2c] sm:$0xf]
    %v4195 = vld [vmem:[#allocation7 + $0x6c] sm:$0xf]
    %v4196 = vld [vmem:[#allocation7 + $0xac] sm:$0xf]
    %v4197 = vld [vmem:[#allocation7 + $0xec] sm:$0xf]
    %v4198 = vld [vmem:[#allocation7 + $0x12c] sm:$0xf]
    %v4199 = vld [vmem:[#allocation7 + $0x16c] sm:$0xf]
    %v4200 = vld [vmem:[#allocation7 + $0x1ac] sm:$0xf]
    %v4201 = vld [vmem:[#allocation7 + $0x1ec] sm:$0xf]
    %v4202 = vld [vmem:[#allocation7 + $0x22c] sm:$0xf]
    %v4203 = vld [vmem:[#allocation7 + $0x26c] sm:$0xf]
    %v4204 = vld [vmem:[#allocation7 + $0x2ac] sm:$0xf]
    %v4205 = vld [vmem:[#allocation7 + $0x2ec] sm:$0xf]
    %v4206 = vld [vmem:[#allocation7 + $0x32c] sm:$0xf]
    %v4207 = vld [vmem:[#allocation7 + $0x36c] sm:$0xf]
    %v4208 = vld [vmem:[#allocation7 + $0x3ac] sm:$0xf]
    %v4209 = vld [vmem:[#allocation7 + $0x3ec] sm:$0xf]
    %v4210 = vld [vmem:[#allocation8 + $0xb] sm:$0x1]
    %v4212 = vlaneseq
    %v4213 = vshrl.u32 %v4212, 7
    %v4214 = vsub.s32 0, %v4213
    %v4215 = vrot.slane %v4210, %v4214
    %v4233 = vunpack.c.l.b16 %v4194
    %v4234 = vunpack.c.l.b16 %v4195
    %v4235 = vunpack.c.l.b16 %v4196
    %v4236 = vunpack.c.l.b16 %v4197
    %v4237 = vunpack.c.l.b16 %v4198
    %v4238 = vunpack.c.l.b16 %v4199
    %v4239 = vunpack.c.l.b16 %v4200
    %v4240 = vunpack.c.l.b16 %v4201
    %v4241 = vunpack.c.l.b16 %v4202
    %v4242 = vunpack.c.l.b16 %v4203
    %v4243 = vunpack.c.l.b16 %v4204
    %v4244 = vunpack.c.l.b16 %v4205
    %v4245 = vunpack.c.l.b16 %v4206
    %v4246 = vunpack.c.l.b16 %v4207
    %v4247 = vunpack.c.l.b16 %v4208
    %v4248 = vunpack.c.l.b16 %v4209
    %v4249 = vpack.c.b16 %v4234, %v4233
    %v4250 = vpack.c.b16 %v4236, %v4235
    %v4251 = vpack.c.b16 %v4238, %v4237
    %v4252 = vpack.c.b16 %v4240, %v4239
    %v4253 = vpack.c.b16 %v4242, %v4241
    %v4254 = vpack.c.b16 %v4244, %v4243
    %v4255 = vpack.c.b16 %v4246, %v4245
    %v4256 = vpack.c.b16 %v4248, %v4247
    %4265 = vmatprep.subr.bf16.mxu0 0
    %4266 = vmatpush1.bf16.msra.mxu0 %v4256
    %4267 = vmatprep.subr.bf16.mxu0 0
    %4268 = vmatpush1.bf16.msra.mxu0 %v4255
    %4269 = vmatprep.subr.bf16.mxu0 0
    %4270 = vmatpush1.bf16.msra.mxu0 %v4254
    %4271 = vmatprep.subr.bf16.mxu0 0
    %4272 = vmatpush1.bf16.msra.mxu0 %v4253
    %4273 = vmatprep.subr.bf16.mxu0 0
    %4274 = vmatpush1.bf16.msra.mxu0 %v4252
    %4275 = vmatprep.subr.bf16.mxu0 0
    %4276 = vmatpush1.bf16.msra.mxu0 %v4251
    %4277 = vmatprep.subr.bf16.mxu0 0
    %4278 = vmatpush1.bf16.msra.mxu0 %v4250
    %4279 = vmatprep.subr.bf16.mxu0 0
    %4280 = vmatpush1.bf16.msra.mxu0 %v4249
    %4281 = vmatprep.subr.bf16.mxu0 0
    %4282 = vmatpush2.bf16.msra.mxu0 0
    %4283 = vmatprep.subr.bf16.mxu0 0
    %4284 = vmatpush2.bf16.msra.mxu0 0
    %4285 = vmatprep.subr.bf16.mxu0 0
    %4286 = vmatpush2.bf16.msra.mxu0 0
    %4287 = vmatprep.subr.bf16.mxu0 0
    %4288 = vmatpush2.bf16.msra.mxu0 0
    %4289 = vmatprep.subr.bf16.mxu0 0
    %4290 = vmatpush2.bf16.msra.mxu0 0
    %4291 = vmatprep.subr.bf16.mxu0 0
    %4292 = vmatpush2.bf16.msra.mxu0 0
    %4293 = vmatprep.subr.bf16.mxu0 0
    %4294 = vmatpush2.bf16.msra.mxu0 0
    %4295 = vmatprep.subr.bf16.mxu0 0
    %4296 = vmatpush2.bf16.msra.mxu0 0
    %4297 = vmatprep.mubr.bf16.mxu0 0
    %4298 = vmatmul.mubr.bf16.gmra.mxu0 %v1092
    %v4299 = vpop.f32.mrf.mxu0
    %v4300 = vadd.f32 %v4215, %v4299
    %v4301 = vpop.f32.mrf.mxu0
    %v4302 = vpop.f32.mrf.mxu0
    %v4303 = vadd.f32 %v4215, %v4302
    %v4304 = vpop.f32.mrf.mxu0
    %4305 = vmatprep.mubr.bf16.mxu0 0
    %4306 = vmatmul.mubr.bf16.gmra.mxu0 %v1093
    %v4307 = vpop.f32.mrf.mxu0
    %v4308 = vadd.f32 %v4215, %v4307
    %v4309 = vpop.f32.mrf.mxu0
    %v4310 = vpop.f32.mrf.mxu0
    %v4311 = vadd.f32 %v4215, %v4310
    %v4312 = vpop.f32.mrf.mxu0
    %4313 = vmatprep.mubr.bf16.mxu0 0
    %4314 = vmatmul.mubr.bf16.gmra.mxu0 %v1094
    %v4315 = vpop.f32.mrf.mxu0
    %v4316 = vadd.f32 %v4215, %v4315
    %v4317 = vpop.f32.mrf.mxu0
    %v4318 = vpop.f32.mrf.mxu0
    %v4319 = vadd.f32 %v4215, %v4318
    %v4320 = vpop.f32.mrf.mxu0
    %4321 = vmatprep.mubr.bf16.mxu0 0
    %4322 = vmatmul.mubr.bf16.gmra.mxu0 %v1095
    %v4323 = vpop.f32.mrf.mxu0
    %v4324 = vadd.f32 %v4215, %v4323
    %v4325 = vpop.f32.mrf.mxu0
    %v4326 = vpop.f32.mrf.mxu0
    %v4327 = vadd.f32 %v4215, %v4326
    %v4328 = vpop.f32.mrf.mxu0
    %4329 = vmatprep.mubr.bf16.mxu0 0
    %4330 = vmatmul.mubr.bf16.gmra.mxu0 %v1096
    %v4331 = vpop.f32.mrf.mxu0
    %v4332 = vadd.f32 %v4215, %v4331
    %v4333 = vpop.f32.mrf.mxu0
    %v4334 = vpop.f32.mrf.mxu0
    %v4335 = vadd.f32 %v4215, %v4334
    %v4336 = vpop.f32.mrf.mxu0
    %4337 = vmatprep.mubr.bf16.mxu0 0
    %4338 = vmatmul.mubr.bf16.gmra.mxu0 %v1097
    %v4339 = vpop.f32.mrf.mxu0
    %v4340 = vadd.f32 %v4215, %v4339
    %v4341 = vpop.f32.mrf.mxu0
    %v4342 = vpop.f32.mrf.mxu0
    %v4343 = vadd.f32 %v4215, %v4342
    %v4344 = vpop.f32.mrf.mxu0
    %4345 = vdwg.mxu0
    %v4346 = vmax.f32 %v4300, 0.0
    %v4347 = vmax.f32 %v4303, 0.0
    %v4348 = vmax.f32 %v4308, 0.0
    %v4349 = vmax.f32 %v4311, 0.0
    %v4350 = vmax.f32 %v4316, 0.0
    %v4351 = vmax.f32 %v4319, 0.0
    %v4352 = vmax.f32 %v4324, 0.0
    %v4353 = vmax.f32 %v4327, 0.0
    %v4354 = vmax.f32 %v4332, 0.0
    %v4355 = vmax.f32 %v4335, 0.0
    %v4356 = vmax.f32 %v4340, 0.0
    %v4357 = vmax.f32 %v4343, 0.0
    %v4358 = vpack.c.bf16 %v4347, %v4346
    %v4359 = vpack.c.bf16 %v4349, %v4348
    %v4360 = vpack.c.bf16 %v4351, %v4350
    %v4361 = vpack.c.bf16 %v4353, %v4352
    %v4362 = vpack.c.bf16 %v4355, %v4354
    %v4363 = vpack.c.bf16 %v4357, %v4356
    %4364 = vmatprep.subr.bf16.mxu0 0
    %4365 = vmatpush1.bf16.msra.mxu0 %v1330
    %4366 = vmatprep.subr.bf16.mxu0 0
    %4367 = vmatpush1.bf16.msra.mxu0 %v1329
    %4368 = vmatprep.subr.bf16.mxu0 0
    %4369 = vmatpush1.bf16.msra.mxu0 %v1328
    %4370 = vmatprep.subr.bf16.mxu0 0
    %4371 = vmatpush1.bf16.msra.mxu0 %v1327
    %4372 = vmatprep.subr.bf16.mxu0 0
    %4373 = vmatpush1.bf16.msra.mxu0 %v1326
    %4374 = vmatprep.subr.bf16.mxu0 0
    %4375 = vmatpush1.bf16.msra.mxu0 %v1325
    %4376 = vmatprep.subr.bf16.mxu0 0
    %4377 = vmatpush1.bf16.msra.mxu0 %v1324
    %4378 = vmatprep.subr.bf16.mxu0 0
    %4379 = vmatpush1.bf16.msra.mxu0 %v1323
    %4380 = vmatprep.subr.bf16.mxu0 0
    %4381 = vmatpush2.bf16.msra.mxu0 0
    %4382 = vmatprep.subr.bf16.mxu0 0
    %4383 = vmatpush2.bf16.msra.mxu0 0
    %4384 = vmatprep.subr.bf16.mxu0 0
    %4385 = vmatpush2.bf16.msra.mxu0 0
    %4386 = vmatprep.subr.bf16.mxu0 0
    %4387 = vmatpush2.bf16.msra.mxu0 0
    %4388 = vmatprep.subr.bf16.mxu0 0
    %4389 = vmatpush2.bf16.msra.mxu0 0
    %4390 = vmatprep.subr.bf16.mxu0 0
    %4391 = vmatpush2.bf16.msra.mxu0 0
    %4392 = vmatprep.subr.bf16.mxu0 0
    %4393 = vmatpush2.bf16.msra.mxu0 0
    %4394 = vmatprep.subr.bf16.mxu0 0
    %4395 = vmatpush2.bf16.msra.mxu0 0
    %4396 = vmatprep.mubr.bf16.mxu0 0
    %4397 = vmatmul.mubr.bf16.gmra.mxu0 %v4358
    %v4398 = vpop.f32.mrf.mxu0
    %v4399 = vadd.f32 %v1289, %v4398
    %v4400 = vpop.f32.mrf.mxu0
    %v4401 = vpop.f32.mrf.mxu0
    %v4402 = vadd.f32 %v1289, %v4401
    %v4403 = vpop.f32.mrf.mxu0
    %4404 = vmatprep.mubr.bf16.mxu0 0
    %4405 = vmatmul.mubr.bf16.gmra.mxu0 %v4359
    %v4406 = vpop.f32.mrf.mxu0
    %v4407 = vadd.f32 %v1289, %v4406
    %v4408 = vpop.f32.mrf.mxu0
    %v4409 = vpop.f32.mrf.mxu0
    %v4410 = vadd.f32 %v1289, %v4409
    %v4411 = vpop.f32.mrf.mxu0
    %4412 = vmatprep.mubr.bf16.mxu0 0
    %4413 = vmatmul.mubr.bf16.gmra.mxu0 %v4360
    %v4414 = vpop.f32.mrf.mxu0
    %v4415 = vadd.f32 %v1289, %v4414
    %v4416 = vpop.f32.mrf.mxu0
    %v4417 = vpop.f32.mrf.mxu0
    %v4418 = vadd.f32 %v1289, %v4417
    %v4419 = vpop.f32.mrf.mxu0
    %4420 = vmatprep.mubr.bf16.mxu0 0
    %4421 = vmatmul.mubr.bf16.gmra.mxu0 %v4361
    %v4422 = vpop.f32.mrf.mxu0
    %v4423 = vadd.f32 %v1289, %v4422
    %v4424 = vpop.f32.mrf.mxu0
    %v4425 = vpop.f32.mrf.mxu0
    %v4426 = vadd.f32 %v1289, %v4425
    %v4427 = vpop.f32.mrf.mxu0
    %4428 = vmatprep.mubr.bf16.mxu0 0
    %4429 = vmatmul.mubr.bf16.gmra.mxu0 %v4362
    %v4430 = vpop.f32.mrf.mxu0
    %v4431 = vadd.f32 %v1289, %v4430
    %v4432 = vpop.f32.mrf.mxu0
    %v4433 = vpop.f32.mrf.mxu0
    %v4434 = vadd.f32 %v1289, %v4433
    %v4435 = vpop.f32.mrf.mxu0
    %4436 = vmatprep.mubr.bf16.mxu0 0
    %4437 = vmatmul.mubr.bf16.gmra.mxu0 %v4363
    %v4438 = vpop.f32.mrf.mxu0
    %v4439 = vadd.f32 %v1289, %v4438
    %v4440 = vpop.f32.mrf.mxu0
    %v4441 = vpop.f32.mrf.mxu0
    %v4442 = vadd.f32 %v1289, %v4441
    %v4443 = vpop.f32.mrf.mxu0
    %4444 = vdwg.mxu0
    %v4445 = vmax.f32 %v4399, 0.0
    %v4446 = vmax.f32 %v4402, 0.0
    %v4447 = vmax.f32 %v4407, 0.0
    %v4448 = vmax.f32 %v4410, 0.0
    %v4449 = vmax.f32 %v4415, 0.0
    %v4450 = vmax.f32 %v4418, 0.0
    %v4451 = vmax.f32 %v4423, 0.0
    %v4452 = vmax.f32 %v4426, 0.0
    %v4453 = vmax.f32 %v4431, 0.0
    %v4454 = vmax.f32 %v4434, 0.0
    %v4455 = vmax.f32 %v4439, 0.0
    %v4456 = vmax.f32 %v4442, 0.0
    %4457 = vst [vmem:[%s7 + $0x420] sm:$0xff] %v4445
    %4458 = vst [vmem:[%s7 + $0x428] sm:$0xff] %v4446
    %4459 = vst [vmem:[%s7 + $0x430] sm:$0xff] %v4447
    %4460 = vst [vmem:[%s7 + $0x438] sm:$0xff] %v4448
    %4461 = vst [vmem:[%s7 + $0x440] sm:$0xff] %v4449
    %4462 = vst [vmem:[%s7 + $0x448] sm:$0xff] %v4450
    %4463 = vst [vmem:[%s7 + $0x450] sm:$0xff] %v4451
    %4464 = vst [vmem:[%s7 + $0x458] sm:$0xff] %v4452
    %4465 = vst [vmem:[%s7 + $0x460] sm:$0xff] %v4453
    %4466 = vst [vmem:[%s7 + $0x468] sm:$0xff] %v4454
    %4467 = vst [vmem:[%s7 + $0x470] sm:$0xff] %v4455
    %4468 = vst [vmem:[%s7 + $0x478] sm:$0xff] %v4456
    %v4469 = vld [vmem:[#allocation7 + $0x30] sm:$0xf]
    %v4470 = vld [vmem:[#allocation7 + $0x70] sm:$0xf]
    %v4471 = vld [vmem:[#allocation7 + $0xb0] sm:$0xf]
    %v4472 = vld [vmem:[#allocation7 + $0xf0] sm:$0xf]
    %v4473 = vld [vmem:[#allocation7 + $0x130] sm:$0xf]
    %v4474 = vld [vmem:[#allocation7 + $0x170] sm:$0xf]
    %v4475 = vld [vmem:[#allocation7 + $0x1b0] sm:$0xf]
    %v4476 = vld [vmem:[#allocation7 + $0x1f0] sm:$0xf]
    %v4477 = vld [vmem:[#allocation7 + $0x230] sm:$0xf]
    %v4478 = vld [vmem:[#allocation7 + $0x270] sm:$0xf]
    %v4479 = vld [vmem:[#allocation7 + $0x2b0] sm:$0xf]
    %v4480 = vld [vmem:[#allocation7 + $0x2f0] sm:$0xf]
    %v4481 = vld [vmem:[#allocation7 + $0x330] sm:$0xf]
    %v4482 = vld [vmem:[#allocation7 + $0x370] sm:$0xf]
    %v4483 = vld [vmem:[#allocation7 + $0x3b0] sm:$0xf]
    %v4484 = vld [vmem:[#allocation7 + $0x3f0] sm:$0xf]
    %v4485 = vld [vmem:[#allocation8 + $0xc] sm:$0x1]
    %v4487 = vlaneseq
    %v4488 = vshrl.u32 %v4487, 7
    %v4489 = vsub.s32 0, %v4488
    %v4490 = vrot.slane %v4485, %v4489
    %v4508 = vunpack.c.l.b16 %v4469
    %v4509 = vunpack.c.l.b16 %v4470
    %v4510 = vunpack.c.l.b16 %v4471
    %v4511 = vunpack.c.l.b16 %v4472
    %v4512 = vunpack.c.l.b16 %v4473
    %v4513 = vunpack.c.l.b16 %v4474
    %v4514 = vunpack.c.l.b16 %v4475
    %v4515 = vunpack.c.l.b16 %v4476
    %v4516 = vunpack.c.l.b16 %v4477
    %v4517 = vunpack.c.l.b16 %v4478
    %v4518 = vunpack.c.l.b16 %v4479
    %v4519 = vunpack.c.l.b16 %v4480
    %v4520 = vunpack.c.l.b16 %v4481
    %v4521 = vunpack.c.l.b16 %v4482
    %v4522 = vunpack.c.l.b16 %v4483
    %v4523 = vunpack.c.l.b16 %v4484
    %v4524 = vpack.c.b16 %v4509, %v4508
    %v4525 = vpack.c.b16 %v4511, %v4510
    %v4526 = vpack.c.b16 %v4513, %v4512
    %v4527 = vpack.c.b16 %v4515, %v4514
    %v4528 = vpack.c.b16 %v4517, %v4516
    %v4529 = vpack.c.b16 %v4519, %v4518
    %v4530 = vpack.c.b16 %v4521, %v4520
    %v4531 = vpack.c.b16 %v4523, %v4522
    %4540 = vmatprep.subr.bf16.mxu0 0
    %4541 = vmatpush1.bf16.msra.mxu0 %v4531
    %4542 = vmatprep.subr.bf16.mxu0 0
    %4543 = vmatpush1.bf16.msra.mxu0 %v4530
    %4544 = vmatprep.subr.bf16.mxu0 0
    %4545 = vmatpush1.bf16.msra.mxu0 %v4529
    %4546 = vmatprep.subr.bf16.mxu0 0
    %4547 = vmatpush1.bf16.msra.mxu0 %v4528
    %4548 = vmatprep.subr.bf16.mxu0 0
    %4549 = vmatpush1.bf16.msra.mxu0 %v4527
    %4550 = vmatprep.subr.bf16.mxu0 0
    %4551 = vmatpush1.bf16.msra.mxu0 %v4526
    %4552 = vmatprep.subr.bf16.mxu0 0
    %4553 = vmatpush1.bf16.msra.mxu0 %v4525
    %4554 = vmatprep.subr.bf16.mxu0 0
    %4555 = vmatpush1.bf16.msra.mxu0 %v4524
    %4556 = vmatprep.subr.bf16.mxu0 0
    %4557 = vmatpush2.bf16.msra.mxu0 0
    %4558 = vmatprep.subr.bf16.mxu0 0
    %4559 = vmatpush2.bf16.msra.mxu0 0
    %4560 = vmatprep.subr.bf16.mxu0 0
    %4561 = vmatpush2.bf16.msra.mxu0 0
    %4562 = vmatprep.subr.bf16.mxu0 0
    %4563 = vmatpush2.bf16.msra.mxu0 0
    %4564 = vmatprep.subr.bf16.mxu0 0
    %4565 = vmatpush2.bf16.msra.mxu0 0
    %4566 = vmatprep.subr.bf16.mxu0 0
    %4567 = vmatpush2.bf16.msra.mxu0 0
    %4568 = vmatprep.subr.bf16.mxu0 0
    %4569 = vmatpush2.bf16.msra.mxu0 0
    %4570 = vmatprep.subr.bf16.mxu0 0
    %4571 = vmatpush2.bf16.msra.mxu0 0
    %4572 = vmatprep.mubr.bf16.mxu0 0
    %4573 = vmatmul.mubr.bf16.gmra.mxu0 %v1092
    %v4574 = vpop.f32.mrf.mxu0
    %v4575 = vadd.f32 %v4490, %v4574
    %v4576 = vpop.f32.mrf.mxu0
    %v4577 = vpop.f32.mrf.mxu0
    %v4578 = vadd.f32 %v4490, %v4577
    %v4579 = vpop.f32.mrf.mxu0
    %4580 = vmatprep.mubr.bf16.mxu0 0
    %4581 = vmatmul.mubr.bf16.gmra.mxu0 %v1093
    %v4582 = vpop.f32.mrf.mxu0
    %v4583 = vadd.f32 %v4490, %v4582
    %v4584 = vpop.f32.mrf.mxu0
    %v4585 = vpop.f32.mrf.mxu0
    %v4586 = vadd.f32 %v4490, %v4585
    %v4587 = vpop.f32.mrf.mxu0
    %4588 = vmatprep.mubr.bf16.mxu0 0
    %4589 = vmatmul.mubr.bf16.gmra.mxu0 %v1094
    %v4590 = vpop.f32.mrf.mxu0
    %v4591 = vadd.f32 %v4490, %v4590
    %v4592 = vpop.f32.mrf.mxu0
    %v4593 = vpop.f32.mrf.mxu0
    %v4594 = vadd.f32 %v4490, %v4593
    %v4595 = vpop.f32.mrf.mxu0
    %4596 = vmatprep.mubr.bf16.mxu0 0
    %4597 = vmatmul.mubr.bf16.gmra.mxu0 %v1095
    %v4598 = vpop.f32.mrf.mxu0
    %v4599 = vadd.f32 %v4490, %v4598
    %v4600 = vpop.f32.mrf.mxu0
    %v4601 = vpop.f32.mrf.mxu0
    %v4602 = vadd.f32 %v4490, %v4601
    %v4603 = vpop.f32.mrf.mxu0
    %4604 = vmatprep.mubr.bf16.mxu0 0
    %4605 = vmatmul.mubr.bf16.gmra.mxu0 %v1096
    %v4606 = vpop.f32.mrf.mxu0
    %v4607 = vadd.f32 %v4490, %v4606
    %v4608 = vpop.f32.mrf.mxu0
    %v4609 = vpop.f32.mrf.mxu0
    %v4610 = vadd.f32 %v4490, %v4609
    %v4611 = vpop.f32.mrf.mxu0
    %4612 = vmatprep.mubr.bf16.mxu0 0
    %4613 = vmatmul.mubr.bf16.gmra.mxu0 %v1097
    %v4614 = vpop.f32.mrf.mxu0
    %v4615 = vadd.f32 %v4490, %v4614
    %v4616 = vpop.f32.mrf.mxu0
    %v4617 = vpop.f32.mrf.mxu0
    %v4618 = vadd.f32 %v4490, %v4617
    %v4619 = vpop.f32.mrf.mxu0
    %4620 = vdwg.mxu0
    %v4621 = vmax.f32 %v4575, 0.0
    %v4622 = vmax.f32 %v4578, 0.0
    %v4623 = vmax.f32 %v4583, 0.0
    %v4624 = vmax.f32 %v4586, 0.0
    %v4625 = vmax.f32 %v4591, 0.0
    %v4626 = vmax.f32 %v4594, 0.0
    %v4627 = vmax.f32 %v4599, 0.0
    %v4628 = vmax.f32 %v4602, 0.0
    %v4629 = vmax.f32 %v4607, 0.0
    %v4630 = vmax.f32 %v4610, 0.0
    %v4631 = vmax.f32 %v4615, 0.0
    %v4632 = vmax.f32 %v4618, 0.0
    %v4633 = vpack.c.bf16 %v4622, %v4621
    %v4634 = vpack.c.bf16 %v4624, %v4623
    %v4635 = vpack.c.bf16 %v4626, %v4625
    %v4636 = vpack.c.bf16 %v4628, %v4627
    %v4637 = vpack.c.bf16 %v4630, %v4629
    %v4638 = vpack.c.bf16 %v4632, %v4631
    %4639 = vmatprep.subr.bf16.mxu0 0
    %4640 = vmatpush1.bf16.msra.mxu0 %v1330
    %4641 = vmatprep.subr.bf16.mxu0 0
    %4642 = vmatpush1.bf16.msra.mxu0 %v1329
    %4643 = vmatprep.subr.bf16.mxu0 0
    %4644 = vmatpush1.bf16.msra.mxu0 %v1328
    %4645 = vmatprep.subr.bf16.mxu0 0
    %4646 = vmatpush1.bf16.msra.mxu0 %v1327
    %4647 = vmatprep.subr.bf16.mxu0 0
    %4648 = vmatpush1.bf16.msra.mxu0 %v1326
    %4649 = vmatprep.subr.bf16.mxu0 0
    %4650 = vmatpush1.bf16.msra.mxu0 %v1325
    %4651 = vmatprep.subr.bf16.mxu0 0
    %4652 = vmatpush1.bf16.msra.mxu0 %v1324
    %4653 = vmatprep.subr.bf16.mxu0 0
    %4654 = vmatpush1.bf16.msra.mxu0 %v1323
    %4655 = vmatprep.subr.bf16.mxu0 0
    %4656 = vmatpush2.bf16.msra.mxu0 0
    %4657 = vmatprep.subr.bf16.mxu0 0
    %4658 = vmatpush2.bf16.msra.mxu0 0
    %4659 = vmatprep.subr.bf16.mxu0 0
    %4660 = vmatpush2.bf16.msra.mxu0 0
    %4661 = vmatprep.subr.bf16.mxu0 0
    %4662 = vmatpush2.bf16.msra.mxu0 0
    %4663 = vmatprep.subr.bf16.mxu0 0
    %4664 = vmatpush2.bf16.msra.mxu0 0
    %4665 = vmatprep.subr.bf16.mxu0 0
    %4666 = vmatpush2.bf16.msra.mxu0 0
    %4667 = vmatprep.subr.bf16.mxu0 0
    %4668 = vmatpush2.bf16.msra.mxu0 0
    %4669 = vmatprep.subr.bf16.mxu0 0
    %4670 = vmatpush2.bf16.msra.mxu0 0
    %4671 = vmatprep.mubr.bf16.mxu0 0
    %4672 = vmatmul.mubr.bf16.gmra.mxu0 %v4633
    %v4673 = vpop.f32.mrf.mxu0
    %v4674 = vadd.f32 %v1289, %v4673
    %v4675 = vpop.f32.mrf.mxu0
    %v4676 = vpop.f32.mrf.mxu0
    %v4677 = vadd.f32 %v1289, %v4676
    %v4678 = vpop.f32.mrf.mxu0
    %4679 = vmatprep.mubr.bf16.mxu0 0
    %4680 = vmatmul.mubr.bf16.gmra.mxu0 %v4634
    %v4681 = vpop.f32.mrf.mxu0
    %v4682 = vadd.f32 %v1289, %v4681
    %v4683 = vpop.f32.mrf.mxu0
    %v4684 = vpop.f32.mrf.mxu0
    %v4685 = vadd.f32 %v1289, %v4684
    %v4686 = vpop.f32.mrf.mxu0
    %4687 = vmatprep.mubr.bf16.mxu0 0
    %4688 = vmatmul.mubr.bf16.gmra.mxu0 %v4635
    %v4689 = vpop.f32.mrf.mxu0
    %v4690 = vadd.f32 %v1289, %v4689
    %v4691 = vpop.f32.mrf.mxu0
    %v4692 = vpop.f32.mrf.mxu0
    %v4693 = vadd.f32 %v1289, %v4692
    %v4694 = vpop.f32.mrf.mxu0
    %4695 = vmatprep.mubr.bf16.mxu0 0
    %4696 = vmatmul.mubr.bf16.gmra.mxu0 %v4636
    %v4697 = vpop.f32.mrf.mxu0
    %v4698 = vadd.f32 %v1289, %v4697
    %v4699 = vpop.f32.mrf.mxu0
    %v4700 = vpop.f32.mrf.mxu0
    %v4701 = vadd.f32 %v1289, %v4700
    %v4702 = vpop.f32.mrf.mxu0
    %4703 = vmatprep.mubr.bf16.mxu0 0
    %4704 = vmatmul.mubr.bf16.gmra.mxu0 %v4637
    %v4705 = vpop.f32.mrf.mxu0
    %v4706 = vadd.f32 %v1289, %v4705
    %v4707 = vpop.f32.mrf.mxu0
    %v4708 = vpop.f32.mrf.mxu0
    %v4709 = vadd.f32 %v1289, %v4708
    %v4710 = vpop.f32.mrf.mxu0
    %4711 = vmatprep.mubr.bf16.mxu0 0
    %4712 = vmatmul.mubr.bf16.gmra.mxu0 %v4638
    %v4713 = vpop.f32.mrf.mxu0
    %v4714 = vadd.f32 %v1289, %v4713
    %v4715 = vpop.f32.mrf.mxu0
    %v4716 = vpop.f32.mrf.mxu0
    %v4717 = vadd.f32 %v1289, %v4716
    %v4718 = vpop.f32.mrf.mxu0
    %4719 = vdwg.mxu0
    %v4720 = vmax.f32 %v4674, 0.0
    %v4721 = vmax.f32 %v4677, 0.0
    %v4722 = vmax.f32 %v4682, 0.0
    %v4723 = vmax.f32 %v4685, 0.0
    %v4724 = vmax.f32 %v4690, 0.0
    %v4725 = vmax.f32 %v4693, 0.0
    %v4726 = vmax.f32 %v4698, 0.0
    %v4727 = vmax.f32 %v4701, 0.0
    %v4728 = vmax.f32 %v4706, 0.0
    %v4729 = vmax.f32 %v4709, 0.0
    %v4730 = vmax.f32 %v4714, 0.0
    %v4731 = vmax.f32 %v4717, 0.0
    %4732 = vst [vmem:[%s7 + $0x480] sm:$0xff] %v4720
    %4733 = vst [vmem:[%s7 + $0x488] sm:$0xff] %v4721
    %4734 = vst [vmem:[%s7 + $0x490] sm:$0xff] %v4722
    %4735 = vst [vmem:[%s7 + $0x498] sm:$0xff] %v4723
    %4736 = vst [vmem:[%s7 + $0x4a0] sm:$0xff] %v4724
    %4737 = vst [vmem:[%s7 + $0x4a8] sm:$0xff] %v4725
    %4738 = vst [vmem:[%s7 + $0x4b0] sm:$0xff] %v4726
    %4739 = vst [vmem:[%s7 + $0x4b8] sm:$0xff] %v4727
    %4740 = vst [vmem:[%s7 + $0x4c0] sm:$0xff] %v4728
    %4741 = vst [vmem:[%s7 + $0x4c8] sm:$0xff] %v4729
    %4742 = vst [vmem:[%s7 + $0x4d0] sm:$0xff] %v4730
    %4743 = vst [vmem:[%s7 + $0x4d8] sm:$0xff] %v4731
    %v4744 = vld [vmem:[#allocation7 + $0x34] sm:$0xf]
    %v4745 = vld [vmem:[#allocation7 + $0x74] sm:$0xf]
    %v4746 = vld [vmem:[#allocation7 + $0xb4] sm:$0xf]
    %v4747 = vld [vmem:[#allocation7 + $0xf4] sm:$0xf]
    %v4748 = vld [vmem:[#allocation7 + $0x134] sm:$0xf]
    %v4749 = vld [vmem:[#allocation7 + $0x174] sm:$0xf]
    %v4750 = vld [vmem:[#allocation7 + $0x1b4] sm:$0xf]
    %v4751 = vld [vmem:[#allocation7 + $0x1f4] sm:$0xf]
    %v4752 = vld [vmem:[#allocation7 + $0x234] sm:$0xf]
    %v4753 = vld [vmem:[#allocation7 + $0x274] sm:$0xf]
    %v4754 = vld [vmem:[#allocation7 + $0x2b4] sm:$0xf]
    %v4755 = vld [vmem:[#allocation7 + $0x2f4] sm:$0xf]
    %v4756 = vld [vmem:[#allocation7 + $0x334] sm:$0xf]
    %v4757 = vld [vmem:[#allocation7 + $0x374] sm:$0xf]
    %v4758 = vld [vmem:[#allocation7 + $0x3b4] sm:$0xf]
    %v4759 = vld [vmem:[#allocation7 + $0x3f4] sm:$0xf]
    %v4760 = vld [vmem:[#allocation8 + $0xd] sm:$0x1]
    %v4762 = vlaneseq
    %v4763 = vshrl.u32 %v4762, 7
    %v4764 = vsub.s32 0, %v4763
    %v4765 = vrot.slane %v4760, %v4764
    %v4783 = vunpack.c.l.b16 %v4744
    %v4784 = vunpack.c.l.b16 %v4745
    %v4785 = vunpack.c.l.b16 %v4746
    %v4786 = vunpack.c.l.b16 %v4747
    %v4787 = vunpack.c.l.b16 %v4748
    %v4788 = vunpack.c.l.b16 %v4749
    %v4789 = vunpack.c.l.b16 %v4750
    %v4790 = vunpack.c.l.b16 %v4751
    %v4791 = vunpack.c.l.b16 %v4752
    %v4792 = vunpack.c.l.b16 %v4753
    %v4793 = vunpack.c.l.b16 %v4754
    %v4794 = vunpack.c.l.b16 %v4755
    %v4795 = vunpack.c.l.b16 %v4756
    %v4796 = vunpack.c.l.b16 %v4757
    %v4797 = vunpack.c.l.b16 %v4758
    %v4798 = vunpack.c.l.b16 %v4759
    %v4799 = vpack.c.b16 %v4784, %v4783
    %v4800 = vpack.c.b16 %v4786, %v4785
    %v4801 = vpack.c.b16 %v4788, %v4787
    %v4802 = vpack.c.b16 %v4790, %v4789
    %v4803 = vpack.c.b16 %v4792, %v4791
    %v4804 = vpack.c.b16 %v4794, %v4793
    %v4805 = vpack.c.b16 %v4796, %v4795
    %v4806 = vpack.c.b16 %v4798, %v4797
    %4815 = vmatprep.subr.bf16.mxu0 0
    %4816 = vmatpush1.bf16.msra.mxu0 %v4806
    %4817 = vmatprep.subr.bf16.mxu0 0
    %4818 = vmatpush1.bf16.msra.mxu0 %v4805
    %4819 = vmatprep.subr.bf16.mxu0 0
    %4820 = vmatpush1.bf16.msra.mxu0 %v4804
    %4821 = vmatprep.subr.bf16.mxu0 0
    %4822 = vmatpush1.bf16.msra.mxu0 %v4803
    %4823 = vmatprep.subr.bf16.mxu0 0
    %4824 = vmatpush1.bf16.msra.mxu0 %v4802
    %4825 = vmatprep.subr.bf16.mxu0 0
    %4826 = vmatpush1.bf16.msra.mxu0 %v4801
    %4827 = vmatprep.subr.bf16.mxu0 0
    %4828 = vmatpush1.bf16.msra.mxu0 %v4800
    %4829 = vmatprep.subr.bf16.mxu0 0
    %4830 = vmatpush1.bf16.msra.mxu0 %v4799
    %4831 = vmatprep.subr.bf16.mxu0 0
    %4832 = vmatpush2.bf16.msra.mxu0 0
    %4833 = vmatprep.subr.bf16.mxu0 0
    %4834 = vmatpush2.bf16.msra.mxu0 0
    %4835 = vmatprep.subr.bf16.mxu0 0
    %4836 = vmatpush2.bf16.msra.mxu0 0
    %4837 = vmatprep.subr.bf16.mxu0 0
    %4838 = vmatpush2.bf16.msra.mxu0 0
    %4839 = vmatprep.subr.bf16.mxu0 0
    %4840 = vmatpush2.bf16.msra.mxu0 0
    %4841 = vmatprep.subr.bf16.mxu0 0
    %4842 = vmatpush2.bf16.msra.mxu0 0
    %4843 = vmatprep.subr.bf16.mxu0 0
    %4844 = vmatpush2.bf16.msra.mxu0 0
    %4845 = vmatprep.subr.bf16.mxu0 0
    %4846 = vmatpush2.bf16.msra.mxu0 0
    %4847 = vmatprep.mubr.bf16.mxu0 0
    %4848 = vmatmul.mubr.bf16.gmra.mxu0 %v1092
    %v4849 = vpop.f32.mrf.mxu0
    %v4850 = vadd.f32 %v4765, %v4849
    %v4851 = vpop.f32.mrf.mxu0
    %v4852 = vpop.f32.mrf.mxu0
    %v4853 = vadd.f32 %v4765, %v4852
    %v4854 = vpop.f32.mrf.mxu0
    %4855 = vmatprep.mubr.bf16.mxu0 0
    %4856 = vmatmul.mubr.bf16.gmra.mxu0 %v1093
    %v4857 = vpop.f32.mrf.mxu0
    %v4858 = vadd.f32 %v4765, %v4857
    %v4859 = vpop.f32.mrf.mxu0
    %v4860 = vpop.f32.mrf.mxu0
    %v4861 = vadd.f32 %v4765, %v4860
    %v4862 = vpop.f32.mrf.mxu0
    %4863 = vmatprep.mubr.bf16.mxu0 0
    %4864 = vmatmul.mubr.bf16.gmra.mxu0 %v1094
    %v4865 = vpop.f32.mrf.mxu0
    %v4866 = vadd.f32 %v4765, %v4865
    %v4867 = vpop.f32.mrf.mxu0
    %v4868 = vpop.f32.mrf.mxu0
    %v4869 = vadd.f32 %v4765, %v4868
    %v4870 = vpop.f32.mrf.mxu0
    %4871 = vmatprep.mubr.bf16.mxu0 0
    %4872 = vmatmul.mubr.bf16.gmra.mxu0 %v1095
    %v4873 = vpop.f32.mrf.mxu0
    %v4874 = vadd.f32 %v4765, %v4873
    %v4875 = vpop.f32.mrf.mxu0
    %v4876 = vpop.f32.mrf.mxu0
    %v4877 = vadd.f32 %v4765, %v4876
    %v4878 = vpop.f32.mrf.mxu0
    %4879 = vmatprep.mubr.bf16.mxu0 0
    %4880 = vmatmul.mubr.bf16.gmra.mxu0 %v1096
    %v4881 = vpop.f32.mrf.mxu0
    %v4882 = vadd.f32 %v4765, %v4881
    %v4883 = vpop.f32.mrf.mxu0
    %v4884 = vpop.f32.mrf.mxu0
    %v4885 = vadd.f32 %v4765, %v4884
    %v4886 = vpop.f32.mrf.mxu0
    %4887 = vmatprep.mubr.bf16.mxu0 0
    %4888 = vmatmul.mubr.bf16.gmra.mxu0 %v1097
    %v4889 = vpop.f32.mrf.mxu0
    %v4890 = vadd.f32 %v4765, %v4889
    %v4891 = vpop.f32.mrf.mxu0
    %v4892 = vpop.f32.mrf.mxu0
    %v4893 = vadd.f32 %v4765, %v4892
    %v4894 = vpop.f32.mrf.mxu0
    %4895 = vdwg.mxu0
    %v4896 = vmax.f32 %v4850, 0.0
    %v4897 = vmax.f32 %v4853, 0.0
    %v4898 = vmax.f32 %v4858, 0.0
    %v4899 = vmax.f32 %v4861, 0.0
    %v4900 = vmax.f32 %v4866, 0.0
    %v4901 = vmax.f32 %v4869, 0.0
    %v4902 = vmax.f32 %v4874, 0.0
    %v4903 = vmax.f32 %v4877, 0.0
    %v4904 = vmax.f32 %v4882, 0.0
    %v4905 = vmax.f32 %v4885, 0.0
    %v4906 = vmax.f32 %v4890, 0.0
    %v4907 = vmax.f32 %v4893, 0.0
    %v4908 = vpack.c.bf16 %v4897, %v4896
    %v4909 = vpack.c.bf16 %v4899, %v4898
    %v4910 = vpack.c.bf16 %v4901, %v4900
    %v4911 = vpack.c.bf16 %v4903, %v4902
    %v4912 = vpack.c.bf16 %v4905, %v4904
    %v4913 = vpack.c.bf16 %v4907, %v4906
    %4914 = vmatprep.subr.bf16.mxu0 0
    %4915 = vmatpush1.bf16.msra.mxu0 %v1330
    %4916 = vmatprep.subr.bf16.mxu0 0
    %4917 = vmatpush1.bf16.msra.mxu0 %v1329
    %4918 = vmatprep.subr.bf16.mxu0 0
    %4919 = vmatpush1.bf16.msra.mxu0 %v1328
    %4920 = vmatprep.subr.bf16.mxu0 0
    %4921 = vmatpush1.bf16.msra.mxu0 %v1327
    %4922 = vmatprep.subr.bf16.mxu0 0
    %4923 = vmatpush1.bf16.msra.mxu0 %v1326
    %4924 = vmatprep.subr.bf16.mxu0 0
    %4925 = vmatpush1.bf16.msra.mxu0 %v1325
    %4926 = vmatprep.subr.bf16.mxu0 0
    %4927 = vmatpush1.bf16.msra.mxu0 %v1324
    %4928 = vmatprep.subr.bf16.mxu0 0
    %4929 = vmatpush1.bf16.msra.mxu0 %v1323
    %4930 = vmatprep.subr.bf16.mxu0 0
    %4931 = vmatpush2.bf16.msra.mxu0 0
    %4932 = vmatprep.subr.bf16.mxu0 0
    %4933 = vmatpush2.bf16.msra.mxu0 0
    %4934 = vmatprep.subr.bf16.mxu0 0
    %4935 = vmatpush2.bf16.msra.mxu0 0
    %4936 = vmatprep.subr.bf16.mxu0 0
    %4937 = vmatpush2.bf16.msra.mxu0 0
    %4938 = vmatprep.subr.bf16.mxu0 0
    %4939 = vmatpush2.bf16.msra.mxu0 0
    %4940 = vmatprep.subr.bf16.mxu0 0
    %4941 = vmatpush2.bf16.msra.mxu0 0
    %4942 = vmatprep.subr.bf16.mxu0 0
    %4943 = vmatpush2.bf16.msra.mxu0 0
    %4944 = vmatprep.subr.bf16.mxu0 0
    %4945 = vmatpush2.bf16.msra.mxu0 0
    %4946 = vmatprep.mubr.bf16.mxu0 0
    %4947 = vmatmul.mubr.bf16.gmra.mxu0 %v4908
    %v4948 = vpop.f32.mrf.mxu0
    %v4949 = vadd.f32 %v1289, %v4948
    %v4950 = vpop.f32.mrf.mxu0
    %v4951 = vpop.f32.mrf.mxu0
    %v4952 = vadd.f32 %v1289, %v4951
    %v4953 = vpop.f32.mrf.mxu0
    %4954 = vmatprep.mubr.bf16.mxu0 0
    %4955 = vmatmul.mubr.bf16.gmra.mxu0 %v4909
    %v4956 = vpop.f32.mrf.mxu0
    %v4957 = vadd.f32 %v1289, %v4956
    %v4958 = vpop.f32.mrf.mxu0
    %v4959 = vpop.f32.mrf.mxu0
    %v4960 = vadd.f32 %v1289, %v4959
    %v4961 = vpop.f32.mrf.mxu0
    %4962 = vmatprep.mubr.bf16.mxu0 0
    %4963 = vmatmul.mubr.bf16.gmra.mxu0 %v4910
    %v4964 = vpop.f32.mrf.mxu0
    %v4965 = vadd.f32 %v1289, %v4964
    %v4966 = vpop.f32.mrf.mxu0
    %v4967 = vpop.f32.mrf.mxu0
    %v4968 = vadd.f32 %v1289, %v4967
    %v4969 = vpop.f32.mrf.mxu0
    %4970 = vmatprep.mubr.bf16.mxu0 0
    %4971 = vmatmul.mubr.bf16.gmra.mxu0 %v4911
    %v4972 = vpop.f32.mrf.mxu0
    %v4973 = vadd.f32 %v1289, %v4972
    %v4974 = vpop.f32.mrf.mxu0
    %v4975 = vpop.f32.mrf.mxu0
    %v4976 = vadd.f32 %v1289, %v4975
    %v4977 = vpop.f32.mrf.mxu0
    %4978 = vmatprep.mubr.bf16.mxu0 0
    %4979 = vmatmul.mubr.bf16.gmra.mxu0 %v4912
    %v4980 = vpop.f32.mrf.mxu0
    %v4981 = vadd.f32 %v1289, %v4980
    %v4982 = vpop.f32.mrf.mxu0
    %v4983 = vpop.f32.mrf.mxu0
    %v4984 = vadd.f32 %v1289, %v4983
    %v4985 = vpop.f32.mrf.mxu0
    %4986 = vmatprep.mubr.bf16.mxu0 0
    %4987 = vmatmul.mubr.bf16.gmra.mxu0 %v4913
    %v4988 = vpop.f32.mrf.mxu0
    %v4989 = vadd.f32 %v1289, %v4988
    %v4990 = vpop.f32.mrf.mxu0
    %v4991 = vpop.f32.mrf.mxu0
    %v4992 = vadd.f32 %v1289, %v4991
    %v4993 = vpop.f32.mrf.mxu0
    %4994 = vdwg.mxu0
    %v4995 = vmax.f32 %v4949, 0.0
    %v4996 = vmax.f32 %v4952, 0.0
    %v4997 = vmax.f32 %v4957, 0.0
    %v4998 = vmax.f32 %v4960, 0.0
    %v4999 = vmax.f32 %v4965, 0.0
    %v5000 = vmax.f32 %v4968, 0.0
    %v5001 = vmax.f32 %v4973, 0.0
    %v5002 = vmax.f32 %v4976, 0.0
    %v5003 = vmax.f32 %v4981, 0.0
    %v5004 = vmax.f32 %v4984, 0.0
    %v5005 = vmax.f32 %v4989, 0.0
    %v5006 = vmax.f32 %v4992, 0.0
    %5007 = vst [vmem:[%s7 + $0x4e0] sm:$0xff] %v4995
    %5008 = vst [vmem:[%s7 + $0x4e8] sm:$0xff] %v4996
    %5009 = vst [vmem:[%s7 + $0x4f0] sm:$0xff] %v4997
    %5010 = vst [vmem:[%s7 + $0x4f8] sm:$0xff] %v4998
    %5011 = vst [vmem:[%s7 + $0x500] sm:$0xff] %v4999
    %5012 = vst [vmem:[%s7 + $0x508] sm:$0xff] %v5000
    %5013 = vst [vmem:[%s7 + $0x510] sm:$0xff] %v5001
    %5014 = vst [vmem:[%s7 + $0x518] sm:$0xff] %v5002
    %5015 = vst [vmem:[%s7 + $0x520] sm:$0xff] %v5003
    %5016 = vst [vmem:[%s7 + $0x528] sm:$0xff] %v5004
    %5017 = vst [vmem:[%s7 + $0x530] sm:$0xff] %v5005
    %5018 = vst [vmem:[%s7 + $0x538] sm:$0xff] %v5006
    %v5019 = vld [vmem:[#allocation7 + $0x38] sm:$0xf]
    %v5020 = vld [vmem:[#allocation7 + $0x78] sm:$0xf]
    %v5021 = vld [vmem:[#allocation7 + $0xb8] sm:$0xf]
    %v5022 = vld [vmem:[#allocation7 + $0xf8] sm:$0xf]
    %v5023 = vld [vmem:[#allocation7 + $0x138] sm:$0xf]
    %v5024 = vld [vmem:[#allocation7 + $0x178] sm:$0xf]
    %v5025 = vld [vmem:[#allocation7 + $0x1b8] sm:$0xf]
    %v5026 = vld [vmem:[#allocation7 + $0x1f8] sm:$0xf]
    %v5027 = vld [vmem:[#allocation7 + $0x238] sm:$0xf]
    %v5028 = vld [vmem:[#allocation7 + $0x278] sm:$0xf]
    %v5029 = vld [vmem:[#allocation7 + $0x2b8] sm:$0xf]
    %v5030 = vld [vmem:[#allocation7 + $0x2f8] sm:$0xf]
    %v5031 = vld [vmem:[#allocation7 + $0x338] sm:$0xf]
    %v5032 = vld [vmem:[#allocation7 + $0x378] sm:$0xf]
    %v5033 = vld [vmem:[#allocation7 + $0x3b8] sm:$0xf]
    %v5034 = vld [vmem:[#allocation7 + $0x3f8] sm:$0xf]
    %v5035 = vld [vmem:[#allocation8 + $0xe] sm:$0x1]
    %v5037 = vlaneseq
    %v5038 = vshrl.u32 %v5037, 7
    %v5039 = vsub.s32 0, %v5038
    %v5040 = vrot.slane %v5035, %v5039
    %v5058 = vunpack.c.l.b16 %v5019
    %v5059 = vunpack.c.l.b16 %v5020
    %v5060 = vunpack.c.l.b16 %v5021
    %v5061 = vunpack.c.l.b16 %v5022
    %v5062 = vunpack.c.l.b16 %v5023
    %v5063 = vunpack.c.l.b16 %v5024
    %v5064 = vunpack.c.l.b16 %v5025
    %v5065 = vunpack.c.l.b16 %v5026
    %v5066 = vunpack.c.l.b16 %v5027
    %v5067 = vunpack.c.l.b16 %v5028
    %v5068 = vunpack.c.l.b16 %v5029
    %v5069 = vunpack.c.l.b16 %v5030
    %v5070 = vunpack.c.l.b16 %v5031
    %v5071 = vunpack.c.l.b16 %v5032
    %v5072 = vunpack.c.l.b16 %v5033
    %v5073 = vunpack.c.l.b16 %v5034
    %v5074 = vpack.c.b16 %v5059, %v5058
    %v5075 = vpack.c.b16 %v5061, %v5060
    %v5076 = vpack.c.b16 %v5063, %v5062
    %v5077 = vpack.c.b16 %v5065, %v5064
    %v5078 = vpack.c.b16 %v5067, %v5066
    %v5079 = vpack.c.b16 %v5069, %v5068
    %v5080 = vpack.c.b16 %v5071, %v5070
    %v5081 = vpack.c.b16 %v5073, %v5072
    %5090 = vmatprep.subr.bf16.mxu0 0
    %5091 = vmatpush1.bf16.msra.mxu0 %v5081
    %5092 = vmatprep.subr.bf16.mxu0 0
    %5093 = vmatpush1.bf16.msra.mxu0 %v5080
    %5094 = vmatprep.subr.bf16.mxu0 0
    %5095 = vmatpush1.bf16.msra.mxu0 %v5079
    %5096 = vmatprep.subr.bf16.mxu0 0
    %5097 = vmatpush1.bf16.msra.mxu0 %v5078
    %5098 = vmatprep.subr.bf16.mxu0 0
    %5099 = vmatpush1.bf16.msra.mxu0 %v5077
    %5100 = vmatprep.subr.bf16.mxu0 0
    %5101 = vmatpush1.bf16.msra.mxu0 %v5076
    %5102 = vmatprep.subr.bf16.mxu0 0
    %5103 = vmatpush1.bf16.msra.mxu0 %v5075
    %5104 = vmatprep.subr.bf16.mxu0 0
    %5105 = vmatpush1.bf16.msra.mxu0 %v5074
    %5106 = vmatprep.subr.bf16.mxu0 0
    %5107 = vmatpush2.bf16.msra.mxu0 0
    %5108 = vmatprep.subr.bf16.mxu0 0
    %5109 = vmatpush2.bf16.msra.mxu0 0
    %5110 = vmatprep.subr.bf16.mxu0 0
    %5111 = vmatpush2.bf16.msra.mxu0 0
    %5112 = vmatprep.subr.bf16.mxu0 0
    %5113 = vmatpush2.bf16.msra.mxu0 0
    %5114 = vmatprep.subr.bf16.mxu0 0
    %5115 = vmatpush2.bf16.msra.mxu0 0
    %5116 = vmatprep.subr.bf16.mxu0 0
    %5117 = vmatpush2.bf16.msra.mxu0 0
    %5118 = vmatprep.subr.bf16.mxu0 0
    %5119 = vmatpush2.bf16.msra.mxu0 0
    %5120 = vmatprep.subr.bf16.mxu0 0
    %5121 = vmatpush2.bf16.msra.mxu0 0
    %5122 = vmatprep.mubr.bf16.mxu0 0
    %5123 = vmatmul.mubr.bf16.gmra.mxu0 %v1092
    %v5124 = vpop.f32.mrf.mxu0
    %v5125 = vadd.f32 %v5040, %v5124
    %v5126 = vpop.f32.mrf.mxu0
    %v5127 = vpop.f32.mrf.mxu0
    %v5128 = vadd.f32 %v5040, %v5127
    %v5129 = vpop.f32.mrf.mxu0
    %5130 = vmatprep.mubr.bf16.mxu0 0
    %5131 = vmatmul.mubr.bf16.gmra.mxu0 %v1093
    %v5132 = vpop.f32.mrf.mxu0
    %v5133 = vadd.f32 %v5040, %v5132
    %v5134 = vpop.f32.mrf.mxu0
    %v5135 = vpop.f32.mrf.mxu0
    %v5136 = vadd.f32 %v5040, %v5135
    %v5137 = vpop.f32.mrf.mxu0
    %5138 = vmatprep.mubr.bf16.mxu0 0
    %5139 = vmatmul.mubr.bf16.gmra.mxu0 %v1094
    %v5140 = vpop.f32.mrf.mxu0
    %v5141 = vadd.f32 %v5040, %v5140
    %v5142 = vpop.f32.mrf.mxu0
    %v5143 = vpop.f32.mrf.mxu0
    %v5144 = vadd.f32 %v5040, %v5143
    %v5145 = vpop.f32.mrf.mxu0
    %5146 = vmatprep.mubr.bf16.mxu0 0
    %5147 = vmatmul.mubr.bf16.gmra.mxu0 %v1095
    %v5148 = vpop.f32.mrf.mxu0
    %v5149 = vadd.f32 %v5040, %v5148
    %v5150 = vpop.f32.mrf.mxu0
    %v5151 = vpop.f32.mrf.mxu0
    %v5152 = vadd.f32 %v5040, %v5151
    %v5153 = vpop.f32.mrf.mxu0
    %5154 = vmatprep.mubr.bf16.mxu0 0
    %5155 = vmatmul.mubr.bf16.gmra.mxu0 %v1096
    %v5156 = vpop.f32.mrf.mxu0
    %v5157 = vadd.f32 %v5040, %v5156
    %v5158 = vpop.f32.mrf.mxu0
    %v5159 = vpop.f32.mrf.mxu0
    %v5160 = vadd.f32 %v5040, %v5159
    %v5161 = vpop.f32.mrf.mxu0
    %5162 = vmatprep.mubr.bf16.mxu0 0
    %5163 = vmatmul.mubr.bf16.gmra.mxu0 %v1097
    %v5164 = vpop.f32.mrf.mxu0
    %v5165 = vadd.f32 %v5040, %v5164
    %v5166 = vpop.f32.mrf.mxu0
    %v5167 = vpop.f32.mrf.mxu0
    %v5168 = vadd.f32 %v5040, %v5167
    %v5169 = vpop.f32.mrf.mxu0
    %5170 = vdwg.mxu0
    %v5171 = vmax.f32 %v5125, 0.0
    %v5172 = vmax.f32 %v5128, 0.0
    %v5173 = vmax.f32 %v5133, 0.0
    %v5174 = vmax.f32 %v5136, 0.0
    %v5175 = vmax.f32 %v5141, 0.0
    %v5176 = vmax.f32 %v5144, 0.0
    %v5177 = vmax.f32 %v5149, 0.0
    %v5178 = vmax.f32 %v5152, 0.0
    %v5179 = vmax.f32 %v5157, 0.0
    %v5180 = vmax.f32 %v5160, 0.0
    %v5181 = vmax.f32 %v5165, 0.0
    %v5182 = vmax.f32 %v5168, 0.0
    %v5183 = vpack.c.bf16 %v5172, %v5171
    %v5184 = vpack.c.bf16 %v5174, %v5173
    %v5185 = vpack.c.bf16 %v5176, %v5175
    %v5186 = vpack.c.bf16 %v5178, %v5177
    %v5187 = vpack.c.bf16 %v5180, %v5179
    %v5188 = vpack.c.bf16 %v5182, %v5181
    %5189 = vmatprep.subr.bf16.mxu0 0
    %5190 = vmatpush1.bf16.msra.mxu0 %v1330
    %5191 = vmatprep.subr.bf16.mxu0 0
    %5192 = vmatpush1.bf16.msra.mxu0 %v1329
    %5193 = vmatprep.subr.bf16.mxu0 0
    %5194 = vmatpush1.bf16.msra.mxu0 %v1328
    %5195 = vmatprep.subr.bf16.mxu0 0
    %5196 = vmatpush1.bf16.msra.mxu0 %v1327
    %5197 = vmatprep.subr.bf16.mxu0 0
    %5198 = vmatpush1.bf16.msra.mxu0 %v1326
    %5199 = vmatprep.subr.bf16.mxu0 0
    %5200 = vmatpush1.bf16.msra.mxu0 %v1325
    %5201 = vmatprep.subr.bf16.mxu0 0
    %5202 = vmatpush1.bf16.msra.mxu0 %v1324
    %5203 = vmatprep.subr.bf16.mxu0 0
    %5204 = vmatpush1.bf16.msra.mxu0 %v1323
    %5205 = vmatprep.subr.bf16.mxu0 0
    %5206 = vmatpush2.bf16.msra.mxu0 0
    %5207 = vmatprep.subr.bf16.mxu0 0
    %5208 = vmatpush2.bf16.msra.mxu0 0
    %5209 = vmatprep.subr.bf16.mxu0 0
    %5210 = vmatpush2.bf16.msra.mxu0 0
    %5211 = vmatprep.subr.bf16.mxu0 0
    %5212 = vmatpush2.bf16.msra.mxu0 0
    %5213 = vmatprep.subr.bf16.mxu0 0
    %5214 = vmatpush2.bf16.msra.mxu0 0
    %5215 = vmatprep.subr.bf16.mxu0 0
    %5216 = vmatpush2.bf16.msra.mxu0 0
    %5217 = vmatprep.subr.bf16.mxu0 0
    %5218 = vmatpush2.bf16.msra.mxu0 0
    %5219 = vmatprep.subr.bf16.mxu0 0
    %5220 = vmatpush2.bf16.msra.mxu0 0
    %5221 = vmatprep.mubr.bf16.mxu0 0
    %5222 = vmatmul.mubr.bf16.gmra.mxu0 %v5183
    %v5223 = vpop.f32.mrf.mxu0
    %v5224 = vadd.f32 %v1289, %v5223
    %v5225 = vpop.f32.mrf.mxu0
    %v5226 = vpop.f32.mrf.mxu0
    %v5227 = vadd.f32 %v1289, %v5226
    %v5228 = vpop.f32.mrf.mxu0
    %5229 = vmatprep.mubr.bf16.mxu0 0
    %5230 = vmatmul.mubr.bf16.gmra.mxu0 %v5184
    %v5231 = vpop.f32.mrf.mxu0
    %v5232 = vadd.f32 %v1289, %v5231
    %v5233 = vpop.f32.mrf.mxu0
    %v5234 = vpop.f32.mrf.mxu0
    %v5235 = vadd.f32 %v1289, %v5234
    %v5236 = vpop.f32.mrf.mxu0
    %5237 = vmatprep.mubr.bf16.mxu0 0
    %5238 = vmatmul.mubr.bf16.gmra.mxu0 %v5185
    %v5239 = vpop.f32.mrf.mxu0
    %v5240 = vadd.f32 %v1289, %v5239
    %v5241 = vpop.f32.mrf.mxu0
    %v5242 = vpop.f32.mrf.mxu0
    %v5243 = vadd.f32 %v1289, %v5242
    %v5244 = vpop.f32.mrf.mxu0
    %5245 = vmatprep.mubr.bf16.mxu0 0
    %5246 = vmatmul.mubr.bf16.gmra.mxu0 %v5186
    %v5247 = vpop.f32.mrf.mxu0
    %v5248 = vadd.f32 %v1289, %v5247
    %v5249 = vpop.f32.mrf.mxu0
    %v5250 = vpop.f32.mrf.mxu0
    %v5251 = vadd.f32 %v1289, %v5250
    %v5252 = vpop.f32.mrf.mxu0
    %5253 = vmatprep.mubr.bf16.mxu0 0
    %5254 = vmatmul.mubr.bf16.gmra.mxu0 %v5187
    %v5255 = vpop.f32.mrf.mxu0
    %v5256 = vadd.f32 %v1289, %v5255
    %v5257 = vpop.f32.mrf.mxu0
    %v5258 = vpop.f32.mrf.mxu0
    %v5259 = vadd.f32 %v1289, %v5258
    %v5260 = vpop.f32.mrf.mxu0
    %5261 = vmatprep.mubr.bf16.mxu0 0
    %5262 = vmatmul.mubr.bf16.gmra.mxu0 %v5188
    %v5263 = vpop.f32.mrf.mxu0
    %v5264 = vadd.f32 %v1289, %v5263
    %v5265 = vpop.f32.mrf.mxu0
    %v5266 = vpop.f32.mrf.mxu0
    %v5267 = vadd.f32 %v1289, %v5266
    %v5268 = vpop.f32.mrf.mxu0
    %5269 = vdwg.mxu0
    %v5270 = vmax.f32 %v5224, 0.0
    %v5271 = vmax.f32 %v5227, 0.0
    %v5272 = vmax.f32 %v5232, 0.0
    %v5273 = vmax.f32 %v5235, 0.0
    %v5274 = vmax.f32 %v5240, 0.0
    %v5275 = vmax.f32 %v5243, 0.0
    %v5276 = vmax.f32 %v5248, 0.0
    %v5277 = vmax.f32 %v5251, 0.0
    %v5278 = vmax.f32 %v5256, 0.0
    %v5279 = vmax.f32 %v5259, 0.0
    %v5280 = vmax.f32 %v5264, 0.0
    %v5281 = vmax.f32 %v5267, 0.0
    %5282 = vst [vmem:[%s7 + $0x540] sm:$0xff] %v5270
    %5283 = vst [vmem:[%s7 + $0x548] sm:$0xff] %v5271
    %5284 = vst [vmem:[%s7 + $0x550] sm:$0xff] %v5272
    %5285 = vst [vmem:[%s7 + $0x558] sm:$0xff] %v5273
    %5286 = vst [vmem:[%s7 + $0x560] sm:$0xff] %v5274
    %5287 = vst [vmem:[%s7 + $0x568] sm:$0xff] %v5275
    %5288 = vst [vmem:[%s7 + $0x570] sm:$0xff] %v5276
    %5289 = vst [vmem:[%s7 + $0x578] sm:$0xff] %v5277
    %5290 = vst [vmem:[%s7 + $0x580] sm:$0xff] %v5278
    %5291 = vst [vmem:[%s7 + $0x588] sm:$0xff] %v5279
    %5292 = vst [vmem:[%s7 + $0x590] sm:$0xff] %v5280
    %5293 = vst [vmem:[%s7 + $0x598] sm:$0xff] %v5281
    %v5294 = vld [vmem:[#allocation7 + $0x3c] sm:$0xf]
    %v5295 = vld [vmem:[#allocation7 + $0x7c] sm:$0xf]
    %v5296 = vld [vmem:[#allocation7 + $0xbc] sm:$0xf]
    %v5297 = vld [vmem:[#allocation7 + $0xfc] sm:$0xf]
    %v5298 = vld [vmem:[#allocation7 + $0x13c] sm:$0xf]
    %v5299 = vld [vmem:[#allocation7 + $0x17c] sm:$0xf]
    %v5300 = vld [vmem:[#allocation7 + $0x1bc] sm:$0xf]
    %v5301 = vld [vmem:[#allocation7 + $0x1fc] sm:$0xf]
    %v5302 = vld [vmem:[#allocation7 + $0x23c] sm:$0xf]
    %v5303 = vld [vmem:[#allocation7 + $0x27c] sm:$0xf]
    %v5304 = vld [vmem:[#allocation7 + $0x2bc] sm:$0xf]
    %v5305 = vld [vmem:[#allocation7 + $0x2fc] sm:$0xf]
    %v5306 = vld [vmem:[#allocation7 + $0x33c] sm:$0xf]
    %v5307 = vld [vmem:[#allocation7 + $0x37c] sm:$0xf]
    %v5308 = vld [vmem:[#allocation7 + $0x3bc] sm:$0xf]
    %v5309 = vld [vmem:[#allocation7 + $0x3fc] sm:$0xf]
    %v5310 = vld [vmem:[#allocation8 + $0xf] sm:$0x1]
    %v5312 = vlaneseq
    %v5313 = vshrl.u32 %v5312, 7
    %v5314 = vsub.s32 0, %v5313
    %v5315 = vrot.slane %v5310, %v5314
    %v5333 = vunpack.c.l.b16 %v5294
    %v5334 = vunpack.c.l.b16 %v5295
    %v5335 = vunpack.c.l.b16 %v5296
    %v5336 = vunpack.c.l.b16 %v5297
    %v5337 = vunpack.c.l.b16 %v5298
    %v5338 = vunpack.c.l.b16 %v5299
    %v5339 = vunpack.c.l.b16 %v5300
    %v5340 = vunpack.c.l.b16 %v5301
    %v5341 = vunpack.c.l.b16 %v5302
    %v5342 = vunpack.c.l.b16 %v5303
    %v5343 = vunpack.c.l.b16 %v5304
    %v5344 = vunpack.c.l.b16 %v5305
    %v5345 = vunpack.c.l.b16 %v5306
    %v5346 = vunpack.c.l.b16 %v5307
    %v5347 = vunpack.c.l.b16 %v5308
    %v5348 = vunpack.c.l.b16 %v5309
    %v5349 = vpack.c.b16 %v5334, %v5333
    %v5350 = vpack.c.b16 %v5336, %v5335
    %v5351 = vpack.c.b16 %v5338, %v5337
    %v5352 = vpack.c.b16 %v5340, %v5339
    %v5353 = vpack.c.b16 %v5342, %v5341
    %v5354 = vpack.c.b16 %v5344, %v5343
    %v5355 = vpack.c.b16 %v5346, %v5345
    %v5356 = vpack.c.b16 %v5348, %v5347
    %5365 = vmatprep.subr.bf16.mxu0 0
    %5366 = vmatpush1.bf16.msra.mxu0 %v5356
    %5367 = vmatprep.subr.bf16.mxu0 0
    %5368 = vmatpush1.bf16.msra.mxu0 %v5355
    %5369 = vmatprep.subr.bf16.mxu0 0
    %5370 = vmatpush1.bf16.msra.mxu0 %v5354
    %5371 = vmatprep.subr.bf16.mxu0 0
    %5372 = vmatpush1.bf16.msra.mxu0 %v5353
    %5373 = vmatprep.subr.bf16.mxu0 0
    %5374 = vmatpush1.bf16.msra.mxu0 %v5352
    %5375 = vmatprep.subr.bf16.mxu0 0
    %5376 = vmatpush1.bf16.msra.mxu0 %v5351
    %5377 = vmatprep.subr.bf16.mxu0 0
    %5378 = vmatpush1.bf16.msra.mxu0 %v5350
    %5379 = vmatprep.subr.bf16.mxu0 0
    %5380 = vmatpush1.bf16.msra.mxu0 %v5349
    %5381 = vmatprep.subr.bf16.mxu0 0
    %5382 = vmatpush2.bf16.msra.mxu0 0
    %5383 = vmatprep.subr.bf16.mxu0 0
    %5384 = vmatpush2.bf16.msra.mxu0 0
    %5385 = vmatprep.subr.bf16.mxu0 0
    %5386 = vmatpush2.bf16.msra.mxu0 0
    %5387 = vmatprep.subr.bf16.mxu0 0
    %5388 = vmatpush2.bf16.msra.mxu0 0
    %5389 = vmatprep.subr.bf16.mxu0 0
    %5390 = vmatpush2.bf16.msra.mxu0 0
    %5391 = vmatprep.subr.bf16.mxu0 0
    %5392 = vmatpush2.bf16.msra.mxu0 0
    %5393 = vmatprep.subr.bf16.mxu0 0
    %5394 = vmatpush2.bf16.msra.mxu0 0
    %5395 = vmatprep.subr.bf16.mxu0 0
    %5396 = vmatpush2.bf16.msra.mxu0 0
    %5397 = vmatprep.mubr.bf16.mxu0 0
    %5398 = vmatmul.mubr.bf16.gmra.mxu0 %v1092
    %v5399 = vpop.f32.mrf.mxu0
    %v5400 = vadd.f32 %v5315, %v5399
    %v5401 = vpop.f32.mrf.mxu0
    %v5402 = vpop.f32.mrf.mxu0
    %v5403 = vadd.f32 %v5315, %v5402
    %v5404 = vpop.f32.mrf.mxu0
    %5405 = vmatprep.mubr.bf16.mxu0 0
    %5406 = vmatmul.mubr.bf16.gmra.mxu0 %v1093
    %v5407 = vpop.f32.mrf.mxu0
    %v5408 = vadd.f32 %v5315, %v5407
    %v5409 = vpop.f32.mrf.mxu0
    %v5410 = vpop.f32.mrf.mxu0
    %v5411 = vadd.f32 %v5315, %v5410
    %v5412 = vpop.f32.mrf.mxu0
    %5413 = vmatprep.mubr.bf16.mxu0 0
    %5414 = vmatmul.mubr.bf16.gmra.mxu0 %v1094
    %v5415 = vpop.f32.mrf.mxu0
    %v5416 = vadd.f32 %v5315, %v5415
    %v5417 = vpop.f32.mrf.mxu0
    %v5418 = vpop.f32.mrf.mxu0
    %v5419 = vadd.f32 %v5315, %v5418
    %v5420 = vpop.f32.mrf.mxu0
    %5421 = vmatprep.mubr.bf16.mxu0 0
    %5422 = vmatmul.mubr.bf16.gmra.mxu0 %v1095
    %v5423 = vpop.f32.mrf.mxu0
    %v5424 = vadd.f32 %v5315, %v5423
    %v5425 = vpop.f32.mrf.mxu0
    %v5426 = vpop.f32.mrf.mxu0
    %v5427 = vadd.f32 %v5315, %v5426
    %v5428 = vpop.f32.mrf.mxu0
    %5429 = vmatprep.mubr.bf16.mxu0 0
    %5430 = vmatmul.mubr.bf16.gmra.mxu0 %v1096
    %v5431 = vpop.f32.mrf.mxu0
    %v5432 = vadd.f32 %v5315, %v5431
    %v5433 = vpop.f32.mrf.mxu0
    %v5434 = vpop.f32.mrf.mxu0
    %v5435 = vadd.f32 %v5315, %v5434
    %v5436 = vpop.f32.mrf.mxu0
    %5437 = vmatprep.mubr.bf16.mxu0 0
    %5438 = vmatmul.mubr.bf16.gmra.mxu0 %v1097
    %v5439 = vpop.f32.mrf.mxu0
    %v5440 = vadd.f32 %v5315, %v5439
    %v5441 = vpop.f32.mrf.mxu0
    %v5442 = vpop.f32.mrf.mxu0
    %v5443 = vadd.f32 %v5315, %v5442
    %v5444 = vpop.f32.mrf.mxu0
    %5445 = vdwg.mxu0
    %v5446 = vmax.f32 %v5400, 0.0
    %v5447 = vmax.f32 %v5403, 0.0
    %v5448 = vmax.f32 %v5408, 0.0
    %v5449 = vmax.f32 %v5411, 0.0
    %v5450 = vmax.f32 %v5416, 0.0
    %v5451 = vmax.f32 %v5419, 0.0
    %v5452 = vmax.f32 %v5424, 0.0
    %v5453 = vmax.f32 %v5427, 0.0
    %v5454 = vmax.f32 %v5432, 0.0
    %v5455 = vmax.f32 %v5435, 0.0
    %v5456 = vmax.f32 %v5440, 0.0
    %v5457 = vmax.f32 %v5443, 0.0
    %v5458 = vpack.c.bf16 %v5447, %v5446
    %v5459 = vpack.c.bf16 %v5449, %v5448
    %v5460 = vpack.c.bf16 %v5451, %v5450
    %v5461 = vpack.c.bf16 %v5453, %v5452
    %v5462 = vpack.c.bf16 %v5455, %v5454
    %v5463 = vpack.c.bf16 %v5457, %v5456
    %5464 = vmatprep.subr.bf16.mxu0 0
    %5465 = vmatpush1.bf16.msra.mxu0 %v1330
    %5466 = vmatprep.subr.bf16.mxu0 0
    %5467 = vmatpush1.bf16.msra.mxu0 %v1329
    %5468 = vmatprep.subr.bf16.mxu0 0
    %5469 = vmatpush1.bf16.msra.mxu0 %v1328
    %5470 = vmatprep.subr.bf16.mxu0 0
    %5471 = vmatpush1.bf16.msra.mxu0 %v1327
    %5472 = vmatprep.subr.bf16.mxu0 0
    %5473 = vmatpush1.bf16.msra.mxu0 %v1326
    %5474 = vmatprep.subr.bf16.mxu0 0
    %5475 = vmatpush1.bf16.msra.mxu0 %v1325
    %5476 = vmatprep.subr.bf16.mxu0 0
    %5477 = vmatpush1.bf16.msra.mxu0 %v1324
    %5478 = vmatprep.subr.bf16.mxu0 0
    %5479 = vmatpush1.bf16.msra.mxu0 %v1323
    %5480 = vmatprep.subr.bf16.mxu0 0
    %5481 = vmatpush2.bf16.msra.mxu0 0
    %5482 = vmatprep.subr.bf16.mxu0 0
    %5483 = vmatpush2.bf16.msra.mxu0 0
    %5484 = vmatprep.subr.bf16.mxu0 0
    %5485 = vmatpush2.bf16.msra.mxu0 0
    %5486 = vmatprep.subr.bf16.mxu0 0
    %5487 = vmatpush2.bf16.msra.mxu0 0
    %5488 = vmatprep.subr.bf16.mxu0 0
    %5489 = vmatpush2.bf16.msra.mxu0 0
    %5490 = vmatprep.subr.bf16.mxu0 0
    %5491 = vmatpush2.bf16.msra.mxu0 0
    %5492 = vmatprep.subr.bf16.mxu0 0
    %5493 = vmatpush2.bf16.msra.mxu0 0
    %5494 = vmatprep.subr.bf16.mxu0 0
    %5495 = vmatpush2.bf16.msra.mxu0 0
    %5496 = vmatprep.mubr.bf16.mxu0 0
    %5497 = vmatmul.mubr.bf16.gmra.mxu0 %v5458
    %v5498 = vpop.f32.mrf.mxu0
    %v5499 = vadd.f32 %v1289, %v5498
    %v5500 = vpop.f32.mrf.mxu0
    %v5501 = vpop.f32.mrf.mxu0
    %v5502 = vadd.f32 %v1289, %v5501
    %v5503 = vpop.f32.mrf.mxu0
    %5504 = vmatprep.mubr.bf16.mxu0 0
    %5505 = vmatmul.mubr.bf16.gmra.mxu0 %v5459
    %v5506 = vpop.f32.mrf.mxu0
    %v5507 = vadd.f32 %v1289, %v5506
    %v5508 = vpop.f32.mrf.mxu0
    %v5509 = vpop.f32.mrf.mxu0
    %v5510 = vadd.f32 %v1289, %v5509
    %v5511 = vpop.f32.mrf.mxu0
    %5512 = vmatprep.mubr.bf16.mxu0 0
    %5513 = vmatmul.mubr.bf16.gmra.mxu0 %v5460
    %v5514 = vpop.f32.mrf.mxu0
    %v5515 = vadd.f32 %v1289, %v5514
    %v5516 = vpop.f32.mrf.mxu0
    %v5517 = vpop.f32.mrf.mxu0
    %v5518 = vadd.f32 %v1289, %v5517
    %v5519 = vpop.f32.mrf.mxu0
    %5520 = vmatprep.mubr.bf16.mxu0 0
    %5521 = vmatmul.mubr.bf16.gmra.mxu0 %v5461
    %v5522 = vpop.f32.mrf.mxu0
    %v5523 = vadd.f32 %v1289, %v5522
    %v5524 = vpop.f32.mrf.mxu0
    %v5525 = vpop.f32.mrf.mxu0
    %v5526 = vadd.f32 %v1289, %v5525
    %v5527 = vpop.f32.mrf.mxu0
    %5528 = vmatprep.mubr.bf16.mxu0 0
    %5529 = vmatmul.mubr.bf16.gmra.mxu0 %v5462
    %v5530 = vpop.f32.mrf.mxu0
    %v5531 = vadd.f32 %v1289, %v5530
    %v5532 = vpop.f32.mrf.mxu0
    %v5533 = vpop.f32.mrf.mxu0
    %v5534 = vadd.f32 %v1289, %v5533
    %v5535 = vpop.f32.mrf.mxu0
    %5536 = vmatprep.mubr.bf16.mxu0 0
    %5537 = vmatmul.mubr.bf16.gmra.mxu0 %v5463
    %v5538 = vpop.f32.mrf.mxu0
    %v5539 = vadd.f32 %v1289, %v5538
    %v5540 = vpop.f32.mrf.mxu0
    %v5541 = vpop.f32.mrf.mxu0
    %v5542 = vadd.f32 %v1289, %v5541
    %v5543 = vpop.f32.mrf.mxu0
    %5544 = vdwg.mxu0
    %v5545 = vmax.f32 %v5499, 0.0
    %v5546 = vmax.f32 %v5502, 0.0
    %v5547 = vmax.f32 %v5507, 0.0
    %v5548 = vmax.f32 %v5510, 0.0
    %v5549 = vmax.f32 %v5515, 0.0
    %v5550 = vmax.f32 %v5518, 0.0
    %v5551 = vmax.f32 %v5523, 0.0
    %v5552 = vmax.f32 %v5526, 0.0
    %v5553 = vmax.f32 %v5531, 0.0
    %v5554 = vmax.f32 %v5534, 0.0
    %v5555 = vmax.f32 %v5539, 0.0
    %v5556 = vmax.f32 %v5542, 0.0
    %5557 = vst [vmem:[%s7 + $0x5a0] sm:$0xff] %v5545
    %5558 = vst [vmem:[%s7 + $0x5a8] sm:$0xff] %v5546
    %5559 = vst [vmem:[%s7 + $0x5b0] sm:$0xff] %v5547
    %5560 = vst [vmem:[%s7 + $0x5b8] sm:$0xff] %v5548
    %5561 = vst [vmem:[%s7 + $0x5c0] sm:$0xff] %v5549
    %5562 = vst [vmem:[%s7 + $0x5c8] sm:$0xff] %v5550
    %5563 = vst [vmem:[%s7 + $0x5d0] sm:$0xff] %v5551
    %5564 = vst [vmem:[%s7 + $0x5d8] sm:$0xff] %v5552
    %5565 = vst [vmem:[%s7 + $0x5e0] sm:$0xff] %v5553
    %5566 = vst [vmem:[%s7 + $0x5e8] sm:$0xff] %v5554
    %5567 = vst [vmem:[%s7 + $0x5f0] sm:$0xff] %v5555
    %5568 = vst [vmem:[%s7 + $0x5f8] sm:$0xff] %v5556
    // Predicated region
    $region54: #{conv_decoder3_forward.1} parent=1 // pred_check
      _
    $region55: #{conv_decoder3_forward.1} parent=1 // pred_check_branch
      %5570 = sbr.rel (0) target = $region57
    $region56: #{conv_decoder3_forward.1} parent=1 // pred_region
      _
    $region57: #{conv_decoder3_forward.1} parent=1 // pred_fallthru
      _
    // Predicated region
    $region58: #{conv_decoder3_forward.1} parent=1 // pred_check
      _
    $region59: #{conv_decoder3_forward.1} parent=1 // pred_check_branch
      %5572 = sbr.rel (0) target = $region61
    $region60: #{conv_decoder3_forward.1} parent=1 // pred_region
      _
    $region61: #{conv_decoder3_forward.1} parent=1 // pred_fallthru
      _
    %5573 = vsyncpa [#allocation4], 1
    %5574 = vsyncpa [#allocation6], 1
    %5575 = vsyncpa [#allocation9], 1
    %5576 = vsyncpa [#allocation12], 1

</llo_original>
